<compile_context>
chip_gen: v5e
topology: v5e:2x2
jax: 0.10.0
libtpu: 0.0.40
codegen_flags: <defaults>
</compile_context>

<pallas_src>
import functools

import numpy as np

import jax
import jax.numpy as jnp
from jax import lax
from jax.experimental import pallas as pl
from jax.experimental.pallas import tpu as pltpu


# ----------------------------------------------------------------------------
# Layer configuration of USRM5_2 (name, input pyramid level, stride, pad, dil)
# ----------------------------------------------------------------------------
_LAYER_CFG = [
    ("conv1",     0, 2, 1, 1),
    ("conv2",     1, 2, 1, 1),
    ("conv3",     2, 2, 1, 1),
    ("conv4",     3, 2, 1, 1),
    ("conv5",     4, 1, 2, 2),
    ("conv_rev1", 4, 1, 1, 1),
    ("conv_rev2", 3, 1, 1, 1),
    ("conv_rev3", 2, 1, 1, 1),
    ("conv_rev4", 1, 1, 1, 1),
    ("conv_sum",  0, 1, 1, 1),
]


def _conv_out(size, stride, pad, dil, k=3):
    return (size + 2 * pad - dil * (k - 1) - 1) // stride + 1


# ----------------------------------------------------------------------------
# Host-side (numpy) construction of the constant operator matrices
# ----------------------------------------------------------------------------
def _interp_mat(out_size, in_size):
    """Bilinear align_corners=True 1-D interpolation matrix (out_size, in_size)."""
    M = np.zeros((out_size, in_size), np.float32)
    if out_size == 1 or in_size == 1:
        M[:, 0] = 1.0
        return M
    scale = (in_size - 1) / (out_size - 1)
    for o in range(out_size):
        c = o * scale
        lo = min(int(np.floor(c)), in_size - 1)
        hi = min(lo + 1, in_size - 1)
        f = c - lo
        M[o, lo] += 1.0 - f
        M[o, hi] += f
    return M


def _conv_row_stack(H, h_in, h_out, s, p, d):
    """(3H, H): the three per-sample row-tap selection matrices stacked vertically."""
    M = np.zeros((3, H, H), np.float32)
    for kh in range(3):
        for ho in range(h_out):
            hi = ho * s - p + kh * d
            if 0 <= hi < h_in:
                M[kh, ho, hi] = 1.0
    return M.reshape(3 * H, H)


def _conv_col_place(W, w_in, w_out, s, p, d):
    """(3, W, W): place[kw, wi, wo] = 1 iff input col wi feeds output col wo at tap kw."""
    P = np.zeros((3, W, W), np.float32)
    for kw in range(3):
        for wo in range(w_out):
            wi = wo * s - p + kw * d
            if 0 <= wi < w_in:
                P[kw, wi, wo] = 1.0
    return P


def _resize_row_mat(H, h_in, h_out):
    M = np.zeros((H, H), np.float32)
    M[:h_out, :h_in] = _interp_mat(h_out, h_in)
    return M


def _resize_col_mat(W, C, w_in, w_out):
    A = np.zeros((W, W), np.float32)
    A[:w_in, :w_out] = _interp_mat(w_out, w_in).T          # A[w_in_idx, w_out_idx]
    return np.kron(A, np.eye(C, dtype=np.float32))          # channel-diagonal (W*C, W*C)


def build_operators(params, C, H, W, high_hw, gi_hw):
    """One-time preprocessing: fold eval-mode BN, build bf16 conv/resize operators."""
    lh, lw = [H], [W]
    for _ in range(4):                       # levels produced by conv1..conv4 (stride 2)
        lh.append(_conv_out(lh[-1], 2, 1, 1))
        lw.append(_conv_out(lw[-1], 2, 1, 1))
    L = W * C

    crh, cmw, cb = [], [], []
    for name, lvl, s, p, d in _LAYER_CFG:
        h_in, w_in = lh[lvl], lw[lvl]
        h_out, w_out = _conv_out(h_in, s, p, d), _conv_out(w_in, s, p, d)
        cw, scale, bias = params[name]
        wf = cw * scale[:, None, None, None]             # fold BN scale into conv weights
        crh.append(_conv_row_stack(H, h_in, h_out, s, p, d))
        place = jnp.asarray(_conv_col_place(W, w_in, w_out, s, p, d))
        # MW[kh, (wi, ci), (wo, co)] = sum_kw place[kw, wi, wo] * wf[co, ci, kh, kw],
        # three kh blocks stacked vertically -> (3L, L).
        cmw.append(jnp.einsum("xvw,ochx->hvcwo", place, wf).reshape(3 * L, L))
        wmask = np.zeros((W,), np.float32)
        wmask[:w_out] = 1.0                               # bias only on active output cols
        cb.append((jnp.asarray(wmask)[:, None] * bias[None, :]).reshape(1, L))

    # Bilinear (align_corners=True) resizes; identity resizes are dropped here and
    # replaced by a pass-through in the kernel (index None).
    resize_specs = [
        ("hi", high_hw,        (lh[1], lw[1])),   # high -> y1 level
        ("gi", gi_hw,          (lh[3], lw[3])),   # gi   -> y3 level
        ("54", (lh[4], lw[4]), (lh[4], lw[4])),   # y5   -> y4 level (always identity)
        ("43", (lh[4], lw[4]), (lh[3], lw[3])),   # y4   -> y3 level
        ("32", (lh[3], lw[3]), (lh[2], lw[2])),   # y3   -> y2 level
        ("21", (lh[2], lw[2]), (lh[1], lw[1])),   # y2   -> y1 level
        ("10", (lh[1], lw[1]), (lh[0], lw[0])),   # y1   -> x  level
    ]
    resize_idx, rrh, rrw = {}, [], []
    for key, ihw, ohw in resize_specs:
        if ihw == ohw:
            resize_idx[key] = None                 # pass-through (bit-exact)
            continue
        resize_idx[key] = len(rrh)
        rrh.append(_resize_row_mat(H, ihw[0], ohw[0]))
        rrw.append(_resize_col_mat(W, C, ihw[1], ohw[1]))
    if not rrh:                                    # keep stacked shapes well-formed
        rrh, rrw = [np.zeros((H, H), np.float32)], [np.zeros((L, L), np.float32)]

    bf16 = jnp.bfloat16
    ops = dict(
        conv_rh=jnp.asarray(np.stack(crh)).astype(bf16),   # (10, 3H, H)
        conv_mw=jnp.stack(cmw).astype(bf16),                # (10, 3L, L)
        conv_b=jnp.stack(cb),                               # (10, 1, L)  float32
        rs_rh=jnp.asarray(np.stack(rrh)).astype(bf16),      # (n_rs, H, H)
        rs_rw=jnp.asarray(np.stack(rrw)).astype(bf16),      # (n_rs, L, L)
    )
    return ops, resize_idx


# ----------------------------------------------------------------------------
# The fused Pallas kernel: entire USRM5_2 forward on per-sample (H, W*C) slabs
# ----------------------------------------------------------------------------
def _make_kernel(H, L, ridx):
    bf16, f32 = jnp.bfloat16, jnp.float32

    def kernel(x_ref, hi_ref, gi_ref, crh_ref, cmw_ref, cb_ref, rrh_ref, rrw_ref, o_ref):
        def conv(l, a):
            # BasicConv l (3x3 conv + folded eval-mode BN) as two MXU matmuls.
            a16 = a.astype(bf16)
            t = jnp.dot(crh_ref[l], a16, preferred_element_type=f32).astype(bf16)  # (3H, L)
            u = jnp.concatenate([t[0:H], t[H:2 * H], t[2 * H:3 * H]], axis=1)       # (H, 3L)
            return jnp.dot(u, cmw_ref[l], preferred_element_type=f32) + cb_ref[l]

        def up(key, a):
            # Bilinear align_corners=True resize (separable); identity -> pass-through.
            i = ridx[key]
            if i is None:
                return a
            t = jnp.dot(rrh_ref[i], a.astype(bf16), preferred_element_type=f32)
            return jnp.dot(t.astype(bf16), rrw_ref[i], preferred_element_type=f32)

        x = x_ref[...]
        y1 = conv(0, x) + up("hi", hi_ref[...])
        y2 = conv(1, y1)
        y3 = conv(2, y2) + up("gi", gi_ref[...])
        y4 = conv(3, y3)
        y5 = conv(4, y4)
        y4 = conv(5, y4 + up("54", y5))
        y3 = conv(6, y3 + up("43", y4))
        y2 = conv(7, y2 + up("32", y3))
        y1 = conv(8, y1 + up("21", y2))
        y = up("10", y1)
        o_ref[...] = conv(9, jnp.maximum(x + y, 0.0)).astype(o_ref.dtype)

    return kernel


# ----------------------------------------------------------------------------
# Forward wrapper: NCHW <-> lane-dense canonical layout + the single pallas_call
# ----------------------------------------------------------------------------
def usrm5_2_forward(ops, x_nchw, high_nchw, gi_nchw, *, resize_idx):
    N, C, H, W = x_nchw.shape
    L = W * C

    def to_canon(t):
        n, c, h, w = t.shape
        t = jnp.transpose(t, (0, 2, 3, 1))                           # NHWC
        t = jnp.pad(t, ((0, 0), (0, H - h), (0, W - w), (0, 0)))      # embed in canonical grid
        return t.reshape(N, H, L)

    x3, hi3, gi3 = to_canon(x_nchw), to_canon(high_nchw), to_canon(gi_nchw)

    op_arrays = (ops["conv_rh"], ops["conv_mw"], ops["conv_b"], ops["rs_rh"], ops["rs_rw"])
    act_spec = pl.BlockSpec((None, H, L), lambda n: (n, 0, 0))        # per-sample slab
    op_specs = [pl.BlockSpec(a.shape, lambda n, nd=a.ndim: (0,) * nd) for a in op_arrays]

    n_rs = ops["rs_rh"].shape[0]
    flops = N * (10 * (2 * 3 * H * H * L + 2 * H * 3 * L * L)
                 + n_rs * (2 * H * H * L + 2 * H * L * L))
    bytes_accessed = 4 * (x3.size + hi3.size + gi3.size + N * H * L) + sum(
        int(np.prod(a.shape)) * a.dtype.itemsize for a in op_arrays)

    out3 = pl.pallas_call(
        _make_kernel(H, L, resize_idx),
        out_shape=jax.ShapeDtypeStruct((N, H, L), jnp.float32),
        grid=(N,),
        in_specs=[act_spec, act_spec, act_spec, *op_specs],
        out_specs=act_spec,
        compiler_params=pltpu.CompilerParams(
            dimension_semantics=("parallel",),        # v7x: one sample per TensorCore
            vmem_limit_bytes=32 * 1024 * 1024),
        cost_estimate=pl.CostEstimate(flops=flops, transcendentals=0,
                                      bytes_accessed=bytes_accessed),
    )(x3, hi3, gi3, *op_arrays)

    return jnp.transpose(out3.reshape(N, H, W, C), (0, 3, 1, 2))


# ----------------------------------------------------------------------------
# Pure-JAX NCHW reference (eval-mode BN) to validate the fused kernel
# ----------------------------------------------------------------------------
def _ref_forward(params, x, high, gi):
    def basic_conv(name, a, s, p, d):
        w, scale, bias = params[name]
        out = lax.conv_general_dilated(
            a, w, window_strides=(s, s), padding=[(p, p), (p, p)],
            rhs_dilation=(d, d), dimension_numbers=("NCHW", "OIHW", "NCHW"))
        return out * scale[None, :, None, None] + bias[None, :, None, None]

    def interp(a, hw):
        Mh = jnp.asarray(_interp_mat(hw[0], a.shape[2]))
        Mw = jnp.asarray(_interp_mat(hw[1], a.shape[3]))
        return jnp.einsum("oh,nchw,pw->ncop", Mh, a, Mw)

    y1 = basic_conv("conv1", x, 2, 1, 1)
    y1 = y1 + interp(high, y1.shape[2:])
    y2 = basic_conv("conv2", y1, 2, 1, 1)
    y3 = basic_conv("conv3", y2, 2, 1, 1)
    y3 = y3 + interp(gi, y3.shape[2:])
    y4 = basic_conv("conv4", y3, 2, 1, 1)
    y5 = basic_conv("conv5", y4, 1, 2, 2)
    y4 = basic_conv("conv_rev1", y4 + interp(y5, y4.shape[2:]), 1, 1, 1)
    y3 = basic_conv("conv_rev2", y3 + interp(y4, y3.shape[2:]), 1, 1, 1)
    y2 = basic_conv("conv_rev3", y2 + interp(y3, y2.shape[2:]), 1, 1, 1)
    y1 = basic_conv("conv_rev4", y1 + interp(y2, y1.shape[2:]), 1, 1, 1)
    y = interp(y1, x.shape[2:])
    return basic_conv("conv_sum", jnp.maximum(x + y, 0.0), 1, 1, 1)


# ----------------------------------------------------------------------------
# Deterministic synthetic parameters (Conv2d weight + eval-mode BN to fold)
# ----------------------------------------------------------------------------
def init_basic_conv(key, C):
    kw, kg, kb, km, kv = jax.random.split(key, 5)
    w = 0.1 * jax.random.normal(kw, (C, C, 3, 3), jnp.float32)       # Conv2d weight
    gamma = 1.0 + 0.1 * jax.random.normal(kg, (C,), jnp.float32)     # BN weight
    beta = 0.1 * jax.random.normal(kb, (C,), jnp.float32)            # BN bias
    mean = 0.1 * jax.random.normal(km, (C,), jnp.float32)            # running_mean
    var = jnp.abs(jax.random.normal(kv, (C,), jnp.float32)) + 0.5    # running_var
    eps = 1e-5
    scale = gamma / jnp.sqrt(var + eps)
    bias = beta - mean * scale
    return w, scale, bias


if __name__ == "__main__":
    C, N, H, W = 8, 2, 16, 16
    key = jax.random.PRNGKey(0)
    keys = jax.random.split(key, 13)
    names = [cfg[0] for cfg in _LAYER_CFG]
    params = {n: init_basic_conv(keys[i], C) for i, n in enumerate(names)}

    x = jax.random.normal(keys[10], (N, C, H, W), jnp.float32)
    high = jax.random.normal(keys[11], (N, C, 8, 8), jnp.float32)
    gi = jax.random.normal(keys[12], (N, C, 4, 4), jnp.float32)

    # One-time host-side preprocessing (BN fold + conv/resize operator matrices).
    ops, resize_idx = build_operators(params, C=C, H=H, W=W, high_hw=(8, 8), gi_hw=(4, 4))

    fwd = jax.jit(functools.partial(usrm5_2_forward, resize_idx=resize_idx))
    out = fwd(ops, x, high, gi)
    jax.block_until_ready(out)
    assert out.shape == (N, C, H, W), out.shape
    assert bool(jnp.all(jnp.isfinite(out)))

    # Validate the fused bf16-operand kernel against the f32 reference.
    ref = _ref_forward(params, x, high, gi)
    err = float(jnp.max(jnp.abs(out - ref)))
    scl = float(jnp.max(jnp.abs(ref)))
    assert err <= 0.05 * (scl + 1.0), (err, scl)
    print("KERNEL_OK")
</pallas_src>

<mosaic_0001>
module attributes {stable_mosaic.version = 11 : i64} {
  func.func @kernel(%arg0: i32, %arg1: memref<1x16x128xf32, #tpu.memory_space<vmem>>, %arg2: memref<1x16x128xf32, #tpu.memory_space<vmem>>, %arg3: memref<1x16x128xf32, #tpu.memory_space<vmem>>, %arg4: memref<10x48x16xbf16, #tpu.memory_space<vmem>>, %arg5: memref<10x384x128xbf16, #tpu.memory_space<vmem>>, %arg6: memref<10x1x128xf32, #tpu.memory_space<vmem>>, %arg7: memref<5x16x16xbf16, #tpu.memory_space<vmem>>, %arg8: memref<5x128x128xbf16, #tpu.memory_space<vmem>>, %arg9: memref<1x16x128xf32, #tpu.memory_space<vmem>>) attributes {dimension_semantics = [#tpu.dimension_semantics<parallel>], iteration_bounds = array<i64: 2>, scalar_prefetch = 0 : i64, scratch_operands = 0 : i64, tpu.core_type = #tpu.core_type<tc>, window_params = [{transform_indices = @transform_0, window_bounds = array<i64: 1, 16, 128>}, {transform_indices = @transform_1, window_bounds = array<i64: 1, 16, 128>}, {transform_indices = @transform_2, window_bounds = array<i64: 1, 16, 128>}, {pipeline_mode = #tpu.pipeline_mode<synchronous>, transform_indices = @transform_3, window_bounds = array<i64: 10, 48, 16>}, {pipeline_mode = #tpu.pipeline_mode<synchronous>, transform_indices = @transform_4, window_bounds = array<i64: 10, 384, 128>}, {pipeline_mode = #tpu.pipeline_mode<synchronous>, transform_indices = @transform_5, window_bounds = array<i64: 10, 1, 128>}, {pipeline_mode = #tpu.pipeline_mode<synchronous>, transform_indices = @transform_6, window_bounds = array<i64: 5, 16, 16>}, {pipeline_mode = #tpu.pipeline_mode<synchronous>, transform_indices = @transform_7, window_bounds = array<i64: 5, 128, 128>}, {transform_indices = @transform_8, window_bounds = array<i64: 1, 16, 128>}]} {
    %c0 = arith.constant 0 : index
    %c0_0 = arith.constant 0 : index
    %c0_1 = arith.constant 0 : index
    %0 = vector.load %arg1[%c0, %c0_0, %c0_1] : memref<1x16x128xf32, #tpu.memory_space<vmem>>, vector<1x16x128xf32>
    %1 = vector.shape_cast %0 : vector<1x16x128xf32> to vector<16x128xf32>
    %2 = arith.truncf %1 : vector<16x128xf32> to vector<16x128xbf16>
    %c0_2 = arith.constant 0 : index
    %c0_3 = arith.constant 0 : index
    %c0_4 = arith.constant 0 : index
    %3 = vector.load %arg4[%c0_2, %c0_3, %c0_4] : memref<10x48x16xbf16, #tpu.memory_space<vmem>>, vector<1x48x16xbf16>
    %4 = vector.shape_cast %3 : vector<1x48x16xbf16> to vector<48x16xbf16>
    %cst = arith.constant dense<0.000000e+00> : vector<48x128xf32>
    %5 = tpu.matmul %4, %2, %cst {dimension_numbers = #tpu.dot_dimension_numbers<[1], [0], [0], [1], [0, 0, 1, 1], [], []>} : vector<48x16xbf16>, vector<16x128xbf16>, vector<48x128xf32> -> vector<48x128xf32>
    %6 = arith.truncf %5 : vector<48x128xf32> to vector<48x128xbf16>
    %7 = vector.extract_strided_slice %6 {offsets = [0, 0], sizes = [16, 128], strides = [1, 1]} : vector<48x128xbf16> to vector<16x128xbf16>
    %8 = vector.extract_strided_slice %6 {offsets = [16, 0], sizes = [16, 128], strides = [1, 1]} : vector<48x128xbf16> to vector<16x128xbf16>
    %9 = vector.extract_strided_slice %6 {offsets = [32, 0], sizes = [16, 128], strides = [1, 1]} : vector<48x128xbf16> to vector<16x128xbf16>
    %10 = tpu.concatenate %7, %8, %9 in 1 : vector<16x128xbf16>, vector<16x128xbf16>, vector<16x128xbf16> -> vector<16x384xbf16>
    %c0_5 = arith.constant 0 : index
    %c0_6 = arith.constant 0 : index
    %c0_7 = arith.constant 0 : index
    %11 = vector.load %arg5[%c0_5, %c0_6, %c0_7] : memref<10x384x128xbf16, #tpu.memory_space<vmem>>, vector<1x384x128xbf16>
    %12 = vector.shape_cast %11 : vector<1x384x128xbf16> to vector<384x128xbf16>
    %cst_8 = arith.constant dense<0.000000e+00> : vector<16x128xf32>
    %13 = tpu.matmul %10, %12, %cst_8 {dimension_numbers = #tpu.dot_dimension_numbers<[1], [0], [0], [1], [0, 0, 1, 1], [], []>} : vector<16x384xbf16>, vector<384x128xbf16>, vector<16x128xf32> -> vector<16x128xf32>
    %c0_9 = arith.constant 0 : index
    %c0_10 = arith.constant 0 : index
    %c0_11 = arith.constant 0 : index
    %14 = vector.load %arg6[%c0_9, %c0_10, %c0_11] : memref<10x1x128xf32, #tpu.memory_space<vmem>>, vector<1x1x128xf32>
    %15 = vector.shape_cast %14 : vector<1x1x128xf32> to vector<1x128xf32>
    %16 = vector.broadcast %15 : vector<1x128xf32> to vector<16x128xf32>
    %17 = arith.addf %13, %16 : vector<16x128xf32>
    %c0_12 = arith.constant 0 : index
    %c0_13 = arith.constant 0 : index
    %c0_14 = arith.constant 0 : index
    %18 = vector.load %arg2[%c0_12, %c0_13, %c0_14] : memref<1x16x128xf32, #tpu.memory_space<vmem>>, vector<1x16x128xf32>
    %19 = vector.shape_cast %18 : vector<1x16x128xf32> to vector<16x128xf32>
    %20 = arith.addf %17, %19 : vector<16x128xf32>
    %21 = arith.truncf %20 : vector<16x128xf32> to vector<16x128xbf16>
    %c1 = arith.constant 1 : index
    %c0_15 = arith.constant 0 : index
    %c0_16 = arith.constant 0 : index
    %22 = vector.load %arg4[%c1, %c0_15, %c0_16] : memref<10x48x16xbf16, #tpu.memory_space<vmem>>, vector<1x48x16xbf16>
    %23 = vector.shape_cast %22 : vector<1x48x16xbf16> to vector<48x16xbf16>
    %cst_17 = arith.constant dense<0.000000e+00> : vector<48x128xf32>
    %24 = tpu.matmul %23, %21, %cst_17 {dimension_numbers = #tpu.dot_dimension_numbers<[1], [0], [0], [1], [0, 0, 1, 1], [], []>} : vector<48x16xbf16>, vector<16x128xbf16>, vector<48x128xf32> -> vector<48x128xf32>
    %25 = arith.truncf %24 : vector<48x128xf32> to vector<48x128xbf16>
    %26 = vector.extract_strided_slice %25 {offsets = [0, 0], sizes = [16, 128], strides = [1, 1]} : vector<48x128xbf16> to vector<16x128xbf16>
    %27 = vector.extract_strided_slice %25 {offsets = [16, 0], sizes = [16, 128], strides = [1, 1]} : vector<48x128xbf16> to vector<16x128xbf16>
    %28 = vector.extract_strided_slice %25 {offsets = [32, 0], sizes = [16, 128], strides = [1, 1]} : vector<48x128xbf16> to vector<16x128xbf16>
    %29 = tpu.concatenate %26, %27, %28 in 1 : vector<16x128xbf16>, vector<16x128xbf16>, vector<16x128xbf16> -> vector<16x384xbf16>
    %c1_18 = arith.constant 1 : index
    %c0_19 = arith.constant 0 : index
    %c0_20 = arith.constant 0 : index
    %30 = vector.load %arg5[%c1_18, %c0_19, %c0_20] : memref<10x384x128xbf16, #tpu.memory_space<vmem>>, vector<1x384x128xbf16>
    %31 = vector.shape_cast %30 : vector<1x384x128xbf16> to vector<384x128xbf16>
    %cst_21 = arith.constant dense<0.000000e+00> : vector<16x128xf32>
    %32 = tpu.matmul %29, %31, %cst_21 {dimension_numbers = #tpu.dot_dimension_numbers<[1], [0], [0], [1], [0, 0, 1, 1], [], []>} : vector<16x384xbf16>, vector<384x128xbf16>, vector<16x128xf32> -> vector<16x128xf32>
    %c1_22 = arith.constant 1 : index
    %c0_23 = arith.constant 0 : index
    %c0_24 = arith.constant 0 : index
    %33 = vector.load %arg6[%c1_22, %c0_23, %c0_24] : memref<10x1x128xf32, #tpu.memory_space<vmem>>, vector<1x1x128xf32>
    %34 = vector.shape_cast %33 : vector<1x1x128xf32> to vector<1x128xf32>
    %35 = vector.broadcast %34 : vector<1x128xf32> to vector<16x128xf32>
    %36 = arith.addf %32, %35 : vector<16x128xf32>
    %37 = arith.truncf %36 : vector<16x128xf32> to vector<16x128xbf16>
    %c2 = arith.constant 2 : index
    %c0_25 = arith.constant 0 : index
    %c0_26 = arith.constant 0 : index
    %38 = vector.load %arg4[%c2, %c0_25, %c0_26] : memref<10x48x16xbf16, #tpu.memory_space<vmem>>, vector<1x48x16xbf16>
    %39 = vector.shape_cast %38 : vector<1x48x16xbf16> to vector<48x16xbf16>
    %cst_27 = arith.constant dense<0.000000e+00> : vector<48x128xf32>
    %40 = tpu.matmul %39, %37, %cst_27 {dimension_numbers = #tpu.dot_dimension_numbers<[1], [0], [0], [1], [0, 0, 1, 1], [], []>} : vector<48x16xbf16>, vector<16x128xbf16>, vector<48x128xf32> -> vector<48x128xf32>
    %41 = arith.truncf %40 : vector<48x128xf32> to vector<48x128xbf16>
    %42 = vector.extract_strided_slice %41 {offsets = [0, 0], sizes = [16, 128], strides = [1, 1]} : vector<48x128xbf16> to vector<16x128xbf16>
    %43 = vector.extract_strided_slice %41 {offsets = [16, 0], sizes = [16, 128], strides = [1, 1]} : vector<48x128xbf16> to vector<16x128xbf16>
    %44 = vector.extract_strided_slice %41 {offsets = [32, 0], sizes = [16, 128], strides = [1, 1]} : vector<48x128xbf16> to vector<16x128xbf16>
    %45 = tpu.concatenate %42, %43, %44 in 1 : vector<16x128xbf16>, vector<16x128xbf16>, vector<16x128xbf16> -> vector<16x384xbf16>
    %c2_28 = arith.constant 2 : index
    %c0_29 = arith.constant 0 : index
    %c0_30 = arith.constant 0 : index
    %46 = vector.load %arg5[%c2_28, %c0_29, %c0_30] : memref<10x384x128xbf16, #tpu.memory_space<vmem>>, vector<1x384x128xbf16>
    %47 = vector.shape_cast %46 : vector<1x384x128xbf16> to vector<384x128xbf16>
    %cst_31 = arith.constant dense<0.000000e+00> : vector<16x128xf32>
    %48 = tpu.matmul %45, %47, %cst_31 {dimension_numbers = #tpu.dot_dimension_numbers<[1], [0], [0], [1], [0, 0, 1, 1], [], []>} : vector<16x384xbf16>, vector<384x128xbf16>, vector<16x128xf32> -> vector<16x128xf32>
    %c2_32 = arith.constant 2 : index
    %c0_33 = arith.constant 0 : index
    %c0_34 = arith.constant 0 : index
    %49 = vector.load %arg6[%c2_32, %c0_33, %c0_34] : memref<10x1x128xf32, #tpu.memory_space<vmem>>, vector<1x1x128xf32>
    %50 = vector.shape_cast %49 : vector<1x1x128xf32> to vector<1x128xf32>
    %51 = vector.broadcast %50 : vector<1x128xf32> to vector<16x128xf32>
    %52 = arith.addf %48, %51 : vector<16x128xf32>
    %c0_35 = arith.constant 0 : index
    %c0_36 = arith.constant 0 : index
    %c0_37 = arith.constant 0 : index
    %53 = vector.load %arg3[%c0_35, %c0_36, %c0_37] : memref<1x16x128xf32, #tpu.memory_space<vmem>>, vector<1x16x128xf32>
    %54 = vector.shape_cast %53 : vector<1x16x128xf32> to vector<16x128xf32>
    %c0_38 = arith.constant 0 : index
    %c0_39 = arith.constant 0 : index
    %c0_40 = arith.constant 0 : index
    %55 = vector.load %arg7[%c0_38, %c0_39, %c0_40] : memref<5x16x16xbf16, #tpu.memory_space<vmem>>, vector<1x16x16xbf16>
    %56 = vector.shape_cast %55 : vector<1x16x16xbf16> to vector<16x16xbf16>
    %57 = arith.truncf %54 : vector<16x128xf32> to vector<16x128xbf16>
    %cst_41 = arith.constant dense<0.000000e+00> : vector<16x128xf32>
    %58 = tpu.matmul %56, %57, %cst_41 {dimension_numbers = #tpu.dot_dimension_numbers<[1], [0], [0], [1], [0, 0, 1, 1], [], []>} : vector<16x16xbf16>, vector<16x128xbf16>, vector<16x128xf32> -> vector<16x128xf32>
    %59 = arith.truncf %58 : vector<16x128xf32> to vector<16x128xbf16>
    %c0_42 = arith.constant 0 : index
    %c0_43 = arith.constant 0 : index
    %c0_44 = arith.constant 0 : index
    %60 = vector.load %arg8[%c0_42, %c0_43, %c0_44] : memref<5x128x128xbf16, #tpu.memory_space<vmem>>, vector<1x128x128xbf16>
    %61 = vector.shape_cast %60 : vector<1x128x128xbf16> to vector<128x128xbf16>
    %cst_45 = arith.constant dense<0.000000e+00> : vector<16x128xf32>
    %62 = tpu.matmul %59, %61, %cst_45 {dimension_numbers = #tpu.dot_dimension_numbers<[1], [0], [0], [1], [0, 0, 1, 1], [], []>} : vector<16x128xbf16>, vector<128x128xbf16>, vector<16x128xf32> -> vector<16x128xf32>
    %63 = arith.addf %52, %62 : vector<16x128xf32>
    %64 = arith.truncf %63 : vector<16x128xf32> to vector<16x128xbf16>
    %c3 = arith.constant 3 : index
    %c0_46 = arith.constant 0 : index
    %c0_47 = arith.constant 0 : index
    %65 = vector.load %arg4[%c3, %c0_46, %c0_47] : memref<10x48x16xbf16, #tpu.memory_space<vmem>>, vector<1x48x16xbf16>
    %66 = vector.shape_cast %65 : vector<1x48x16xbf16> to vector<48x16xbf16>
    %cst_48 = arith.constant dense<0.000000e+00> : vector<48x128xf32>
    %67 = tpu.matmul %66, %64, %cst_48 {dimension_numbers = #tpu.dot_dimension_numbers<[1], [0], [0], [1], [0, 0, 1, 1], [], []>} : vector<48x16xbf16>, vector<16x128xbf16>, vector<48x128xf32> -> vector<48x128xf32>
    %68 = arith.truncf %67 : vector<48x128xf32> to vector<48x128xbf16>
    %69 = vector.extract_strided_slice %68 {offsets = [0, 0], sizes = [16, 128], strides = [1, 1]} : vector<48x128xbf16> to vector<16x128xbf16>
    %70 = vector.extract_strided_slice %68 {offsets = [16, 0], sizes = [16, 128], strides = [1, 1]} : vector<48x128xbf16> to vector<16x128xbf16>
    %71 = vector.extract_strided_slice %68 {offsets = [32, 0], sizes = [16, 128], strides = [1, 1]} : vector<48x128xbf16> to vector<16x128xbf16>
    %72 = tpu.concatenate %69, %70, %71 in 1 : vector<16x128xbf16>, vector<16x128xbf16>, vector<16x128xbf16> -> vector<16x384xbf16>
    %c3_49 = arith.constant 3 : index
    %c0_50 = arith.constant 0 : index
    %c0_51 = arith.constant 0 : index
    %73 = vector.load %arg5[%c3_49, %c0_50, %c0_51] : memref<10x384x128xbf16, #tpu.memory_space<vmem>>, vector<1x384x128xbf16>
    %74 = vector.shape_cast %73 : vector<1x384x128xbf16> to vector<384x128xbf16>
    %cst_52 = arith.constant dense<0.000000e+00> : vector<16x128xf32>
    %75 = tpu.matmul %72, %74, %cst_52 {dimension_numbers = #tpu.dot_dimension_numbers<[1], [0], [0], [1], [0, 0, 1, 1], [], []>} : vector<16x384xbf16>, vector<384x128xbf16>, vector<16x128xf32> -> vector<16x128xf32>
    %c3_53 = arith.constant 3 : index
    %c0_54 = arith.constant 0 : index
    %c0_55 = arith.constant 0 : index
    %76 = vector.load %arg6[%c3_53, %c0_54, %c0_55] : memref<10x1x128xf32, #tpu.memory_space<vmem>>, vector<1x1x128xf32>
    %77 = vector.shape_cast %76 : vector<1x1x128xf32> to vector<1x128xf32>
    %78 = vector.broadcast %77 : vector<1x128xf32> to vector<16x128xf32>
    %79 = arith.addf %75, %78 : vector<16x128xf32>
    %80 = arith.truncf %79 : vector<16x128xf32> to vector<16x128xbf16>
    %c4 = arith.constant 4 : index
    %c0_56 = arith.constant 0 : index
    %c0_57 = arith.constant 0 : index
    %81 = vector.load %arg4[%c4, %c0_56, %c0_57] : memref<10x48x16xbf16, #tpu.memory_space<vmem>>, vector<1x48x16xbf16>
    %82 = vector.shape_cast %81 : vector<1x48x16xbf16> to vector<48x16xbf16>
    %cst_58 = arith.constant dense<0.000000e+00> : vector<48x128xf32>
    %83 = tpu.matmul %82, %80, %cst_58 {dimension_numbers = #tpu.dot_dimension_numbers<[1], [0], [0], [1], [0, 0, 1, 1], [], []>} : vector<48x16xbf16>, vector<16x128xbf16>, vector<48x128xf32> -> vector<48x128xf32>
    %84 = arith.truncf %83 : vector<48x128xf32> to vector<48x128xbf16>
    %85 = vector.extract_strided_slice %84 {offsets = [0, 0], sizes = [16, 128], strides = [1, 1]} : vector<48x128xbf16> to vector<16x128xbf16>
    %86 = vector.extract_strided_slice %84 {offsets = [16, 0], sizes = [16, 128], strides = [1, 1]} : vector<48x128xbf16> to vector<16x128xbf16>
    %87 = vector.extract_strided_slice %84 {offsets = [32, 0], sizes = [16, 128], strides = [1, 1]} : vector<48x128xbf16> to vector<16x128xbf16>
    %88 = tpu.concatenate %85, %86, %87 in 1 : vector<16x128xbf16>, vector<16x128xbf16>, vector<16x128xbf16> -> vector<16x384xbf16>
    %c4_59 = arith.constant 4 : index
    %c0_60 = arith.constant 0 : index
    %c0_61 = arith.constant 0 : index
    %89 = vector.load %arg5[%c4_59, %c0_60, %c0_61] : memref<10x384x128xbf16, #tpu.memory_space<vmem>>, vector<1x384x128xbf16>
    %90 = vector.shape_cast %89 : vector<1x384x128xbf16> to vector<384x128xbf16>
    %cst_62 = arith.constant dense<0.000000e+00> : vector<16x128xf32>
    %91 = tpu.matmul %88, %90, %cst_62 {dimension_numbers = #tpu.dot_dimension_numbers<[1], [0], [0], [1], [0, 0, 1, 1], [], []>} : vector<16x384xbf16>, vector<384x128xbf16>, vector<16x128xf32> -> vector<16x128xf32>
    %c4_63 = arith.constant 4 : index
    %c0_64 = arith.constant 0 : index
    %c0_65 = arith.constant 0 : index
    %92 = vector.load %arg6[%c4_63, %c0_64, %c0_65] : memref<10x1x128xf32, #tpu.memory_space<vmem>>, vector<1x1x128xf32>
    %93 = vector.shape_cast %92 : vector<1x1x128xf32> to vector<1x128xf32>
    %94 = vector.broadcast %93 : vector<1x128xf32> to vector<16x128xf32>
    %95 = arith.addf %91, %94 : vector<16x128xf32>
    %96 = arith.addf %79, %95 : vector<16x128xf32>
    %97 = arith.truncf %96 : vector<16x128xf32> to vector<16x128xbf16>
    %c5 = arith.constant 5 : index
    %c0_66 = arith.constant 0 : index
    %c0_67 = arith.constant 0 : index
    %98 = vector.load %arg4[%c5, %c0_66, %c0_67] : memref<10x48x16xbf16, #tpu.memory_space<vmem>>, vector<1x48x16xbf16>
    %99 = vector.shape_cast %98 : vector<1x48x16xbf16> to vector<48x16xbf16>
    %cst_68 = arith.constant dense<0.000000e+00> : vector<48x128xf32>
    %100 = tpu.matmul %99, %97, %cst_68 {dimension_numbers = #tpu.dot_dimension_numbers<[1], [0], [0], [1], [0, 0, 1, 1], [], []>} : vector<48x16xbf16>, vector<16x128xbf16>, vector<48x128xf32> -> vector<48x128xf32>
    %101 = arith.truncf %100 : vector<48x128xf32> to vector<48x128xbf16>
    %102 = vector.extract_strided_slice %101 {offsets = [0, 0], sizes = [16, 128], strides = [1, 1]} : vector<48x128xbf16> to vector<16x128xbf16>
    %103 = vector.extract_strided_slice %101 {offsets = [16, 0], sizes = [16, 128], strides = [1, 1]} : vector<48x128xbf16> to vector<16x128xbf16>
    %104 = vector.extract_strided_slice %101 {offsets = [32, 0], sizes = [16, 128], strides = [1, 1]} : vector<48x128xbf16> to vector<16x128xbf16>
    %105 = tpu.concatenate %102, %103, %104 in 1 : vector<16x128xbf16>, vector<16x128xbf16>, vector<16x128xbf16> -> vector<16x384xbf16>
    %c5_69 = arith.constant 5 : index
    %c0_70 = arith.constant 0 : index
    %c0_71 = arith.constant 0 : index
    %106 = vector.load %arg5[%c5_69, %c0_70, %c0_71] : memref<10x384x128xbf16, #tpu.memory_space<vmem>>, vector<1x384x128xbf16>
    %107 = vector.shape_cast %106 : vector<1x384x128xbf16> to vector<384x128xbf16>
    %cst_72 = arith.constant dense<0.000000e+00> : vector<16x128xf32>
    %108 = tpu.matmul %105, %107, %cst_72 {dimension_numbers = #tpu.dot_dimension_numbers<[1], [0], [0], [1], [0, 0, 1, 1], [], []>} : vector<16x384xbf16>, vector<384x128xbf16>, vector<16x128xf32> -> vector<16x128xf32>
    %c5_73 = arith.constant 5 : index
    %c0_74 = arith.constant 0 : index
    %c0_75 = arith.constant 0 : index
    %109 = vector.load %arg6[%c5_73, %c0_74, %c0_75] : memref<10x1x128xf32, #tpu.memory_space<vmem>>, vector<1x1x128xf32>
    %110 = vector.shape_cast %109 : vector<1x1x128xf32> to vector<1x128xf32>
    %111 = vector.broadcast %110 : vector<1x128xf32> to vector<16x128xf32>
    %112 = arith.addf %108, %111 : vector<16x128xf32>
    %c1_76 = arith.constant 1 : index
    %c0_77 = arith.constant 0 : index
    %c0_78 = arith.constant 0 : index
    %113 = vector.load %arg7[%c1_76, %c0_77, %c0_78] : memref<5x16x16xbf16, #tpu.memory_space<vmem>>, vector<1x16x16xbf16>
    %114 = vector.shape_cast %113 : vector<1x16x16xbf16> to vector<16x16xbf16>
    %115 = arith.truncf %112 : vector<16x128xf32> to vector<16x128xbf16>
    %cst_79 = arith.constant dense<0.000000e+00> : vector<16x128xf32>
    %116 = tpu.matmul %114, %115, %cst_79 {dimension_numbers = #tpu.dot_dimension_numbers<[1], [0], [0], [1], [0, 0, 1, 1], [], []>} : vector<16x16xbf16>, vector<16x128xbf16>, vector<16x128xf32> -> vector<16x128xf32>
    %117 = arith.truncf %116 : vector<16x128xf32> to vector<16x128xbf16>
    %c1_80 = arith.constant 1 : index
    %c0_81 = arith.constant 0 : index
    %c0_82 = arith.constant 0 : index
    %118 = vector.load %arg8[%c1_80, %c0_81, %c0_82] : memref<5x128x128xbf16, #tpu.memory_space<vmem>>, vector<1x128x128xbf16>
    %119 = vector.shape_cast %118 : vector<1x128x128xbf16> to vector<128x128xbf16>
    %cst_83 = arith.constant dense<0.000000e+00> : vector<16x128xf32>
    %120 = tpu.matmul %117, %119, %cst_83 {dimension_numbers = #tpu.dot_dimension_numbers<[1], [0], [0], [1], [0, 0, 1, 1], [], []>} : vector<16x128xbf16>, vector<128x128xbf16>, vector<16x128xf32> -> vector<16x128xf32>
    %121 = arith.addf %63, %120 : vector<16x128xf32>
    %122 = arith.truncf %121 : vector<16x128xf32> to vector<16x128xbf16>
    %c6 = arith.constant 6 : index
    %c0_84 = arith.constant 0 : index
    %c0_85 = arith.constant 0 : index
    %123 = vector.load %arg4[%c6, %c0_84, %c0_85] : memref<10x48x16xbf16, #tpu.memory_space<vmem>>, vector<1x48x16xbf16>
    %124 = vector.shape_cast %123 : vector<1x48x16xbf16> to vector<48x16xbf16>
    %cst_86 = arith.constant dense<0.000000e+00> : vector<48x128xf32>
    %125 = tpu.matmul %124, %122, %cst_86 {dimension_numbers = #tpu.dot_dimension_numbers<[1], [0], [0], [1], [0, 0, 1, 1], [], []>} : vector<48x16xbf16>, vector<16x128xbf16>, vector<48x128xf32> -> vector<48x128xf32>
    %126 = arith.truncf %125 : vector<48x128xf32> to vector<48x128xbf16>
    %127 = vector.extract_strided_slice %126 {offsets = [0, 0], sizes = [16, 128], strides = [1, 1]} : vector<48x128xbf16> to vector<16x128xbf16>
    %128 = vector.extract_strided_slice %126 {offsets = [16, 0], sizes = [16, 128], strides = [1, 1]} : vector<48x128xbf16> to vector<16x128xbf16>
    %129 = vector.extract_strided_slice %126 {offsets = [32, 0], sizes = [16, 128], strides = [1, 1]} : vector<48x128xbf16> to vector<16x128xbf16>
    %130 = tpu.concatenate %127, %128, %129 in 1 : vector<16x128xbf16>, vector<16x128xbf16>, vector<16x128xbf16> -> vector<16x384xbf16>
    %c6_87 = arith.constant 6 : index
    %c0_88 = arith.constant 0 : index
    %c0_89 = arith.constant 0 : index
    %131 = vector.load %arg5[%c6_87, %c0_88, %c0_89] : memref<10x384x128xbf16, #tpu.memory_space<vmem>>, vector<1x384x128xbf16>
    %132 = vector.shape_cast %131 : vector<1x384x128xbf16> to vector<384x128xbf16>
    %cst_90 = arith.constant dense<0.000000e+00> : vector<16x128xf32>
    %133 = tpu.matmul %130, %132, %cst_90 {dimension_numbers = #tpu.dot_dimension_numbers<[1], [0], [0], [1], [0, 0, 1, 1], [], []>} : vector<16x384xbf16>, vector<384x128xbf16>, vector<16x128xf32> -> vector<16x128xf32>
    %c6_91 = arith.constant 6 : index
    %c0_92 = arith.constant 0 : index
    %c0_93 = arith.constant 0 : index
    %134 = vector.load %arg6[%c6_91, %c0_92, %c0_93] : memref<10x1x128xf32, #tpu.memory_space<vmem>>, vector<1x1x128xf32>
    %135 = vector.shape_cast %134 : vector<1x1x128xf32> to vector<1x128xf32>
    %136 = vector.broadcast %135 : vector<1x128xf32> to vector<16x128xf32>
    %137 = arith.addf %133, %136 : vector<16x128xf32>
    %c2_94 = arith.constant 2 : index
    %c0_95 = arith.constant 0 : index
    %c0_96 = arith.constant 0 : index
    %138 = vector.load %arg7[%c2_94, %c0_95, %c0_96] : memref<5x16x16xbf16, #tpu.memory_space<vmem>>, vector<1x16x16xbf16>
    %139 = vector.shape_cast %138 : vector<1x16x16xbf16> to vector<16x16xbf16>
    %140 = arith.truncf %137 : vector<16x128xf32> to vector<16x128xbf16>
    %cst_97 = arith.constant dense<0.000000e+00> : vector<16x128xf32>
    %141 = tpu.matmul %139, %140, %cst_97 {dimension_numbers = #tpu.dot_dimension_numbers<[1], [0], [0], [1], [0, 0, 1, 1], [], []>} : vector<16x16xbf16>, vector<16x128xbf16>, vector<16x128xf32> -> vector<16x128xf32>
    %142 = arith.truncf %141 : vector<16x128xf32> to vector<16x128xbf16>
    %c2_98 = arith.constant 2 : index
    %c0_99 = arith.constant 0 : index
    %c0_100 = arith.constant 0 : index
    %143 = vector.load %arg8[%c2_98, %c0_99, %c0_100] : memref<5x128x128xbf16, #tpu.memory_space<vmem>>, vector<1x128x128xbf16>
    %144 = vector.shape_cast %143 : vector<1x128x128xbf16> to vector<128x128xbf16>
    %cst_101 = arith.constant dense<0.000000e+00> : vector<16x128xf32>
    %145 = tpu.matmul %142, %144, %cst_101 {dimension_numbers = #tpu.dot_dimension_numbers<[1], [0], [0], [1], [0, 0, 1, 1], [], []>} : vector<16x128xbf16>, vector<128x128xbf16>, vector<16x128xf32> -> vector<16x128xf32>
    %146 = arith.addf %36, %145 : vector<16x128xf32>
    %147 = arith.truncf %146 : vector<16x128xf32> to vector<16x128xbf16>
    %c7 = arith.constant 7 : index
    %c0_102 = arith.constant 0 : index
    %c0_103 = arith.constant 0 : index
    %148 = vector.load %arg4[%c7, %c0_102, %c0_103] : memref<10x48x16xbf16, #tpu.memory_space<vmem>>, vector<1x48x16xbf16>
    %149 = vector.shape_cast %148 : vector<1x48x16xbf16> to vector<48x16xbf16>
    %cst_104 = arith.constant dense<0.000000e+00> : vector<48x128xf32>
    %150 = tpu.matmul %149, %147, %cst_104 {dimension_numbers = #tpu.dot_dimension_numbers<[1], [0], [0], [1], [0, 0, 1, 1], [], []>} : vector<48x16xbf16>, vector<16x128xbf16>, vector<48x128xf32> -> vector<48x128xf32>
    %151 = arith.truncf %150 : vector<48x128xf32> to vector<48x128xbf16>
    %152 = vector.extract_strided_slice %151 {offsets = [0, 0], sizes = [16, 128], strides = [1, 1]} : vector<48x128xbf16> to vector<16x128xbf16>
    %153 = vector.extract_strided_slice %151 {offsets = [16, 0], sizes = [16, 128], strides = [1, 1]} : vector<48x128xbf16> to vector<16x128xbf16>
    %154 = vector.extract_strided_slice %151 {offsets = [32, 0], sizes = [16, 128], strides = [1, 1]} : vector<48x128xbf16> to vector<16x128xbf16>
    %155 = tpu.concatenate %152, %153, %154 in 1 : vector<16x128xbf16>, vector<16x128xbf16>, vector<16x128xbf16> -> vector<16x384xbf16>
    %c7_105 = arith.constant 7 : index
    %c0_106 = arith.constant 0 : index
    %c0_107 = arith.constant 0 : index
    %156 = vector.load %arg5[%c7_105, %c0_106, %c0_107] : memref<10x384x128xbf16, #tpu.memory_space<vmem>>, vector<1x384x128xbf16>
    %157 = vector.shape_cast %156 : vector<1x384x128xbf16> to vector<384x128xbf16>
    %cst_108 = arith.constant dense<0.000000e+00> : vector<16x128xf32>
    %158 = tpu.matmul %155, %157, %cst_108 {dimension_numbers = #tpu.dot_dimension_numbers<[1], [0], [0], [1], [0, 0, 1, 1], [], []>} : vector<16x384xbf16>, vector<384x128xbf16>, vector<16x128xf32> -> vector<16x128xf32>
    %c7_109 = arith.constant 7 : index
    %c0_110 = arith.constant 0 : index
    %c0_111 = arith.constant 0 : index
    %159 = vector.load %arg6[%c7_109, %c0_110, %c0_111] : memref<10x1x128xf32, #tpu.memory_space<vmem>>, vector<1x1x128xf32>
    %160 = vector.shape_cast %159 : vector<1x1x128xf32> to vector<1x128xf32>
    %161 = vector.broadcast %160 : vector<1x128xf32> to vector<16x128xf32>
    %162 = arith.addf %158, %161 : vector<16x128xf32>
    %c3_112 = arith.constant 3 : index
    %c0_113 = arith.constant 0 : index
    %c0_114 = arith.constant 0 : index
    %163 = vector.load %arg7[%c3_112, %c0_113, %c0_114] : memref<5x16x16xbf16, #tpu.memory_space<vmem>>, vector<1x16x16xbf16>
    %164 = vector.shape_cast %163 : vector<1x16x16xbf16> to vector<16x16xbf16>
    %165 = arith.truncf %162 : vector<16x128xf32> to vector<16x128xbf16>
    %cst_115 = arith.constant dense<0.000000e+00> : vector<16x128xf32>
    %166 = tpu.matmul %164, %165, %cst_115 {dimension_numbers = #tpu.dot_dimension_numbers<[1], [0], [0], [1], [0, 0, 1, 1], [], []>} : vector<16x16xbf16>, vector<16x128xbf16>, vector<16x128xf32> -> vector<16x128xf32>
    %167 = arith.truncf %166 : vector<16x128xf32> to vector<16x128xbf16>
    %c3_116 = arith.constant 3 : index
    %c0_117 = arith.constant 0 : index
    %c0_118 = arith.constant 0 : index
    %168 = vector.load %arg8[%c3_116, %c0_117, %c0_118] : memref<5x128x128xbf16, #tpu.memory_space<vmem>>, vector<1x128x128xbf16>
    %169 = vector.shape_cast %168 : vector<1x128x128xbf16> to vector<128x128xbf16>
    %cst_119 = arith.constant dense<0.000000e+00> : vector<16x128xf32>
    %170 = tpu.matmul %167, %169, %cst_119 {dimension_numbers = #tpu.dot_dimension_numbers<[1], [0], [0], [1], [0, 0, 1, 1], [], []>} : vector<16x128xbf16>, vector<128x128xbf16>, vector<16x128xf32> -> vector<16x128xf32>
    %171 = arith.addf %20, %170 : vector<16x128xf32>
    %172 = arith.truncf %171 : vector<16x128xf32> to vector<16x128xbf16>
    %c8 = arith.constant 8 : index
    %c0_120 = arith.constant 0 : index
    %c0_121 = arith.constant 0 : index
    %173 = vector.load %arg4[%c8, %c0_120, %c0_121] : memref<10x48x16xbf16, #tpu.memory_space<vmem>>, vector<1x48x16xbf16>
    %174 = vector.shape_cast %173 : vector<1x48x16xbf16> to vector<48x16xbf16>
    %cst_122 = arith.constant dense<0.000000e+00> : vector<48x128xf32>
    %175 = tpu.matmul %174, %172, %cst_122 {dimension_numbers = #tpu.dot_dimension_numbers<[1], [0], [0], [1], [0, 0, 1, 1], [], []>} : vector<48x16xbf16>, vector<16x128xbf16>, vector<48x128xf32> -> vector<48x128xf32>
    %176 = arith.truncf %175 : vector<48x128xf32> to vector<48x128xbf16>
    %177 = vector.extract_strided_slice %176 {offsets = [0, 0], sizes = [16, 128], strides = [1, 1]} : vector<48x128xbf16> to vector<16x128xbf16>
    %178 = vector.extract_strided_slice %176 {offsets = [16, 0], sizes = [16, 128], strides = [1, 1]} : vector<48x128xbf16> to vector<16x128xbf16>
    %179 = vector.extract_strided_slice %176 {offsets = [32, 0], sizes = [16, 128], strides = [1, 1]} : vector<48x128xbf16> to vector<16x128xbf16>
    %180 = tpu.concatenate %177, %178, %179 in 1 : vector<16x128xbf16>, vector<16x128xbf16>, vector<16x128xbf16> -> vector<16x384xbf16>
    %c8_123 = arith.constant 8 : index
    %c0_124 = arith.constant 0 : index
    %c0_125 = arith.constant 0 : index
    %181 = vector.load %arg5[%c8_123, %c0_124, %c0_125] : memref<10x384x128xbf16, #tpu.memory_space<vmem>>, vector<1x384x128xbf16>
    %182 = vector.shape_cast %181 : vector<1x384x128xbf16> to vector<384x128xbf16>
    %cst_126 = arith.constant dense<0.000000e+00> : vector<16x128xf32>
    %183 = tpu.matmul %180, %182, %cst_126 {dimension_numbers = #tpu.dot_dimension_numbers<[1], [0], [0], [1], [0, 0, 1, 1], [], []>} : vector<16x384xbf16>, vector<384x128xbf16>, vector<16x128xf32> -> vector<16x128xf32>
    %c8_127 = arith.constant 8 : index
    %c0_128 = arith.constant 0 : index
    %c0_129 = arith.constant 0 : index
    %184 = vector.load %arg6[%c8_127, %c0_128, %c0_129] : memref<10x1x128xf32, #tpu.memory_space<vmem>>, vector<1x1x128xf32>
    %185 = vector.shape_cast %184 : vector<1x1x128xf32> to vector<1x128xf32>
    %186 = vector.broadcast %185 : vector<1x128xf32> to vector<16x128xf32>
    %187 = arith.addf %183, %186 : vector<16x128xf32>
    %c4_130 = arith.constant 4 : index
    %c0_131 = arith.constant 0 : index
    %c0_132 = arith.constant 0 : index
    %188 = vector.load %arg7[%c4_130, %c0_131, %c0_132] : memref<5x16x16xbf16, #tpu.memory_space<vmem>>, vector<1x16x16xbf16>
    %189 = vector.shape_cast %188 : vector<1x16x16xbf16> to vector<16x16xbf16>
    %190 = arith.truncf %187 : vector<16x128xf32> to vector<16x128xbf16>
    %cst_133 = arith.constant dense<0.000000e+00> : vector<16x128xf32>
    %191 = tpu.matmul %189, %190, %cst_133 {dimension_numbers = #tpu.dot_dimension_numbers<[1], [0], [0], [1], [0, 0, 1, 1], [], []>} : vector<16x16xbf16>, vector<16x128xbf16>, vector<16x128xf32> -> vector<16x128xf32>
    %192 = arith.truncf %191 : vector<16x128xf32> to vector<16x128xbf16>
    %c4_134 = arith.constant 4 : index
    %c0_135 = arith.constant 0 : index
    %c0_136 = arith.constant 0 : index
    %193 = vector.load %arg8[%c4_134, %c0_135, %c0_136] : memref<5x128x128xbf16, #tpu.memory_space<vmem>>, vector<1x128x128xbf16>
    %194 = vector.shape_cast %193 : vector<1x128x128xbf16> to vector<128x128xbf16>
    %cst_137 = arith.constant dense<0.000000e+00> : vector<16x128xf32>
    %195 = tpu.matmul %192, %194, %cst_137 {dimension_numbers = #tpu.dot_dimension_numbers<[1], [0], [0], [1], [0, 0, 1, 1], [], []>} : vector<16x128xbf16>, vector<128x128xbf16>, vector<16x128xf32> -> vector<16x128xf32>
    %196 = arith.addf %1, %195 : vector<16x128xf32>
    %cst_138 = arith.constant 0.000000e+00 : f32
    %197 = vector.broadcast %cst_138 : f32 to vector<16x128xf32>
    %198 = arith.maximumf %196, %197 : vector<16x128xf32>
    %199 = arith.truncf %198 : vector<16x128xf32> to vector<16x128xbf16>
    %c9 = arith.constant 9 : index
    %c0_139 = arith.constant 0 : index
    %c0_140 = arith.constant 0 : index
    %200 = vector.load %arg4[%c9, %c0_139, %c0_140] : memref<10x48x16xbf16, #tpu.memory_space<vmem>>, vector<1x48x16xbf16>
    %201 = vector.shape_cast %200 : vector<1x48x16xbf16> to vector<48x16xbf16>
    %cst_141 = arith.constant dense<0.000000e+00> : vector<48x128xf32>
    %202 = tpu.matmul %201, %199, %cst_141 {dimension_numbers = #tpu.dot_dimension_numbers<[1], [0], [0], [1], [0, 0, 1, 1], [], []>} : vector<48x16xbf16>, vector<16x128xbf16>, vector<48x128xf32> -> vector<48x128xf32>
    %203 = arith.truncf %202 : vector<48x128xf32> to vector<48x128xbf16>
    %204 = vector.extract_strided_slice %203 {offsets = [0, 0], sizes = [16, 128], strides = [1, 1]} : vector<48x128xbf16> to vector<16x128xbf16>
    %205 = vector.extract_strided_slice %203 {offsets = [16, 0], sizes = [16, 128], strides = [1, 1]} : vector<48x128xbf16> to vector<16x128xbf16>
    %206 = vector.extract_strided_slice %203 {offsets = [32, 0], sizes = [16, 128], strides = [1, 1]} : vector<48x128xbf16> to vector<16x128xbf16>
    %207 = tpu.concatenate %204, %205, %206 in 1 : vector<16x128xbf16>, vector<16x128xbf16>, vector<16x128xbf16> -> vector<16x384xbf16>
    %c9_142 = arith.constant 9 : index
    %c0_143 = arith.constant 0 : index
    %c0_144 = arith.constant 0 : index
    %208 = vector.load %arg5[%c9_142, %c0_143, %c0_144] : memref<10x384x128xbf16, #tpu.memory_space<vmem>>, vector<1x384x128xbf16>
    %209 = vector.shape_cast %208 : vector<1x384x128xbf16> to vector<384x128xbf16>
    %cst_145 = arith.constant dense<0.000000e+00> : vector<16x128xf32>
    %210 = tpu.matmul %207, %209, %cst_145 {dimension_numbers = #tpu.dot_dimension_numbers<[1], [0], [0], [1], [0, 0, 1, 1], [], []>} : vector<16x384xbf16>, vector<384x128xbf16>, vector<16x128xf32> -> vector<16x128xf32>
    %c9_146 = arith.constant 9 : index
    %c0_147 = arith.constant 0 : index
    %c0_148 = arith.constant 0 : index
    %211 = vector.load %arg6[%c9_146, %c0_147, %c0_148] : memref<10x1x128xf32, #tpu.memory_space<vmem>>, vector<1x1x128xf32>
    %212 = vector.shape_cast %211 : vector<1x1x128xf32> to vector<1x128xf32>
    %213 = vector.broadcast %212 : vector<1x128xf32> to vector<16x128xf32>
    %214 = arith.addf %210, %213 : vector<16x128xf32>
    %c0_149 = arith.constant 0 : index
    %c0_150 = arith.constant 0 : index
    %c0_151 = arith.constant 0 : index
    %215 = vector.load %arg9[%c0_149, %c0_150, %c0_151] : memref<1x16x128xf32, #tpu.memory_space<vmem>>, vector<1x16x128xf32>
    %216 = vector.shape_cast %215 : vector<1x16x128xf32> to vector<16x128xf32>
    %217 = vector.shape_cast %214 : vector<16x128xf32> to vector<1x16x128xf32>
    tpu.vector_store %arg9[%c0_149, %c0_150, %c0_151], %217 {strides = array<i32>} : memref<1x16x128xf32, #tpu.memory_space<vmem>>, vector<1x16x128xf32>,
    return
  }
  func.func @transform_0(%arg0: i32) -> (i32, i32, i32) {
    %c0_i32 = arith.constant 0 : i32
    %c0_i32_0 = arith.constant 0 : i32
    %c0_i32_1 = arith.constant 0 : i32
    return %arg0, %c0_i32, %c0_i32_0 : i32, i32, i32
  }
  func.func @transform_1(%arg0: i32) -> (i32, i32, i32) {
    %c0_i32 = arith.constant 0 : i32
    %c0_i32_0 = arith.constant 0 : i32
    %c0_i32_1 = arith.constant 0 : i32
    return %arg0, %c0_i32, %c0_i32_0 : i32, i32, i32
  }
  func.func @transform_2(%arg0: i32) -> (i32, i32, i32) {
    %c0_i32 = arith.constant 0 : i32
    %c0_i32_0 = arith.constant 0 : i32
    %c0_i32_1 = arith.constant 0 : i32
    return %arg0, %c0_i32, %c0_i32_0 : i32, i32, i32
  }
  func.func @transform_3(%arg0: i32) -> (i32, i32, i32) {
    %c0_i32 = arith.constant 0 : i32
    %c0_i32_0 = arith.constant 0 : i32
    %c0_i32_1 = arith.constant 0 : i32
    %c0_i32_2 = arith.constant 0 : i32
    return %c0_i32, %c0_i32_0, %c0_i32_1 : i32, i32, i32
  }
  func.func @transform_4(%arg0: i32) -> (i32, i32, i32) {
    %c0_i32 = arith.constant 0 : i32
    %c0_i32_0 = arith.constant 0 : i32
    %c0_i32_1 = arith.constant 0 : i32
    %c0_i32_2 = arith.constant 0 : i32
    return %c0_i32, %c0_i32_0, %c0_i32_1 : i32, i32, i32
  }
  func.func @transform_5(%arg0: i32) -> (i32, i32, i32) {
    %c0_i32 = arith.constant 0 : i32
    %c0_i32_0 = arith.constant 0 : i32
    %c0_i32_1 = arith.constant 0 : i32
    %c0_i32_2 = arith.constant 0 : i32
    return %c0_i32, %c0_i32_0, %c0_i32_1 : i32, i32, i32
  }
  func.func @transform_6(%arg0: i32) -> (i32, i32, i32) {
    %c0_i32 = arith.constant 0 : i32
    %c0_i32_0 = arith.constant 0 : i32
    %c0_i32_1 = arith.constant 0 : i32
    %c0_i32_2 = arith.constant 0 : i32
    return %c0_i32, %c0_i32_0, %c0_i32_1 : i32, i32, i32
  }
  func.func @transform_7(%arg0: i32) -> (i32, i32, i32) {
    %c0_i32 = arith.constant 0 : i32
    %c0_i32_0 = arith.constant 0 : i32
    %c0_i32_1 = arith.constant 0 : i32
    %c0_i32_2 = arith.constant 0 : i32
    return %c0_i32, %c0_i32_0, %c0_i32_1 : i32, i32, i32
  }
  func.func @transform_8(%arg0: i32) -> (i32, i32, i32) {
    %c0_i32 = arith.constant 0 : i32
    %c0_i32_0 = arith.constant 0 : i32
    %c0_i32_1 = arith.constant 0 : i32
    return %arg0, %c0_i32, %c0_i32_0 : i32, i32, i32
  }
}

</mosaic_0001>

<llo_original>
// kernel: usrm5_2_forward.1
$region0: #{usrm5_2_forward.1}
  #allocation0 [shape = 'u32[]', space=smem, size = 0x4, offset = 0x4, fixed_abs, tag = 'smem constant byte address 0x4 - core index']
  #allocation1 [shape = 'u32[72,128]{1,0:T(1,128)}', space=vmem, size = 0x9000, scoped, tag = 'internal scratch']
  %s0 = inlined_call_operand.vmem [shape: f32[2,16,128], index: 0, kind: input, shape index: {}]
  %s1 = inlined_call_operand.vmem [shape: f32[2,16,128], index: 1, kind: input, shape index: {}]
  %s2 = inlined_call_operand.vmem [shape: f32[2,16,128], index: 2, kind: input, shape index: {}]
  %s3 = inlined_call_operand.vmem [shape: bf16[10,48,16], index: 3, kind: input, shape index: {}]
  %s4 = inlined_call_operand.vmem [shape: bf16[10,384,128], index: 4, kind: input, shape index: {}]
  %s5 = inlined_call_operand.vmem [shape: f32[10,1,128], index: 5, kind: input, shape index: {}]
  %s6 = inlined_call_operand.vmem [shape: bf16[5,16,16], index: 6, kind: input, shape index: {}]
  %s7 = inlined_call_operand.vmem [shape: bf16[5,128,128], index: 7, kind: input, shape index: {}]
  %s8 = inlined_call_operand.vmem [shape: f32[2,16,128], index: 8, kind: output, shape index: {}]
  %s9 = sld [smem:[#allocation0]]
  $region65: #{usrm5_2_forward.1} parent=0
    _
  %s11 = ssub.s32 1, %s9
  %s12 = scalar_select 0, %s11, %s9
  loop: start=0, step=1, limit=4
  $region2: #{usrm5_2_forward.1} parent=0 // loop_pre_header
    _
  $region3: #{usrm5_2_forward.1} parent=0 // loop_header
    %s14 = sphi 0, %s18
    %p15 = scmp.ge.s32.totalorder %s14, 4
    %s24 = sphi 0, %s26
    %s27 = sphi 0, %s24
    %s28 = sphi 0, %s27
    %s44 = sphi 0, %s28
    %s50 = sphi 0, %s52
    %s53 = sphi 0, %s50
    %s54 = sphi 0, %s53
    %s70 = sphi 0, %s54
    %s76 = sphi 0, %s78
    %s79 = sphi 0, %s76
    %s80 = sphi 0, %s79
    %s96 = sphi 0, %s80
    %s100 = sphi 0, %s100
    %s102 = sphi 0, %s100
    %s103 = sphi 0, %s102
    %s117 = sphi 0, %s103
    %s121 = sphi 0, %s121
    %s123 = sphi 0, %s121
    %s124 = sphi 0, %s123
    %s138 = sphi 0, %s124
    %s142 = sphi 0, %s142
    %s144 = sphi 0, %s142
    %s145 = sphi 0, %s144
    %s159 = sphi 0, %s145
    %s163 = sphi 0, %s163
    %s165 = sphi 0, %s163
    %s166 = sphi 0, %s165
    %s180 = sphi 0, %s166
    %s184 = sphi 0, %s184
    %s186 = sphi 0, %s184
    %s187 = sphi 0, %s186
    %s201 = sphi 0, %s187
    %s207 = sphi 0, %s209
    %s210 = sphi 0, %s207
    %s211 = sphi 0, %s210
    %s227 = sphi 0, %s211
  $region4: #{usrm5_2_forward.1} parent=0 // loop_header_branch
    %17 = sbr.rel (%p15) target = $region8
  $region5: #{usrm5_2_forward.1} parent=0 // loop_body
    %s19 = ssub.s32 %s14, 1
    %s20 = ssub.s32 %s14, 2
    %s21 = sadd.s32 %s14, 1
    %s22 = ssub.s32 %s14, %s21
    %p23 = scmp.eq.s32.totalorder %s22, 0
    %s25 = sadd.s32 %s24, 1
    %s26 = scalar_select %p23, %s24, %s25
    %p29 = pneg %p23
    %p30 = scmp.eq.s32.totalorder %s14, 1
    %p31 = por %p29, %p30
    %p32 = scmp.ne.s32.totalorder %s24, %s27
    %p33 = scmp.eq.s32.totalorder %s14, 0
    %p34 = por %p32, %p33
    %p35 = scmp.ne.s32.totalorder %s24, %s27
    %p36 = scmp.eq.s32.totalorder %s19, 1
    %p37 = por %p35, %p36
    %p38 = scmp.ne.s32.totalorder %s27, %s28
    %p39 = scmp.eq.s32.totalorder %s19, 0
    %p40 = por %p38, %p39
    %p41 = scmp.ne.s32.totalorder %s27, %s28
    %p42 = scmp.eq.s32.totalorder %s20, 1
    %p43 = por %p41, %p42
    %p45 = scmp.ne.s32.totalorder %s28, %s44
    %p46 = scmp.eq.s32.totalorder %s20, 0
    %p47 = por %p45, %p46
    %s48 = ssub.s32 %s14, %s21
    %p49 = scmp.eq.s32.totalorder %s48, 0
    %s51 = sadd.s32 %s50, 1
    %s52 = scalar_select %p49, %s50, %s51
    %p55 = pneg %p49
    %p56 = scmp.eq.s32.totalorder %s14, 1
    %p57 = por %p55, %p56
    %p58 = scmp.ne.s32.totalorder %s50, %s53
    %p59 = scmp.eq.s32.totalorder %s14, 0
    %p60 = por %p58, %p59
    %p61 = scmp.ne.s32.totalorder %s50, %s53
    %p62 = scmp.eq.s32.totalorder %s19, 1
    %p63 = por %p61, %p62
    %p64 = scmp.ne.s32.totalorder %s53, %s54
    %p65 = scmp.eq.s32.totalorder %s19, 0
    %p66 = por %p64, %p65
    %p67 = scmp.ne.s32.totalorder %s53, %s54
    %p68 = scmp.eq.s32.totalorder %s20, 1
    %p69 = por %p67, %p68
    %p71 = scmp.ne.s32.totalorder %s54, %s70
    %p72 = scmp.eq.s32.totalorder %s20, 0
    %p73 = por %p71, %p72
    %s74 = ssub.s32 %s14, %s21
    %p75 = scmp.eq.s32.totalorder %s74, 0
    %s77 = sadd.s32 %s76, 1
    %s78 = scalar_select %p75, %s76, %s77
    %p81 = pneg %p75
    %p82 = scmp.eq.s32.totalorder %s14, 1
    %p83 = por %p81, %p82
    %p84 = scmp.ne.s32.totalorder %s76, %s79
    %p85 = scmp.eq.s32.totalorder %s14, 0
    %p86 = por %p84, %p85
    %p87 = scmp.ne.s32.totalorder %s76, %s79
    %p88 = scmp.eq.s32.totalorder %s19, 1
    %p89 = por %p87, %p88
    %p90 = scmp.ne.s32.totalorder %s79, %s80
    %p91 = scmp.eq.s32.totalorder %s19, 0
    %p92 = por %p90, %p91
    %p93 = scmp.ne.s32.totalorder %s79, %s80
    %p94 = scmp.eq.s32.totalorder %s20, 1
    %p95 = por %p93, %p94
    %p97 = scmp.ne.s32.totalorder %s80, %s96
    %p98 = scmp.eq.s32.totalorder %s20, 0
    %p99 = por %p97, %p98
    %s101 = sadd.s32 %s100, 1
    %p104 = scmp.eq.s32.totalorder %s14, 1
    %p105 = scmp.ne.s32.totalorder %s100, %s102
    %p106 = scmp.eq.s32.totalorder %s14, 0
    %p107 = por %p105, %p106
    %p108 = scmp.ne.s32.totalorder %s100, %s102
    %p109 = scmp.eq.s32.totalorder %s19, 1
    %p110 = por %p108, %p109
    %p111 = scmp.ne.s32.totalorder %s102, %s103
    %p112 = scmp.eq.s32.totalorder %s19, 0
    %p113 = por %p111, %p112
    %p114 = scmp.ne.s32.totalorder %s102, %s103
    %p115 = scmp.eq.s32.totalorder %s20, 1
    %p116 = por %p114, %p115
    %p118 = scmp.ne.s32.totalorder %s103, %s117
    %p119 = scmp.eq.s32.totalorder %s20, 0
    %p120 = por %p118, %p119
    %s122 = sadd.s32 %s121, 1
    %p125 = scmp.eq.s32.totalorder %s14, 1
    %p126 = scmp.ne.s32.totalorder %s121, %s123
    %p127 = scmp.eq.s32.totalorder %s14, 0
    %p128 = por %p126, %p127
    %p129 = scmp.ne.s32.totalorder %s121, %s123
    %p130 = scmp.eq.s32.totalorder %s19, 1
    %p131 = por %p129, %p130
    %p132 = scmp.ne.s32.totalorder %s123, %s124
    %p133 = scmp.eq.s32.totalorder %s19, 0
    %p134 = por %p132, %p133
    %p135 = scmp.ne.s32.totalorder %s123, %s124
    %p136 = scmp.eq.s32.totalorder %s20, 1
    %p137 = por %p135, %p136
    %p139 = scmp.ne.s32.totalorder %s124, %s138
    %p140 = scmp.eq.s32.totalorder %s20, 0
    %p141 = por %p139, %p140
    %s143 = sadd.s32 %s142, 1
    %p146 = scmp.eq.s32.totalorder %s14, 1
    %p147 = scmp.ne.s32.totalorder %s142, %s144
    %p148 = scmp.eq.s32.totalorder %s14, 0
    %p149 = por %p147, %p148
    %p150 = scmp.ne.s32.totalorder %s142, %s144
    %p151 = scmp.eq.s32.totalorder %s19, 1
    %p152 = por %p150, %p151
    %p153 = scmp.ne.s32.totalorder %s144, %s145
    %p154 = scmp.eq.s32.totalorder %s19, 0
    %p155 = por %p153, %p154
    %p156 = scmp.ne.s32.totalorder %s144, %s145
    %p157 = scmp.eq.s32.totalorder %s20, 1
    %p158 = por %p156, %p157
    %p160 = scmp.ne.s32.totalorder %s145, %s159
    %p161 = scmp.eq.s32.totalorder %s20, 0
    %p162 = por %p160, %p161
    %s164 = sadd.s32 %s163, 1
    %p167 = scmp.eq.s32.totalorder %s14, 1
    %p168 = scmp.ne.s32.totalorder %s163, %s165
    %p169 = scmp.eq.s32.totalorder %s14, 0
    %p170 = por %p168, %p169
    %p171 = scmp.ne.s32.totalorder %s163, %s165
    %p172 = scmp.eq.s32.totalorder %s19, 1
    %p173 = por %p171, %p172
    %p174 = scmp.ne.s32.totalorder %s165, %s166
    %p175 = scmp.eq.s32.totalorder %s19, 0
    %p176 = por %p174, %p175
    %p177 = scmp.ne.s32.totalorder %s165, %s166
    %p178 = scmp.eq.s32.totalorder %s20, 1
    %p179 = por %p177, %p178
    %p181 = scmp.ne.s32.totalorder %s166, %s180
    %p182 = scmp.eq.s32.totalorder %s20, 0
    %p183 = por %p181, %p182
    %s185 = sadd.s32 %s184, 1
    %p188 = scmp.eq.s32.totalorder %s14, 1
    %p189 = scmp.ne.s32.totalorder %s184, %s186
    %p190 = scmp.eq.s32.totalorder %s14, 0
    %p191 = por %p189, %p190
    %p192 = scmp.ne.s32.totalorder %s184, %s186
    %p193 = scmp.eq.s32.totalorder %s19, 1
    %p194 = por %p192, %p193
    %p195 = scmp.ne.s32.totalorder %s186, %s187
    %p196 = scmp.eq.s32.totalorder %s19, 0
    %p197 = por %p195, %p196
    %p198 = scmp.ne.s32.totalorder %s186, %s187
    %p199 = scmp.eq.s32.totalorder %s20, 1
    %p200 = por %p198, %p199
    %p202 = scmp.ne.s32.totalorder %s187, %s201
    %p203 = scmp.eq.s32.totalorder %s20, 0
    %p204 = por %p202, %p203
    %s205 = ssub.s32 %s14, %s21
    %p206 = scmp.eq.s32.totalorder %s205, 0
    %s208 = sadd.s32 %s207, 1
    %s209 = scalar_select %p206, %s207, %s208
    %p212 = pneg %p206
    %p213 = scmp.eq.s32.totalorder %s14, 1
    %p214 = por %p212, %p213
    %p215 = scmp.ne.s32.totalorder %s207, %s210
    %p216 = scmp.eq.s32.totalorder %s14, 0
    %p217 = por %p215, %p216
    %p218 = scmp.ne.s32.totalorder %s207, %s210
    %p219 = scmp.eq.s32.totalorder %s19, 1
    %p220 = por %p218, %p219
    %p221 = scmp.ne.s32.totalorder %s210, %s211
    %p222 = scmp.eq.s32.totalorder %s19, 0
    %p223 = por %p221, %p222
    %p224 = scmp.ne.s32.totalorder %s210, %s211
    %p225 = scmp.eq.s32.totalorder %s20, 1
    %p226 = por %p224, %p225
    %p228 = scmp.ne.s32.totalorder %s211, %s227
    %p229 = scmp.eq.s32.totalorder %s20, 0
    %p230 = por %p228, %p229
    %p231 = scmp.le.s32.totalorder 1, %s14
    %p232 = scmp.lt.s32.totalorder %s14, 3
    %p233 = pnand %p231, %p232
    %p234 = pneg %p233
    // Predicated region
    $region9: #{usrm5_2_forward.1} parent=5 // pred_check
      _
    $region10: #{usrm5_2_forward.1} parent=5 // pred_check_branch
      %236 = sbr.rel (%p233) target = $region12
    $region11: #{usrm5_2_forward.1} parent=5 // pred_region
      %s237 = ssub.s32 %s14, 1
      // Predicated region
      $region13: #{usrm5_2_forward.1} parent=11 // pred_check
        %p238 = pneg %p113
      $region14: #{usrm5_2_forward.1} parent=11 // pred_check_branch
        %240 = sbr.rel (%p238) target = $region16
      $region15: #{usrm5_2_forward.1} parent=11 // pred_region
        _
      $region16: #{usrm5_2_forward.1} parent=11 // pred_fallthru
        _
      // Predicated region
      $region17: #{usrm5_2_forward.1} parent=11 // pred_check
        %p241 = pneg %p134
      $region18: #{usrm5_2_forward.1} parent=11 // pred_check_branch
        %243 = sbr.rel (%p241) target = $region20
      $region19: #{usrm5_2_forward.1} parent=11 // pred_region
        _
      $region20: #{usrm5_2_forward.1} parent=11 // pred_fallthru
        _
      // Predicated region
      $region21: #{usrm5_2_forward.1} parent=11 // pred_check
        %p244 = pneg %p155
      $region22: #{usrm5_2_forward.1} parent=11 // pred_check_branch
        %246 = sbr.rel (%p244) target = $region24
      $region23: #{usrm5_2_forward.1} parent=11 // pred_region
        _
      $region24: #{usrm5_2_forward.1} parent=11 // pred_fallthru
        _
      // Predicated region
      $region25: #{usrm5_2_forward.1} parent=11 // pred_check
        %p247 = pneg %p176
      $region26: #{usrm5_2_forward.1} parent=11 // pred_check_branch
        %249 = sbr.rel (%p247) target = $region28
      $region27: #{usrm5_2_forward.1} parent=11 // pred_region
        _
      $region28: #{usrm5_2_forward.1} parent=11 // pred_fallthru
        _
      // Predicated region
      $region29: #{usrm5_2_forward.1} parent=11 // pred_check
        %p250 = pneg %p197
      $region30: #{usrm5_2_forward.1} parent=11 // pred_check_branch
        %252 = sbr.rel (%p250) target = $region32
      $region31: #{usrm5_2_forward.1} parent=11 // pred_region
        _
      $region32: #{usrm5_2_forward.1} parent=11 // pred_fallthru
        _
    $region12: #{usrm5_2_forward.1} parent=5 // pred_fallthru
      _
    %p253 = scmp.lt.s32.totalorder %s14, 2
    // Predicated region
    $region33: #{usrm5_2_forward.1} parent=5 // pred_check
      %p254 = pneg %p253
    $region34: #{usrm5_2_forward.1} parent=5 // pred_check_branch
      %256 = sbr.rel (%p254) target = $region36
    $region35: #{usrm5_2_forward.1} parent=5 // pred_region
      // Predicated region
      $region37: #{usrm5_2_forward.1} parent=35 // pred_check
        %p257 = pneg %p34
      $region38: #{usrm5_2_forward.1} parent=35 // pred_check_branch
        %259 = sbr.rel (%p257) target = $region40
      $region39: #{usrm5_2_forward.1} parent=35 // pred_region
        %p260 = scmp.lt.s32.totalorder %s14, 1
        %s261 = scalar_select %p260, %s14, 1
        %s262 = smul.addr %s261, 2
        %s263 = smul.addr %s262, 8
        %s264 = scalar_lea.vmem %s0, %s263
      $region40: #{usrm5_2_forward.1} parent=35 // pred_fallthru
        _
      // Predicated region
      $region41: #{usrm5_2_forward.1} parent=35 // pred_check
        %p265 = pneg %p60
      $region42: #{usrm5_2_forward.1} parent=35 // pred_check_branch
        %267 = sbr.rel (%p265) target = $region44
      $region43: #{usrm5_2_forward.1} parent=35 // pred_region
        %p268 = scmp.lt.s32.totalorder %s14, 1
        %s269 = scalar_select %p268, %s14, 1
        %s270 = smul.addr %s269, 2
        %s271 = smul.addr %s270, 8
        %s272 = scalar_lea.vmem %s1, %s271
      $region44: #{usrm5_2_forward.1} parent=35 // pred_fallthru
        _
      // Predicated region
      $region45: #{usrm5_2_forward.1} parent=35 // pred_check
        %p273 = pneg %p86
      $region46: #{usrm5_2_forward.1} parent=35 // pred_check_branch
        %275 = sbr.rel (%p273) target = $region48
      $region47: #{usrm5_2_forward.1} parent=35 // pred_region
        %p276 = scmp.lt.s32.totalorder %s14, 1
        %s277 = scalar_select %p276, %s14, 1
        %s278 = smul.addr %s277, 2
        %s279 = smul.addr %s278, 8
        %s280 = scalar_lea.vmem %s2, %s279
      $region48: #{usrm5_2_forward.1} parent=35 // pred_fallthru
        _
    $region36: #{usrm5_2_forward.1} parent=5 // pred_fallthru
      _
    %p281 = scmp.le.s32.totalorder 1, %s14
    %p282 = scmp.lt.s32.totalorder %s14, 3
    %p283 = pnand %p281, %p282
    %p284 = pneg %p283
    // Predicated region
    $region49: #{usrm5_2_forward.1} parent=5 // pred_check
      _
    $region50: #{usrm5_2_forward.1} parent=5 // pred_check_branch
      %286 = sbr.rel (%p283) target = $region52
    $region51: #{usrm5_2_forward.1} parent=5 // pred_region
      %s287 = ssub.s32 %s14, 1
      %p288 = scmp.lt.s32.totalorder %s19, 1
      %s289 = scalar_select %p288, %s19, 1
      %s290 = smul.addr %s289, 2
      %s291 = smul.addr %s290, 8
      %s292 = scalar_lea.vmem %s0, %s291
      %p293 = pneg %p40
      %p294 = pneg %p37
      %p295 = scmp.lt.s32.totalorder %s19, 1
      %s296 = scalar_select %p295, %s19, 1
      %s297 = smul.addr %s296, 2
      %s298 = smul.addr %s297, 8
      %s299 = scalar_lea.vmem %s1, %s298
      %p300 = pneg %p66
      %p301 = pneg %p63
      %p302 = scmp.lt.s32.totalorder %s19, 1
      %s303 = scalar_select %p302, %s19, 1
      %s304 = smul.addr %s303, 2
      %s305 = smul.addr %s304, 8
      %s306 = scalar_lea.vmem %s2, %s305
      %p307 = pneg %p92
      %p308 = pneg %p89
      %p309 = pneg %p113
      %p310 = pneg %p110
      %p311 = pneg %p134
      %p312 = pneg %p131
      %p313 = pneg %p155
      %p314 = pneg %p152
      %p315 = pneg %p176
      %p316 = pneg %p173
      %p317 = pneg %p197
      %p318 = pneg %p194
      %p319 = pneg %p223
      %p320 = pneg %p220
      %p321 = scmp.lt.s32.totalorder %s19, 1
      %s322 = scalar_select %p321, %s19, 1
      %s323 = smul.addr %s322, 2
      %s324 = smul.addr %s323, 8
      %s325 = scalar_lea.vmem %s8, %s324
      %p326 = scmp.lt.s32.totalorder %s19, 1
      %s327 = scalar_select %p326, %s19, 1
      %s328 = smul.addr %s327, 2
      %s329 = smul.addr %s328, 8
      %s330 = scalar_lea.vmem %s0, %s329
      %p331 = scmp.lt.s32.totalorder %s19, 1
      %s332 = scalar_select %p331, %s19, 1
      %s333 = smul.addr %s332, 2
      %s334 = smul.addr %s333, 8
      %s335 = scalar_lea.vmem %s1, %s334
      %p336 = scmp.lt.s32.totalorder %s19, 1
      %s337 = scalar_select %p336, %s19, 1
      %s338 = smul.addr %s337, 2
      %s339 = smul.addr %s338, 8
      %s340 = scalar_lea.vmem %s2, %s339
      %p341 = scmp.lt.s32.totalorder %s19, 1
      %s342 = scalar_select %p341, %s19, 1
      %s343 = smul.addr %s342, 2
      %s344 = smul.addr %s343, 8
      %s345 = scalar_lea.vmem %s8, %s344
      %v347 = vld [vmem:[%s330] sm:$0xff]
      %v348 = vld [vmem:[%s330 + $0x8] sm:$0xff]
      %v349 = vpack.c.bf16 %v348, %v347
      %v350 = vld [vmem:[%s3] sm:$0xf]
      %v351 = vld [vmem:[%s3 + $0x4] sm:$0xf]
      %v352 = vld [vmem:[%s3 + $0x8] sm:$0xf]
      %v353 = vld [vmem:[%s3 + $0xc] sm:$0xf]
      %v354 = vld [vmem:[%s3 + $0x10] sm:$0xf]
      %v355 = vld [vmem:[%s3 + $0x14] sm:$0xf]
      %v362 = vunpack.c.l.b16 %v350
      %v363 = vunpack.c.l.b16 %v351
      %v364 = vunpack.c.l.b16 %v352
      %v365 = vunpack.c.l.b16 %v353
      %v366 = vunpack.c.l.b16 %v354
      %v367 = vunpack.c.l.b16 %v355
      %v368 = vpack.c.b16 %v363, %v362
      %v369 = vpack.c.b16 %v365, %v364
      %v370 = vpack.c.b16 %v367, %v366
      %vm371 = vcmask 130048
      %v373 = vsel %vm371, %v368, 0
      %v376 = vsel %vm371, %v369, 0
      %v379 = vsel %vm371, %v370, 0
      %381 = vmatpush.bf16.msra.mxu0 0
      %382 = vmatpush.bf16.msra.mxu0 0
      %383 = vmatpush.bf16.msra.mxu0 0
      %384 = vmatpush.bf16.msra.mxu0 0
      %385 = vmatpush.bf16.msra.mxu0 0
      %386 = vmatpush.bf16.msra.mxu0 0
      %387 = vmatpush.bf16.msra.mxu0 0
      %388 = vmatpush.bf16.msra.mxu0 %v349
      %389 = vmatmul.bf16.gmra.mxu0 %v373
      %v390 = vpop.f32.mrf.mxu0
      %v391 = vadd.f32 0.0, %v390
      %v392 = vpop.f32.mrf.mxu0
      %v393 = vadd.f32 0.0, %v392
      %394 = vmatmul.bf16.gmra.mxu0 %v376
      %v395 = vpop.f32.mrf.mxu0
      %v396 = vadd.f32 0.0, %v395
      %v397 = vpop.f32.mrf.mxu0
      %v398 = vadd.f32 0.0, %v397
      %399 = vmatmul.bf16.gmra.mxu0 %v379
      %v400 = vpop.f32.mrf.mxu0
      %v401 = vadd.f32 0.0, %v400
      %v402 = vpop.f32.mrf.mxu0
      %v403 = vadd.f32 0.0, %v402
      %404 = vdwg.mxu0
      %v405 = vpack.c.bf16 %v391, %v391
      %v406 = vpack.c.bf16 %v393, %v393
      %v407 = vpack.c.bf16 %v396, %v396
      %v408 = vpack.c.bf16 %v398, %v398
      %v409 = vpack.c.bf16 %v401, %v401
      %v410 = vpack.c.bf16 %v403, %v403
      %v413 = vunpack.c.l.b16 %v405
      %v414 = vunpack.c.l.b16 %v406
      %v415 = vpack.c.b16 %v414, %v413
      %v419 = vunpack.c.l.b16 %v407
      %v420 = vunpack.c.l.b16 %v408
      %v421 = vpack.c.b16 %v420, %v419
      %v425 = vunpack.c.l.b16 %v409
      %v426 = vunpack.c.l.b16 %v410
      %v427 = vpack.c.b16 %v426, %v425
      %v429 = vld [vmem:[%s4] sm:$0xf]
      %v430 = vld [vmem:[%s4 + $0x4] sm:$0xf]
      %v431 = vld [vmem:[%s4 + $0x8] sm:$0xf]
      %v432 = vld [vmem:[%s4 + $0xc] sm:$0xf]
      %v433 = vld [vmem:[%s4 + $0x10] sm:$0xf]
      %v434 = vld [vmem:[%s4 + $0x14] sm:$0xf]
      %v435 = vld [vmem:[%s4 + $0x18] sm:$0xf]
      %v436 = vld [vmem:[%s4 + $0x1c] sm:$0xf]
      %v437 = vld [vmem:[%s4 + $0x20] sm:$0xf]
      %v438 = vld [vmem:[%s4 + $0x24] sm:$0xf]
      %v439 = vld [vmem:[%s4 + $0x28] sm:$0xf]
      %v440 = vld [vmem:[%s4 + $0x2c] sm:$0xf]
      %v441 = vld [vmem:[%s4 + $0x30] sm:$0xf]
      %v442 = vld [vmem:[%s4 + $0x34] sm:$0xf]
      %v443 = vld [vmem:[%s4 + $0x38] sm:$0xf]
      %v444 = vld [vmem:[%s4 + $0x3c] sm:$0xf]
      %v445 = vld [vmem:[%s4 + $0x40] sm:$0xf]
      %v446 = vld [vmem:[%s4 + $0x44] sm:$0xf]
      %v447 = vld [vmem:[%s4 + $0x48] sm:$0xf]
      %v448 = vld [vmem:[%s4 + $0x4c] sm:$0xf]
      %v449 = vld [vmem:[%s4 + $0x50] sm:$0xf]
      %v450 = vld [vmem:[%s4 + $0x54] sm:$0xf]
      %v451 = vld [vmem:[%s4 + $0x58] sm:$0xf]
      %v452 = vld [vmem:[%s4 + $0x5c] sm:$0xf]
      %v453 = vld [vmem:[%s4 + $0x60] sm:$0xf]
      %v454 = vld [vmem:[%s4 + $0x64] sm:$0xf]
      %v455 = vld [vmem:[%s4 + $0x68] sm:$0xf]
      %v456 = vld [vmem:[%s4 + $0x6c] sm:$0xf]
      %v457 = vld [vmem:[%s4 + $0x70] sm:$0xf]
      %v458 = vld [vmem:[%s4 + $0x74] sm:$0xf]
      %v459 = vld [vmem:[%s4 + $0x78] sm:$0xf]
      %v460 = vld [vmem:[%s4 + $0x7c] sm:$0xf]
      %v461 = vld [vmem:[%s4 + $0x80] sm:$0xf]
      %v462 = vld [vmem:[%s4 + $0x84] sm:$0xf]
      %v463 = vld [vmem:[%s4 + $0x88] sm:$0xf]
      %v464 = vld [vmem:[%s4 + $0x8c] sm:$0xf]
      %v465 = vld [vmem:[%s4 + $0x90] sm:$0xf]
      %v466 = vld [vmem:[%s4 + $0x94] sm:$0xf]
      %v467 = vld [vmem:[%s4 + $0x98] sm:$0xf]
      %v468 = vld [vmem:[%s4 + $0x9c] sm:$0xf]
      %v469 = vld [vmem:[%s4 + $0xa0] sm:$0xf]
      %v470 = vld [vmem:[%s4 + $0xa4] sm:$0xf]
      %v471 = vld [vmem:[%s4 + $0xa8] sm:$0xf]
      %v472 = vld [vmem:[%s4 + $0xac] sm:$0xf]
      %v473 = vld [vmem:[%s4 + $0xb0] sm:$0xf]
      %v474 = vld [vmem:[%s4 + $0xb4] sm:$0xf]
      %v475 = vld [vmem:[%s4 + $0xb8] sm:$0xf]
      %v476 = vld [vmem:[%s4 + $0xbc] sm:$0xf]
      %v477 = vld [vmem:[%s5] sm:$0x1]
      %v479 = vperm.slane %v477, 0
      %v529 = vunpack.c.l.b16 %v429
      %v530 = vunpack.c.l.b16 %v430
      %v531 = vunpack.c.l.b16 %v431
      %v532 = vunpack.c.l.b16 %v432
      %v533 = vunpack.c.l.b16 %v433
      %v534 = vunpack.c.l.b16 %v434
      %v535 = vunpack.c.l.b16 %v435
      %v536 = vunpack.c.l.b16 %v436
      %v537 = vunpack.c.l.b16 %v437
      %v538 = vunpack.c.l.b16 %v438
      %v539 = vunpack.c.l.b16 %v439
      %v540 = vunpack.c.l.b16 %v440
      %v541 = vunpack.c.l.b16 %v441
      %v542 = vunpack.c.l.b16 %v442
      %v543 = vunpack.c.l.b16 %v443
      %v544 = vunpack.c.l.b16 %v444
      %v545 = vunpack.c.l.b16 %v445
      %v546 = vunpack.c.l.b16 %v446
      %v547 = vunpack.c.l.b16 %v447
      %v548 = vunpack.c.l.b16 %v448
      %v549 = vunpack.c.l.b16 %v449
      %v550 = vunpack.c.l.b16 %v450
      %v551 = vunpack.c.l.b16 %v451
      %v552 = vunpack.c.l.b16 %v452
      %v553 = vunpack.c.l.b16 %v453
      %v554 = vunpack.c.l.b16 %v454
      %v555 = vunpack.c.l.b16 %v455
      %v556 = vunpack.c.l.b16 %v456
      %v557 = vunpack.c.l.b16 %v457
      %v558 = vunpack.c.l.b16 %v458
      %v559 = vunpack.c.l.b16 %v459
      %v560 = vunpack.c.l.b16 %v460
      %v561 = vunpack.c.l.b16 %v461
      %v562 = vunpack.c.l.b16 %v462
      %v563 = vunpack.c.l.b16 %v463
      %v564 = vunpack.c.l.b16 %v464
      %v565 = vunpack.c.l.b16 %v465
      %v566 = vunpack.c.l.b16 %v466
      %v567 = vunpack.c.l.b16 %v467
      %v568 = vunpack.c.l.b16 %v468
      %v569 = vunpack.c.l.b16 %v469
      %v570 = vunpack.c.l.b16 %v470
      %v571 = vunpack.c.l.b16 %v471
      %v572 = vunpack.c.l.b16 %v472
      %v573 = vunpack.c.l.b16 %v473
      %v574 = vunpack.c.l.b16 %v474
      %v575 = vunpack.c.l.b16 %v475
      %v576 = vunpack.c.l.b16 %v476
      %v577 = vpack.c.b16 %v530, %v529
      %v578 = vpack.c.b16 %v532, %v531
      %v579 = vpack.c.b16 %v534, %v533
      %v580 = vpack.c.b16 %v536, %v535
      %v581 = vpack.c.b16 %v538, %v537
      %v582 = vpack.c.b16 %v540, %v539
      %v583 = vpack.c.b16 %v542, %v541
      %v584 = vpack.c.b16 %v544, %v543
      %v585 = vpack.c.b16 %v546, %v545
      %v586 = vpack.c.b16 %v548, %v547
      %v587 = vpack.c.b16 %v550, %v549
      %v588 = vpack.c.b16 %v552, %v551
      %v589 = vpack.c.b16 %v554, %v553
      %v590 = vpack.c.b16 %v556, %v555
      %v591 = vpack.c.b16 %v558, %v557
      %v592 = vpack.c.b16 %v560, %v559
      %v593 = vpack.c.b16 %v562, %v561
      %v594 = vpack.c.b16 %v564, %v563
      %v595 = vpack.c.b16 %v566, %v565
      %v596 = vpack.c.b16 %v568, %v567
      %v597 = vpack.c.b16 %v570, %v569
      %v598 = vpack.c.b16 %v572, %v571
      %v599 = vpack.c.b16 %v574, %v573
      %v600 = vpack.c.b16 %v576, %v575
      %625 = vmatpush.bf16.msra.mxu0 %v584
      %626 = vmatpush.bf16.msra.mxu0 %v583
      %627 = vmatpush.bf16.msra.mxu0 %v582
      %628 = vmatpush.bf16.msra.mxu0 %v581
      %629 = vmatpush.bf16.msra.mxu0 %v580
      %630 = vmatpush.bf16.msra.mxu0 %v579
      %631 = vmatpush.bf16.msra.mxu0 %v578
      %632 = vmatpush.bf16.msra.mxu0 %v577
      %633 = vmatmul.bf16.gmra.mxu0 %v415
      %v634 = vpop.f32.mrf.mxu0
      %v635 = vadd.f32 %v479, %v634
      %v636 = vpop.f32.mrf.mxu0
      %v637 = vadd.f32 %v479, %v636
      %638 = vdwg.mxu0
      %639 = vmatpush.bf16.msra.mxu0 %v592
      %640 = vmatpush.bf16.msra.mxu0 %v591
      %641 = vmatpush.bf16.msra.mxu0 %v590
      %642 = vmatpush.bf16.msra.mxu0 %v589
      %643 = vmatpush.bf16.msra.mxu0 %v588
      %644 = vmatpush.bf16.msra.mxu0 %v587
      %645 = vmatpush.bf16.msra.mxu0 %v586
      %646 = vmatpush.bf16.msra.mxu0 %v585
      %647 = vmatmul.bf16.gmra.mxu0 %v421
      %v648 = vpop.f32.mrf.mxu0
      %v649 = vadd.f32 %v635, %v648
      %v650 = vpop.f32.mrf.mxu0
      %v651 = vadd.f32 %v637, %v650
      %652 = vdwg.mxu0
      %653 = vmatpush.bf16.msra.mxu0 %v600
      %654 = vmatpush.bf16.msra.mxu0 %v599
      %655 = vmatpush.bf16.msra.mxu0 %v598
      %656 = vmatpush.bf16.msra.mxu0 %v597
      %657 = vmatpush.bf16.msra.mxu0 %v596
      %658 = vmatpush.bf16.msra.mxu0 %v595
      %659 = vmatpush.bf16.msra.mxu0 %v594
      %660 = vmatpush.bf16.msra.mxu0 %v593
      %661 = vmatmul.bf16.gmra.mxu0 %v427
      %v662 = vpop.f32.mrf.mxu0
      %v663 = vadd.f32 %v649, %v662
      %v664 = vpop.f32.mrf.mxu0
      %v665 = vadd.f32 %v651, %v664
      %666 = vdwg.mxu0
      %v667 = vld [vmem:[%s335] sm:$0xff]
      %v668 = vld [vmem:[%s335 + $0x8] sm:$0xff]
      %v669 = vadd.f32 %v663, %v667
      %v670 = vadd.f32 %v665, %v668
      %v671 = vpack.c.bf16 %v670, %v669
      %s672 = scalar_lea.vmem %s3, 24
      %v673 = vld [vmem:[%s672] sm:$0xf]
      %v674 = vld [vmem:[%s672 + $0x4] sm:$0xf]
      %v675 = vld [vmem:[%s672 + $0x8] sm:$0xf]
      %v676 = vld [vmem:[%s672 + $0xc] sm:$0xf]
      %v677 = vld [vmem:[%s672 + $0x10] sm:$0xf]
      %v678 = vld [vmem:[%s672 + $0x14] sm:$0xf]
      %v685 = vunpack.c.l.b16 %v673
      %v686 = vunpack.c.l.b16 %v674
      %v687 = vunpack.c.l.b16 %v675
      %v688 = vunpack.c.l.b16 %v676
      %v689 = vunpack.c.l.b16 %v677
      %v690 = vunpack.c.l.b16 %v678
      %v691 = vpack.c.b16 %v686, %v685
      %v692 = vpack.c.b16 %v688, %v687
      %v693 = vpack.c.b16 %v690, %v689
      %v695 = vsel %vm371, %v691, 0
      %v698 = vsel %vm371, %v692, 0
      %v701 = vsel %vm371, %v693, 0
      %703 = vmatpush.bf16.msra.mxu0 0
      %704 = vmatpush.bf16.msra.mxu0 0
      %705 = vmatpush.bf16.msra.mxu0 0
      %706 = vmatpush.bf16.msra.mxu0 0
      %707 = vmatpush.bf16.msra.mxu0 0
      %708 = vmatpush.bf16.msra.mxu0 0
      %709 = vmatpush.bf16.msra.mxu0 0
      %710 = vmatpush.bf16.msra.mxu0 %v671
      %711 = vmatmul.bf16.gmra.mxu0 %v695
      %v712 = vpop.f32.mrf.mxu0
      %v713 = vadd.f32 0.0, %v712
      %v714 = vpop.f32.mrf.mxu0
      %v715 = vadd.f32 0.0, %v714
      %716 = vmatmul.bf16.gmra.mxu0 %v698
      %v717 = vpop.f32.mrf.mxu0
      %v718 = vadd.f32 0.0, %v717
      %v719 = vpop.f32.mrf.mxu0
      %v720 = vadd.f32 0.0, %v719
      %721 = vmatmul.bf16.gmra.mxu0 %v701
      %v722 = vpop.f32.mrf.mxu0
      %v723 = vadd.f32 0.0, %v722
      %v724 = vpop.f32.mrf.mxu0
      %v725 = vadd.f32 0.0, %v724
      %726 = vdwg.mxu0
      %v727 = vpack.c.bf16 %v713, %v713
      %v728 = vpack.c.bf16 %v715, %v715
      %v729 = vpack.c.bf16 %v718, %v718
      %v730 = vpack.c.bf16 %v720, %v720
      %v731 = vpack.c.bf16 %v723, %v723
      %v732 = vpack.c.bf16 %v725, %v725
      %v735 = vunpack.c.l.b16 %v727
      %v736 = vunpack.c.l.b16 %v728
      %v737 = vpack.c.b16 %v736, %v735
      %v741 = vunpack.c.l.b16 %v729
      %v742 = vunpack.c.l.b16 %v730
      %v743 = vpack.c.b16 %v742, %v741
      %v747 = vunpack.c.l.b16 %v731
      %v748 = vunpack.c.l.b16 %v732
      %v749 = vpack.c.b16 %v748, %v747
      %s751 = scalar_lea.vmem %s4, 192
      %v752 = vld [vmem:[%s751] sm:$0xf]
      %v753 = vld [vmem:[%s751 + $0x4] sm:$0xf]
      %v754 = vld [vmem:[%s751 + $0x8] sm:$0xf]
      %v755 = vld [vmem:[%s751 + $0xc] sm:$0xf]
      %v756 = vld [vmem:[%s751 + $0x10] sm:$0xf]
      %v757 = vld [vmem:[%s751 + $0x14] sm:$0xf]
      %v758 = vld [vmem:[%s751 + $0x18] sm:$0xf]
      %v759 = vld [vmem:[%s751 + $0x1c] sm:$0xf]
      %v760 = vld [vmem:[%s751 + $0x20] sm:$0xf]
      %v761 = vld [vmem:[%s751 + $0x24] sm:$0xf]
      %v762 = vld [vmem:[%s751 + $0x28] sm:$0xf]
      %v763 = vld [vmem:[%s751 + $0x2c] sm:$0xf]
      %v764 = vld [vmem:[%s751 + $0x30] sm:$0xf]
      %v765 = vld [vmem:[%s751 + $0x34] sm:$0xf]
      %v766 = vld [vmem:[%s751 + $0x38] sm:$0xf]
      %v767 = vld [vmem:[%s751 + $0x3c] sm:$0xf]
      %v768 = vld [vmem:[%s751 + $0x40] sm:$0xf]
      %v769 = vld [vmem:[%s751 + $0x44] sm:$0xf]
      %v770 = vld [vmem:[%s751 + $0x48] sm:$0xf]
      %v771 = vld [vmem:[%s751 + $0x4c] sm:$0xf]
      %v772 = vld [vmem:[%s751 + $0x50] sm:$0xf]
      %v773 = vld [vmem:[%s751 + $0x54] sm:$0xf]
      %v774 = vld [vmem:[%s751 + $0x58] sm:$0xf]
      %v775 = vld [vmem:[%s751 + $0x5c] sm:$0xf]
      %v776 = vld [vmem:[%s751 + $0x60] sm:$0xf]
      %v777 = vld [vmem:[%s751 + $0x64] sm:$0xf]
      %v778 = vld [vmem:[%s751 + $0x68] sm:$0xf]
      %v779 = vld [vmem:[%s751 + $0x6c] sm:$0xf]
      %v780 = vld [vmem:[%s751 + $0x70] sm:$0xf]
      %v781 = vld [vmem:[%s751 + $0x74] sm:$0xf]
      %v782 = vld [vmem:[%s751 + $0x78] sm:$0xf]
      %v783 = vld [vmem:[%s751 + $0x7c] sm:$0xf]
      %v784 = vld [vmem:[%s751 + $0x80] sm:$0xf]
      %v785 = vld [vmem:[%s751 + $0x84] sm:$0xf]
      %v786 = vld [vmem:[%s751 + $0x88] sm:$0xf]
      %v787 = vld [vmem:[%s751 + $0x8c] sm:$0xf]
      %v788 = vld [vmem:[%s751 + $0x90] sm:$0xf]
      %v789 = vld [vmem:[%s751 + $0x94] sm:$0xf]
      %v790 = vld [vmem:[%s751 + $0x98] sm:$0xf]
      %v791 = vld [vmem:[%s751 + $0x9c] sm:$0xf]
      %v792 = vld [vmem:[%s751 + $0xa0] sm:$0xf]
      %v793 = vld [vmem:[%s751 + $0xa4] sm:$0xf]
      %v794 = vld [vmem:[%s751 + $0xa8] sm:$0xf]
      %v795 = vld [vmem:[%s751 + $0xac] sm:$0xf]
      %v796 = vld [vmem:[%s751 + $0xb0] sm:$0xf]
      %v797 = vld [vmem:[%s751 + $0xb4] sm:$0xf]
      %v798 = vld [vmem:[%s751 + $0xb8] sm:$0xf]
      %v799 = vld [vmem:[%s751 + $0xbc] sm:$0xf]
      %s800 = scalar_lea.vmem %s5, 1
      %v801 = vld [vmem:[%s800] sm:$0x1]
      %v803 = vperm.slane %v801, 0
      %v853 = vunpack.c.l.b16 %v752
      %v854 = vunpack.c.l.b16 %v753
      %v855 = vunpack.c.l.b16 %v754
      %v856 = vunpack.c.l.b16 %v755
      %v857 = vunpack.c.l.b16 %v756
      %v858 = vunpack.c.l.b16 %v757
      %v859 = vunpack.c.l.b16 %v758
      %v860 = vunpack.c.l.b16 %v759
      %v861 = vunpack.c.l.b16 %v760
      %v862 = vunpack.c.l.b16 %v761
      %v863 = vunpack.c.l.b16 %v762
      %v864 = vunpack.c.l.b16 %v763
      %v865 = vunpack.c.l.b16 %v764
      %v866 = vunpack.c.l.b16 %v765
      %v867 = vunpack.c.l.b16 %v766
      %v868 = vunpack.c.l.b16 %v767
      %v869 = vunpack.c.l.b16 %v768
      %v870 = vunpack.c.l.b16 %v769
      %v871 = vunpack.c.l.b16 %v770
      %v872 = vunpack.c.l.b16 %v771
      %v873 = vunpack.c.l.b16 %v772
      %v874 = vunpack.c.l.b16 %v773
      %v875 = vunpack.c.l.b16 %v774
      %v876 = vunpack.c.l.b16 %v775
      %v877 = vunpack.c.l.b16 %v776
      %v878 = vunpack.c.l.b16 %v777
      %v879 = vunpack.c.l.b16 %v778
      %v880 = vunpack.c.l.b16 %v779
      %v881 = vunpack.c.l.b16 %v780
      %v882 = vunpack.c.l.b16 %v781
      %v883 = vunpack.c.l.b16 %v782
      %v884 = vunpack.c.l.b16 %v783
      %v885 = vunpack.c.l.b16 %v784
      %v886 = vunpack.c.l.b16 %v785
      %v887 = vunpack.c.l.b16 %v786
      %v888 = vunpack.c.l.b16 %v787
      %v889 = vunpack.c.l.b16 %v788
      %v890 = vunpack.c.l.b16 %v789
      %v891 = vunpack.c.l.b16 %v790
      %v892 = vunpack.c.l.b16 %v791
      %v893 = vunpack.c.l.b16 %v792
      %v894 = vunpack.c.l.b16 %v793
      %v895 = vunpack.c.l.b16 %v794
      %v896 = vunpack.c.l.b16 %v795
      %v897 = vunpack.c.l.b16 %v796
      %v898 = vunpack.c.l.b16 %v797
      %v899 = vunpack.c.l.b16 %v798
      %v900 = vunpack.c.l.b16 %v799
      %v901 = vpack.c.b16 %v854, %v853
      %v902 = vpack.c.b16 %v856, %v855
      %v903 = vpack.c.b16 %v858, %v857
      %v904 = vpack.c.b16 %v860, %v859
      %v905 = vpack.c.b16 %v862, %v861
      %v906 = vpack.c.b16 %v864, %v863
      %v907 = vpack.c.b16 %v866, %v865
      %v908 = vpack.c.b16 %v868, %v867
      %v909 = vpack.c.b16 %v870, %v869
      %v910 = vpack.c.b16 %v872, %v871
      %v911 = vpack.c.b16 %v874, %v873
      %v912 = vpack.c.b16 %v876, %v875
      %v913 = vpack.c.b16 %v878, %v877
      %v914 = vpack.c.b16 %v880, %v879
      %v915 = vpack.c.b16 %v882, %v881
      %v916 = vpack.c.b16 %v884, %v883
      %v917 = vpack.c.b16 %v886, %v885
      %v918 = vpack.c.b16 %v888, %v887
      %v919 = vpack.c.b16 %v890, %v889
      %v920 = vpack.c.b16 %v892, %v891
      %v921 = vpack.c.b16 %v894, %v893
      %v922 = vpack.c.b16 %v896, %v895
      %v923 = vpack.c.b16 %v898, %v897
      %v924 = vpack.c.b16 %v900, %v899
      %949 = vmatpush.bf16.msra.mxu0 %v908
      %950 = vmatpush.bf16.msra.mxu0 %v907
      %951 = vmatpush.bf16.msra.mxu0 %v906
      %952 = vmatpush.bf16.msra.mxu0 %v905
      %953 = vmatpush.bf16.msra.mxu0 %v904
      %954 = vmatpush.bf16.msra.mxu0 %v903
      %955 = vmatpush.bf16.msra.mxu0 %v902
      %956 = vmatpush.bf16.msra.mxu0 %v901
      %957 = vmatmul.bf16.gmra.mxu0 %v737
      %v958 = vpop.f32.mrf.mxu0
      %v959 = vadd.f32 %v803, %v958
      %v960 = vpop.f32.mrf.mxu0
      %v961 = vadd.f32 %v803, %v960
      %962 = vdwg.mxu0
      %963 = vmatpush.bf16.msra.mxu0 %v916
      %964 = vmatpush.bf16.msra.mxu0 %v915
      %965 = vmatpush.bf16.msra.mxu0 %v914
      %966 = vmatpush.bf16.msra.mxu0 %v913
      %967 = vmatpush.bf16.msra.mxu0 %v912
      %968 = vmatpush.bf16.msra.mxu0 %v911
      %969 = vmatpush.bf16.msra.mxu0 %v910
      %970 = vmatpush.bf16.msra.mxu0 %v909
      %971 = vmatmul.bf16.gmra.mxu0 %v743
      %v972 = vpop.f32.mrf.mxu0
      %v973 = vadd.f32 %v959, %v972
      %v974 = vpop.f32.mrf.mxu0
      %v975 = vadd.f32 %v961, %v974
      %976 = vdwg.mxu0
      %977 = vmatpush.bf16.msra.mxu0 %v924
      %978 = vmatpush.bf16.msra.mxu0 %v923
      %979 = vmatpush.bf16.msra.mxu0 %v922
      %980 = vmatpush.bf16.msra.mxu0 %v921
      %981 = vmatpush.bf16.msra.mxu0 %v920
      %982 = vmatpush.bf16.msra.mxu0 %v919
      %983 = vmatpush.bf16.msra.mxu0 %v918
      %984 = vmatpush.bf16.msra.mxu0 %v917
      %985 = vmatmul.bf16.gmra.mxu0 %v749
      %v986 = vpop.f32.mrf.mxu0
      %v987 = vadd.f32 %v973, %v986
      %v988 = vpop.f32.mrf.mxu0
      %v989 = vadd.f32 %v975, %v988
      %990 = vdwg.mxu0
      %v991 = vpack.c.bf16 %v989, %v987
      %s992 = scalar_lea.vmem %s3, 48
      %v993 = vld [vmem:[%s992] sm:$0xf]
      %v994 = vld [vmem:[%s992 + $0x4] sm:$0xf]
      %v995 = vld [vmem:[%s992 + $0x8] sm:$0xf]
      %v996 = vld [vmem:[%s992 + $0xc] sm:$0xf]
      %v997 = vld [vmem:[%s992 + $0x10] sm:$0xf]
      %v998 = vld [vmem:[%s992 + $0x14] sm:$0xf]
      %v1005 = vunpack.c.l.b16 %v993
      %v1006 = vunpack.c.l.b16 %v994
      %v1007 = vunpack.c.l.b16 %v995
      %v1008 = vunpack.c.l.b16 %v996
      %v1009 = vunpack.c.l.b16 %v997
      %v1010 = vunpack.c.l.b16 %v998
      %v1011 = vpack.c.b16 %v1006, %v1005
      %v1012 = vpack.c.b16 %v1008, %v1007
      %v1013 = vpack.c.b16 %v1010, %v1009
      %v1015 = vsel %vm371, %v1011, 0
      %v1018 = vsel %vm371, %v1012, 0
      %v1021 = vsel %vm371, %v1013, 0
      %1023 = vmatpush.bf16.msra.mxu0 0
      %1024 = vmatpush.bf16.msra.mxu0 0
      %1025 = vmatpush.bf16.msra.mxu0 0
      %1026 = vmatpush.bf16.msra.mxu0 0
      %1027 = vmatpush.bf16.msra.mxu0 0
      %1028 = vmatpush.bf16.msra.mxu0 0
      %1029 = vmatpush.bf16.msra.mxu0 0
      %1030 = vmatpush.bf16.msra.mxu0 %v991
      %1031 = vmatmul.bf16.gmra.mxu0 %v1015
      %v1032 = vpop.f32.mrf.mxu0
      %v1033 = vadd.f32 0.0, %v1032
      %v1034 = vpop.f32.mrf.mxu0
      %v1035 = vadd.f32 0.0, %v1034
      %1036 = vmatmul.bf16.gmra.mxu0 %v1018
      %v1037 = vpop.f32.mrf.mxu0
      %v1038 = vadd.f32 0.0, %v1037
      %v1039 = vpop.f32.mrf.mxu0
      %v1040 = vadd.f32 0.0, %v1039
      %1041 = vmatmul.bf16.gmra.mxu0 %v1021
      %v1042 = vpop.f32.mrf.mxu0
      %v1043 = vadd.f32 0.0, %v1042
      %v1044 = vpop.f32.mrf.mxu0
      %v1045 = vadd.f32 0.0, %v1044
      %1046 = vdwg.mxu0
      %v1047 = vpack.c.bf16 %v1033, %v1033
      %v1048 = vpack.c.bf16 %v1035, %v1035
      %v1049 = vpack.c.bf16 %v1038, %v1038
      %v1050 = vpack.c.bf16 %v1040, %v1040
      %v1051 = vpack.c.bf16 %v1043, %v1043
      %v1052 = vpack.c.bf16 %v1045, %v1045
      %v1055 = vunpack.c.l.b16 %v1047
      %v1056 = vunpack.c.l.b16 %v1048
      %v1057 = vpack.c.b16 %v1056, %v1055
      %v1061 = vunpack.c.l.b16 %v1049
      %v1062 = vunpack.c.l.b16 %v1050
      %v1063 = vpack.c.b16 %v1062, %v1061
      %v1067 = vunpack.c.l.b16 %v1051
      %v1068 = vunpack.c.l.b16 %v1052
      %v1069 = vpack.c.b16 %v1068, %v1067
      %s1071 = scalar_lea.vmem %s4, 384
      %v1072 = vld [vmem:[%s1071] sm:$0xf]
      %v1073 = vld [vmem:[%s1071 + $0x4] sm:$0xf]
      %v1074 = vld [vmem:[%s1071 + $0x8] sm:$0xf]
      %v1075 = vld [vmem:[%s1071 + $0xc] sm:$0xf]
      %v1076 = vld [vmem:[%s1071 + $0x10] sm:$0xf]
      %v1077 = vld [vmem:[%s1071 + $0x14] sm:$0xf]
      %v1078 = vld [vmem:[%s1071 + $0x18] sm:$0xf]
      %v1079 = vld [vmem:[%s1071 + $0x1c] sm:$0xf]
      %v1080 = vld [vmem:[%s1071 + $0x20] sm:$0xf]
      %v1081 = vld [vmem:[%s1071 + $0x24] sm:$0xf]
      %v1082 = vld [vmem:[%s1071 + $0x28] sm:$0xf]
      %v1083 = vld [vmem:[%s1071 + $0x2c] sm:$0xf]
      %v1084 = vld [vmem:[%s1071 + $0x30] sm:$0xf]
      %v1085 = vld [vmem:[%s1071 + $0x34] sm:$0xf]
      %v1086 = vld [vmem:[%s1071 + $0x38] sm:$0xf]
      %v1087 = vld [vmem:[%s1071 + $0x3c] sm:$0xf]
      %v1088 = vld [vmem:[%s1071 + $0x40] sm:$0xf]
      %v1089 = vld [vmem:[%s1071 + $0x44] sm:$0xf]
      %v1090 = vld [vmem:[%s1071 + $0x48] sm:$0xf]
      %v1091 = vld [vmem:[%s1071 + $0x4c] sm:$0xf]
      %v1092 = vld [vmem:[%s1071 + $0x50] sm:$0xf]
      %v1093 = vld [vmem:[%s1071 + $0x54] sm:$0xf]
      %v1094 = vld [vmem:[%s1071 + $0x58] sm:$0xf]
      %v1095 = vld [vmem:[%s1071 + $0x5c] sm:$0xf]
      %v1096 = vld [vmem:[%s1071 + $0x60] sm:$0xf]
      %v1097 = vld [vmem:[%s1071 + $0x64] sm:$0xf]
      %v1098 = vld [vmem:[%s1071 + $0x68] sm:$0xf]
      %v1099 = vld [vmem:[%s1071 + $0x6c] sm:$0xf]
      %v1100 = vld [vmem:[%s1071 + $0x70] sm:$0xf]
      %v1101 = vld [vmem:[%s1071 + $0x74] sm:$0xf]
      %v1102 = vld [vmem:[%s1071 + $0x78] sm:$0xf]
      %v1103 = vld [vmem:[%s1071 + $0x7c] sm:$0xf]
      %v1104 = vld [vmem:[%s1071 + $0x80] sm:$0xf]
      %v1105 = vld [vmem:[%s1071 + $0x84] sm:$0xf]
      %v1106 = vld [vmem:[%s1071 + $0x88] sm:$0xf]
      %v1107 = vld [vmem:[%s1071 + $0x8c] sm:$0xf]
      %v1108 = vld [vmem:[%s1071 + $0x90] sm:$0xf]
      %v1109 = vld [vmem:[%s1071 + $0x94] sm:$0xf]
      %v1110 = vld [vmem:[%s1071 + $0x98] sm:$0xf]
      %v1111 = vld [vmem:[%s1071 + $0x9c] sm:$0xf]
      %v1112 = vld [vmem:[%s1071 + $0xa0] sm:$0xf]
      %v1113 = vld [vmem:[%s1071 + $0xa4] sm:$0xf]
      %v1114 = vld [vmem:[%s1071 + $0xa8] sm:$0xf]
      %v1115 = vld [vmem:[%s1071 + $0xac] sm:$0xf]
      %v1116 = vld [vmem:[%s1071 + $0xb0] sm:$0xf]
      %v1117 = vld [vmem:[%s1071 + $0xb4] sm:$0xf]
      %v1118 = vld [vmem:[%s1071 + $0xb8] sm:$0xf]
      %v1119 = vld [vmem:[%s1071 + $0xbc] sm:$0xf]
      %s1120 = scalar_lea.vmem %s5, 2
      %v1121 = vld [vmem:[%s1120] sm:$0x1]
      %v1123 = vperm.slane %v1121, 0
      %v1173 = vunpack.c.l.b16 %v1072
      %v1174 = vunpack.c.l.b16 %v1073
      %v1175 = vunpack.c.l.b16 %v1074
      %v1176 = vunpack.c.l.b16 %v1075
      %v1177 = vunpack.c.l.b16 %v1076
      %v1178 = vunpack.c.l.b16 %v1077
      %v1179 = vunpack.c.l.b16 %v1078
      %v1180 = vunpack.c.l.b16 %v1079
      %v1181 = vunpack.c.l.b16 %v1080
      %v1182 = vunpack.c.l.b16 %v1081
      %v1183 = vunpack.c.l.b16 %v1082
      %v1184 = vunpack.c.l.b16 %v1083
      %v1185 = vunpack.c.l.b16 %v1084
      %v1186 = vunpack.c.l.b16 %v1085
      %v1187 = vunpack.c.l.b16 %v1086
      %v1188 = vunpack.c.l.b16 %v1087
      %v1189 = vunpack.c.l.b16 %v1088
      %v1190 = vunpack.c.l.b16 %v1089
      %v1191 = vunpack.c.l.b16 %v1090
      %v1192 = vunpack.c.l.b16 %v1091
      %v1193 = vunpack.c.l.b16 %v1092
      %v1194 = vunpack.c.l.b16 %v1093
      %v1195 = vunpack.c.l.b16 %v1094
      %v1196 = vunpack.c.l.b16 %v1095
      %v1197 = vunpack.c.l.b16 %v1096
      %v1198 = vunpack.c.l.b16 %v1097
      %v1199 = vunpack.c.l.b16 %v1098
      %v1200 = vunpack.c.l.b16 %v1099
      %v1201 = vunpack.c.l.b16 %v1100
      %v1202 = vunpack.c.l.b16 %v1101
      %v1203 = vunpack.c.l.b16 %v1102
      %v1204 = vunpack.c.l.b16 %v1103
      %v1205 = vunpack.c.l.b16 %v1104
      %v1206 = vunpack.c.l.b16 %v1105
      %v1207 = vunpack.c.l.b16 %v1106
      %v1208 = vunpack.c.l.b16 %v1107
      %v1209 = vunpack.c.l.b16 %v1108
      %v1210 = vunpack.c.l.b16 %v1109
      %v1211 = vunpack.c.l.b16 %v1110
      %v1212 = vunpack.c.l.b16 %v1111
      %v1213 = vunpack.c.l.b16 %v1112
      %v1214 = vunpack.c.l.b16 %v1113
      %v1215 = vunpack.c.l.b16 %v1114
      %v1216 = vunpack.c.l.b16 %v1115
      %v1217 = vunpack.c.l.b16 %v1116
      %v1218 = vunpack.c.l.b16 %v1117
      %v1219 = vunpack.c.l.b16 %v1118
      %v1220 = vunpack.c.l.b16 %v1119
      %v1221 = vpack.c.b16 %v1174, %v1173
      %v1222 = vpack.c.b16 %v1176, %v1175
      %v1223 = vpack.c.b16 %v1178, %v1177
      %v1224 = vpack.c.b16 %v1180, %v1179
      %v1225 = vpack.c.b16 %v1182, %v1181
      %v1226 = vpack.c.b16 %v1184, %v1183
      %v1227 = vpack.c.b16 %v1186, %v1185
      %v1228 = vpack.c.b16 %v1188, %v1187
      %v1229 = vpack.c.b16 %v1190, %v1189
      %v1230 = vpack.c.b16 %v1192, %v1191
      %v1231 = vpack.c.b16 %v1194, %v1193
      %v1232 = vpack.c.b16 %v1196, %v1195
      %v1233 = vpack.c.b16 %v1198, %v1197
      %v1234 = vpack.c.b16 %v1200, %v1199
      %v1235 = vpack.c.b16 %v1202, %v1201
      %v1236 = vpack.c.b16 %v1204, %v1203
      %v1237 = vpack.c.b16 %v1206, %v1205
      %v1238 = vpack.c.b16 %v1208, %v1207
      %v1239 = vpack.c.b16 %v1210, %v1209
      %v1240 = vpack.c.b16 %v1212, %v1211
      %v1241 = vpack.c.b16 %v1214, %v1213
      %v1242 = vpack.c.b16 %v1216, %v1215
      %v1243 = vpack.c.b16 %v1218, %v1217
      %v1244 = vpack.c.b16 %v1220, %v1219
      %1269 = vmatpush.bf16.msra.mxu0 %v1228
      %1270 = vmatpush.bf16.msra.mxu0 %v1227
      %1271 = vmatpush.bf16.msra.mxu0 %v1226
      %1272 = vmatpush.bf16.msra.mxu0 %v1225
      %1273 = vmatpush.bf16.msra.mxu0 %v1224
      %1274 = vmatpush.bf16.msra.mxu0 %v1223
      %1275 = vmatpush.bf16.msra.mxu0 %v1222
      %1276 = vmatpush.bf16.msra.mxu0 %v1221
      %1277 = vmatmul.bf16.gmra.mxu0 %v1057
      %v1278 = vpop.f32.mrf.mxu0
      %v1279 = vadd.f32 %v1123, %v1278
      %v1280 = vpop.f32.mrf.mxu0
      %v1281 = vadd.f32 %v1123, %v1280
      %1282 = vdwg.mxu0
      %1283 = vmatpush.bf16.msra.mxu0 %v1236
      %1284 = vmatpush.bf16.msra.mxu0 %v1235
      %1285 = vmatpush.bf16.msra.mxu0 %v1234
      %1286 = vmatpush.bf16.msra.mxu0 %v1233
      %1287 = vmatpush.bf16.msra.mxu0 %v1232
      %1288 = vmatpush.bf16.msra.mxu0 %v1231
      %1289 = vmatpush.bf16.msra.mxu0 %v1230
      %1290 = vmatpush.bf16.msra.mxu0 %v1229
      %1291 = vmatmul.bf16.gmra.mxu0 %v1063
      %v1292 = vpop.f32.mrf.mxu0
      %v1293 = vadd.f32 %v1279, %v1292
      %v1294 = vpop.f32.mrf.mxu0
      %v1295 = vadd.f32 %v1281, %v1294
      %1296 = vdwg.mxu0
      %1297 = vmatpush.bf16.msra.mxu0 %v1244
      %1298 = vmatpush.bf16.msra.mxu0 %v1243
      %1299 = vmatpush.bf16.msra.mxu0 %v1242
      %1300 = vmatpush.bf16.msra.mxu0 %v1241
      %1301 = vmatpush.bf16.msra.mxu0 %v1240
      %1302 = vmatpush.bf16.msra.mxu0 %v1239
      %1303 = vmatpush.bf16.msra.mxu0 %v1238
      %1304 = vmatpush.bf16.msra.mxu0 %v1237
      %1305 = vmatmul.bf16.gmra.mxu0 %v1069
      %v1306 = vpop.f32.mrf.mxu0
      %v1307 = vadd.f32 %v1293, %v1306
      %v1308 = vpop.f32.mrf.mxu0
      %v1309 = vadd.f32 %v1295, %v1308
      %1310 = vdwg.mxu0
      %v1311 = vld [vmem:[%s340] sm:$0xff]
      %v1312 = vld [vmem:[%s340 + $0x8] sm:$0xff]
      %v1313 = vld [vmem:[%s6] sm:$0xf]
      %v1314 = vld [vmem:[%s6 + $0x4] sm:$0xf]
      %v1315 = vpack.c.bf16 %v1312, %v1311
      %v1318 = vunpack.c.l.b16 %v1313
      %v1319 = vunpack.c.l.b16 %v1314
      %v1320 = vpack.c.b16 %v1319, %v1318
      %v1322 = vsel %vm371, %v1320, 0
      %1324 = vmatpush.bf16.msra.mxu0 0
      %1325 = vmatpush.bf16.msra.mxu0 0
      %1326 = vmatpush.bf16.msra.mxu0 0
      %1327 = vmatpush.bf16.msra.mxu0 0
      %1328 = vmatpush.bf16.msra.mxu0 0
      %1329 = vmatpush.bf16.msra.mxu0 0
      %1330 = vmatpush.bf16.msra.mxu0 0
      %1331 = vmatpush.bf16.msra.mxu0 %v1315
      %1332 = vmatmul.bf16.gmra.mxu0 %v1322
      %v1333 = vpop.f32.mrf.mxu0
      %v1334 = vadd.f32 0.0, %v1333
      %v1335 = vpop.f32.mrf.mxu0
      %v1336 = vadd.f32 0.0, %v1335
      %1337 = vdwg.mxu0
      %v1338 = vpack.c.bf16 %v1336, %v1334
      %v1339 = vld [vmem:[%s7] sm:$0xf]
      %v1340 = vld [vmem:[%s7 + $0x4] sm:$0xf]
      %v1341 = vld [vmem:[%s7 + $0x8] sm:$0xf]
      %v1342 = vld [vmem:[%s7 + $0xc] sm:$0xf]
      %v1343 = vld [vmem:[%s7 + $0x10] sm:$0xf]
      %v1344 = vld [vmem:[%s7 + $0x14] sm:$0xf]
      %v1345 = vld [vmem:[%s7 + $0x18] sm:$0xf]
      %v1346 = vld [vmem:[%s7 + $0x1c] sm:$0xf]
      %v1347 = vld [vmem:[%s7 + $0x20] sm:$0xf]
      %v1348 = vld [vmem:[%s7 + $0x24] sm:$0xf]
      %v1349 = vld [vmem:[%s7 + $0x28] sm:$0xf]
      %v1350 = vld [vmem:[%s7 + $0x2c] sm:$0xf]
      %v1351 = vld [vmem:[%s7 + $0x30] sm:$0xf]
      %v1352 = vld [vmem:[%s7 + $0x34] sm:$0xf]
      %v1353 = vld [vmem:[%s7 + $0x38] sm:$0xf]
      %v1354 = vld [vmem:[%s7 + $0x3c] sm:$0xf]
      %v1371 = vunpack.c.l.b16 %v1339
      %v1372 = vunpack.c.l.b16 %v1340
      %v1373 = vunpack.c.l.b16 %v1341
      %v1374 = vunpack.c.l.b16 %v1342
      %v1375 = vunpack.c.l.b16 %v1343
      %v1376 = vunpack.c.l.b16 %v1344
      %v1377 = vunpack.c.l.b16 %v1345
      %v1378 = vunpack.c.l.b16 %v1346
      %v1379 = vunpack.c.l.b16 %v1347
      %v1380 = vunpack.c.l.b16 %v1348
      %v1381 = vunpack.c.l.b16 %v1349
      %v1382 = vunpack.c.l.b16 %v1350
      %v1383 = vunpack.c.l.b16 %v1351
      %v1384 = vunpack.c.l.b16 %v1352
      %v1385 = vunpack.c.l.b16 %v1353
      %v1386 = vunpack.c.l.b16 %v1354
      %v1387 = vpack.c.b16 %v1372, %v1371
      %v1388 = vpack.c.b16 %v1374, %v1373
      %v1389 = vpack.c.b16 %v1376, %v1375
      %v1390 = vpack.c.b16 %v1378, %v1377
      %v1391 = vpack.c.b16 %v1380, %v1379
      %v1392 = vpack.c.b16 %v1382, %v1381
      %v1393 = vpack.c.b16 %v1384, %v1383
      %v1394 = vpack.c.b16 %v1386, %v1385
      %1403 = vmatpush.bf16.msra.mxu0 %v1394
      %1404 = vmatpush.bf16.msra.mxu0 %v1393
      %1405 = vmatpush.bf16.msra.mxu0 %v1392
      %1406 = vmatpush.bf16.msra.mxu0 %v1391
      %1407 = vmatpush.bf16.msra.mxu0 %v1390
      %1408 = vmatpush.bf16.msra.mxu0 %v1389
      %1409 = vmatpush.bf16.msra.mxu0 %v1388
      %1410 = vmatpush.bf16.msra.mxu0 %v1387
      %1411 = vmatmul.bf16.gmra.mxu0 %v1338
      %v1412 = vpop.f32.mrf.mxu0
      %v1413 = vadd.f32 0.0, %v1412
      %v1414 = vpop.f32.mrf.mxu0
      %v1415 = vadd.f32 0.0, %v1414
      %1416 = vdwg.mxu0
      %v1417 = vadd.f32 %v1307, %v1413
      %v1418 = vadd.f32 %v1309, %v1415
      %v1419 = vpack.c.bf16 %v1418, %v1417
      %s1420 = scalar_lea.vmem %s3, 72
      %v1421 = vld [vmem:[%s1420] sm:$0xf]
      %v1422 = vld [vmem:[%s1420 + $0x4] sm:$0xf]
      %v1423 = vld [vmem:[%s1420 + $0x8] sm:$0xf]
      %v1424 = vld [vmem:[%s1420 + $0xc] sm:$0xf]
      %v1425 = vld [vmem:[%s1420 + $0x10] sm:$0xf]
      %v1426 = vld [vmem:[%s1420 + $0x14] sm:$0xf]
      %v1433 = vunpack.c.l.b16 %v1421
      %v1434 = vunpack.c.l.b16 %v1422
      %v1435 = vunpack.c.l.b16 %v1423
      %v1436 = vunpack.c.l.b16 %v1424
      %v1437 = vunpack.c.l.b16 %v1425
      %v1438 = vunpack.c.l.b16 %v1426
      %v1439 = vpack.c.b16 %v1434, %v1433
      %v1440 = vpack.c.b16 %v1436, %v1435
      %v1441 = vpack.c.b16 %v1438, %v1437
      %v1443 = vsel %vm371, %v1439, 0
      %v1446 = vsel %vm371, %v1440, 0
      %v1449 = vsel %vm371, %v1441, 0
      %1451 = vmatpush.bf16.msra.mxu0 0
      %1452 = vmatpush.bf16.msra.mxu0 0
      %1453 = vmatpush.bf16.msra.mxu0 0
      %1454 = vmatpush.bf16.msra.mxu0 0
      %1455 = vmatpush.bf16.msra.mxu0 0
      %1456 = vmatpush.bf16.msra.mxu0 0
      %1457 = vmatpush.bf16.msra.mxu0 0
      %1458 = vmatpush.bf16.msra.mxu0 %v1419
      %1459 = vmatmul.bf16.gmra.mxu0 %v1443
      %v1460 = vpop.f32.mrf.mxu0
      %v1461 = vadd.f32 0.0, %v1460
      %v1462 = vpop.f32.mrf.mxu0
      %v1463 = vadd.f32 0.0, %v1462
      %1464 = vmatmul.bf16.gmra.mxu0 %v1446
      %v1465 = vpop.f32.mrf.mxu0
      %v1466 = vadd.f32 0.0, %v1465
      %v1467 = vpop.f32.mrf.mxu0
      %v1468 = vadd.f32 0.0, %v1467
      %1469 = vmatmul.bf16.gmra.mxu0 %v1449
      %v1470 = vpop.f32.mrf.mxu0
      %v1471 = vadd.f32 0.0, %v1470
      %v1472 = vpop.f32.mrf.mxu0
      %v1473 = vadd.f32 0.0, %v1472
      %1474 = vdwg.mxu0
      %v1475 = vpack.c.bf16 %v1461, %v1461
      %v1476 = vpack.c.bf16 %v1463, %v1463
      %v1477 = vpack.c.bf16 %v1466, %v1466
      %v1478 = vpack.c.bf16 %v1468, %v1468
      %v1479 = vpack.c.bf16 %v1471, %v1471
      %v1480 = vpack.c.bf16 %v1473, %v1473
      %v1483 = vunpack.c.l.b16 %v1475
      %v1484 = vunpack.c.l.b16 %v1476
      %v1485 = vpack.c.b16 %v1484, %v1483
      %v1489 = vunpack.c.l.b16 %v1477
      %v1490 = vunpack.c.l.b16 %v1478
      %v1491 = vpack.c.b16 %v1490, %v1489
      %v1495 = vunpack.c.l.b16 %v1479
      %v1496 = vunpack.c.l.b16 %v1480
      %v1497 = vpack.c.b16 %v1496, %v1495
      %s1499 = scalar_lea.vmem %s4, 576
      %v1500 = vld [vmem:[%s1499] sm:$0xf]
      %v1501 = vld [vmem:[%s1499 + $0x4] sm:$0xf]
      %v1502 = vld [vmem:[%s1499 + $0x8] sm:$0xf]
      %v1503 = vld [vmem:[%s1499 + $0xc] sm:$0xf]
      %v1504 = vld [vmem:[%s1499 + $0x10] sm:$0xf]
      %v1505 = vld [vmem:[%s1499 + $0x14] sm:$0xf]
      %v1506 = vld [vmem:[%s1499 + $0x18] sm:$0xf]
      %v1507 = vld [vmem:[%s1499 + $0x1c] sm:$0xf]
      %v1508 = vld [vmem:[%s1499 + $0x20] sm:$0xf]
      %v1509 = vld [vmem:[%s1499 + $0x24] sm:$0xf]
      %v1510 = vld [vmem:[%s1499 + $0x28] sm:$0xf]
      %v1511 = vld [vmem:[%s1499 + $0x2c] sm:$0xf]
      %v1512 = vld [vmem:[%s1499 + $0x30] sm:$0xf]
      %v1513 = vld [vmem:[%s1499 + $0x34] sm:$0xf]
      %v1514 = vld [vmem:[%s1499 + $0x38] sm:$0xf]
      %v1515 = vld [vmem:[%s1499 + $0x3c] sm:$0xf]
      %v1516 = vld [vmem:[%s1499 + $0x40] sm:$0xf]
      %v1517 = vld [vmem:[%s1499 + $0x44] sm:$0xf]
      %v1518 = vld [vmem:[%s1499 + $0x48] sm:$0xf]
      %v1519 = vld [vmem:[%s1499 + $0x4c] sm:$0xf]
      %v1520 = vld [vmem:[%s1499 + $0x50] sm:$0xf]
      %v1521 = vld [vmem:[%s1499 + $0x54] sm:$0xf]
      %v1522 = vld [vmem:[%s1499 + $0x58] sm:$0xf]
      %v1523 = vld [vmem:[%s1499 + $0x5c] sm:$0xf]
      %v1524 = vld [vmem:[%s1499 + $0x60] sm:$0xf]
      %v1525 = vld [vmem:[%s1499 + $0x64] sm:$0xf]
      %v1526 = vld [vmem:[%s1499 + $0x68] sm:$0xf]
      %v1527 = vld [vmem:[%s1499 + $0x6c] sm:$0xf]
      %v1528 = vld [vmem:[%s1499 + $0x70] sm:$0xf]
      %v1529 = vld [vmem:[%s1499 + $0x74] sm:$0xf]
      %v1530 = vld [vmem:[%s1499 + $0x78] sm:$0xf]
      %v1531 = vld [vmem:[%s1499 + $0x7c] sm:$0xf]
      %v1532 = vld [vmem:[%s1499 + $0x80] sm:$0xf]
      %v1533 = vld [vmem:[%s1499 + $0x84] sm:$0xf]
      %v1534 = vld [vmem:[%s1499 + $0x88] sm:$0xf]
      %v1535 = vld [vmem:[%s1499 + $0x8c] sm:$0xf]
      %v1536 = vld [vmem:[%s1499 + $0x90] sm:$0xf]
      %v1537 = vld [vmem:[%s1499 + $0x94] sm:$0xf]
      %v1538 = vld [vmem:[%s1499 + $0x98] sm:$0xf]
      %v1539 = vld [vmem:[%s1499 + $0x9c] sm:$0xf]
      %v1540 = vld [vmem:[%s1499 + $0xa0] sm:$0xf]
      %v1541 = vld [vmem:[%s1499 + $0xa4] sm:$0xf]
      %v1542 = vld [vmem:[%s1499 + $0xa8] sm:$0xf]
      %v1543 = vld [vmem:[%s1499 + $0xac] sm:$0xf]
      %v1544 = vld [vmem:[%s1499 + $0xb0] sm:$0xf]
      %v1545 = vld [vmem:[%s1499 + $0xb4] sm:$0xf]
      %v1546 = vld [vmem:[%s1499 + $0xb8] sm:$0xf]
      %v1547 = vld [vmem:[%s1499 + $0xbc] sm:$0xf]
      %s1548 = scalar_lea.vmem %s5, 3
      %v1549 = vld [vmem:[%s1548] sm:$0x1]
      %v1551 = vperm.slane %v1549, 0
      %v1601 = vunpack.c.l.b16 %v1500
      %v1602 = vunpack.c.l.b16 %v1501
      %v1603 = vunpack.c.l.b16 %v1502
      %v1604 = vunpack.c.l.b16 %v1503
      %v1605 = vunpack.c.l.b16 %v1504
      %v1606 = vunpack.c.l.b16 %v1505
      %v1607 = vunpack.c.l.b16 %v1506
      %v1608 = vunpack.c.l.b16 %v1507
      %v1609 = vunpack.c.l.b16 %v1508
      %v1610 = vunpack.c.l.b16 %v1509
      %v1611 = vunpack.c.l.b16 %v1510
      %v1612 = vunpack.c.l.b16 %v1511
      %v1613 = vunpack.c.l.b16 %v1512
      %v1614 = vunpack.c.l.b16 %v1513
      %v1615 = vunpack.c.l.b16 %v1514
      %v1616 = vunpack.c.l.b16 %v1515
      %v1617 = vunpack.c.l.b16 %v1516
      %v1618 = vunpack.c.l.b16 %v1517
      %v1619 = vunpack.c.l.b16 %v1518
      %v1620 = vunpack.c.l.b16 %v1519
      %v1621 = vunpack.c.l.b16 %v1520
      %v1622 = vunpack.c.l.b16 %v1521
      %v1623 = vunpack.c.l.b16 %v1522
      %v1624 = vunpack.c.l.b16 %v1523
      %v1625 = vunpack.c.l.b16 %v1524
      %v1626 = vunpack.c.l.b16 %v1525
      %v1627 = vunpack.c.l.b16 %v1526
      %v1628 = vunpack.c.l.b16 %v1527
      %v1629 = vunpack.c.l.b16 %v1528
      %v1630 = vunpack.c.l.b16 %v1529
      %v1631 = vunpack.c.l.b16 %v1530
      %v1632 = vunpack.c.l.b16 %v1531
      %v1633 = vunpack.c.l.b16 %v1532
      %v1634 = vunpack.c.l.b16 %v1533
      %v1635 = vunpack.c.l.b16 %v1534
      %v1636 = vunpack.c.l.b16 %v1535
      %v1637 = vunpack.c.l.b16 %v1536
      %v1638 = vunpack.c.l.b16 %v1537
      %v1639 = vunpack.c.l.b16 %v1538
      %v1640 = vunpack.c.l.b16 %v1539
      %v1641 = vunpack.c.l.b16 %v1540
      %v1642 = vunpack.c.l.b16 %v1541
      %v1643 = vunpack.c.l.b16 %v1542
      %v1644 = vunpack.c.l.b16 %v1543
      %v1645 = vunpack.c.l.b16 %v1544
      %v1646 = vunpack.c.l.b16 %v1545
      %v1647 = vunpack.c.l.b16 %v1546
      %v1648 = vunpack.c.l.b16 %v1547
      %v1649 = vpack.c.b16 %v1602, %v1601
      %v1650 = vpack.c.b16 %v1604, %v1603
      %v1651 = vpack.c.b16 %v1606, %v1605
      %v1652 = vpack.c.b16 %v1608, %v1607
      %v1653 = vpack.c.b16 %v1610, %v1609
      %v1654 = vpack.c.b16 %v1612, %v1611
      %v1655 = vpack.c.b16 %v1614, %v1613
      %v1656 = vpack.c.b16 %v1616, %v1615
      %v1657 = vpack.c.b16 %v1618, %v1617
      %v1658 = vpack.c.b16 %v1620, %v1619
      %v1659 = vpack.c.b16 %v1622, %v1621
      %v1660 = vpack.c.b16 %v1624, %v1623
      %v1661 = vpack.c.b16 %v1626, %v1625
      %v1662 = vpack.c.b16 %v1628, %v1627
      %v1663 = vpack.c.b16 %v1630, %v1629
      %v1664 = vpack.c.b16 %v1632, %v1631
      %v1665 = vpack.c.b16 %v1634, %v1633
      %v1666 = vpack.c.b16 %v1636, %v1635
      %v1667 = vpack.c.b16 %v1638, %v1637
      %v1668 = vpack.c.b16 %v1640, %v1639
      %v1669 = vpack.c.b16 %v1642, %v1641
      %v1670 = vpack.c.b16 %v1644, %v1643
      %v1671 = vpack.c.b16 %v1646, %v1645
      %v1672 = vpack.c.b16 %v1648, %v1647
      %1697 = vmatpush.bf16.msra.mxu0 %v1656
      %1698 = vmatpush.bf16.msra.mxu0 %v1655
      %1699 = vmatpush.bf16.msra.mxu0 %v1654
      %1700 = vmatpush.bf16.msra.mxu0 %v1653
      %1701 = vmatpush.bf16.msra.mxu0 %v1652
      %1702 = vmatpush.bf16.msra.mxu0 %v1651
      %1703 = vmatpush.bf16.msra.mxu0 %v1650
      %1704 = vmatpush.bf16.msra.mxu0 %v1649
      %1705 = vmatmul.bf16.gmra.mxu0 %v1485
      %v1706 = vpop.f32.mrf.mxu0
      %v1707 = vadd.f32 %v1551, %v1706
      %v1708 = vpop.f32.mrf.mxu0
      %v1709 = vadd.f32 %v1551, %v1708
      %1710 = vdwg.mxu0
      %1711 = vmatpush.bf16.msra.mxu0 %v1664
      %1712 = vmatpush.bf16.msra.mxu0 %v1663
      %1713 = vmatpush.bf16.msra.mxu0 %v1662
      %1714 = vmatpush.bf16.msra.mxu0 %v1661
      %1715 = vmatpush.bf16.msra.mxu0 %v1660
      %1716 = vmatpush.bf16.msra.mxu0 %v1659
      %1717 = vmatpush.bf16.msra.mxu0 %v1658
      %1718 = vmatpush.bf16.msra.mxu0 %v1657
      %1719 = vmatmul.bf16.gmra.mxu0 %v1491
      %v1720 = vpop.f32.mrf.mxu0
      %v1721 = vadd.f32 %v1707, %v1720
      %v1722 = vpop.f32.mrf.mxu0
      %v1723 = vadd.f32 %v1709, %v1722
      %1724 = vdwg.mxu0
      %1725 = vmatpush.bf16.msra.mxu0 %v1672
      %1726 = vmatpush.bf16.msra.mxu0 %v1671
      %1727 = vmatpush.bf16.msra.mxu0 %v1670
      %1728 = vmatpush.bf16.msra.mxu0 %v1669
      %1729 = vmatpush.bf16.msra.mxu0 %v1668
      %1730 = vmatpush.bf16.msra.mxu0 %v1667
      %1731 = vmatpush.bf16.msra.mxu0 %v1666
      %1732 = vmatpush.bf16.msra.mxu0 %v1665
      %1733 = vmatmul.bf16.gmra.mxu0 %v1497
      %v1734 = vpop.f32.mrf.mxu0
      %v1735 = vadd.f32 %v1721, %v1734
      %v1736 = vpop.f32.mrf.mxu0
      %v1737 = vadd.f32 %v1723, %v1736
      %1738 = vdwg.mxu0
      %v1739 = vpack.c.bf16 %v1737, %v1735
      %s1740 = scalar_lea.vmem %s3, 96
      %v1741 = vld [vmem:[%s1740] sm:$0xf]
      %v1742 = vld [vmem:[%s1740 + $0x4] sm:$0xf]
      %v1743 = vld [vmem:[%s1740 + $0x8] sm:$0xf]
      %v1744 = vld [vmem:[%s1740 + $0xc] sm:$0xf]
      %v1745 = vld [vmem:[%s1740 + $0x10] sm:$0xf]
      %v1746 = vld [vmem:[%s1740 + $0x14] sm:$0xf]
      %v1753 = vunpack.c.l.b16 %v1741
      %v1754 = vunpack.c.l.b16 %v1742
      %v1755 = vunpack.c.l.b16 %v1743
      %v1756 = vunpack.c.l.b16 %v1744
      %v1757 = vunpack.c.l.b16 %v1745
      %v1758 = vunpack.c.l.b16 %v1746
      %v1759 = vpack.c.b16 %v1754, %v1753
      %v1760 = vpack.c.b16 %v1756, %v1755
      %v1761 = vpack.c.b16 %v1758, %v1757
      %v1763 = vsel %vm371, %v1759, 0
      %v1766 = vsel %vm371, %v1760, 0
      %v1769 = vsel %vm371, %v1761, 0
      %1771 = vmatpush.bf16.msra.mxu0 0
      %1772 = vmatpush.bf16.msra.mxu0 0
      %1773 = vmatpush.bf16.msra.mxu0 0
      %1774 = vmatpush.bf16.msra.mxu0 0
      %1775 = vmatpush.bf16.msra.mxu0 0
      %1776 = vmatpush.bf16.msra.mxu0 0
      %1777 = vmatpush.bf16.msra.mxu0 0
      %1778 = vmatpush.bf16.msra.mxu0 %v1739
      %1779 = vmatmul.bf16.gmra.mxu0 %v1763
      %v1780 = vpop.f32.mrf.mxu0
      %v1781 = vadd.f32 0.0, %v1780
      %v1782 = vpop.f32.mrf.mxu0
      %v1783 = vadd.f32 0.0, %v1782
      %1784 = vmatmul.bf16.gmra.mxu0 %v1766
      %v1785 = vpop.f32.mrf.mxu0
      %v1786 = vadd.f32 0.0, %v1785
      %v1787 = vpop.f32.mrf.mxu0
      %v1788 = vadd.f32 0.0, %v1787
      %1789 = vmatmul.bf16.gmra.mxu0 %v1769
      %v1790 = vpop.f32.mrf.mxu0
      %v1791 = vadd.f32 0.0, %v1790
      %v1792 = vpop.f32.mrf.mxu0
      %v1793 = vadd.f32 0.0, %v1792
      %1794 = vdwg.mxu0
      %v1795 = vpack.c.bf16 %v1781, %v1781
      %v1796 = vpack.c.bf16 %v1783, %v1783
      %v1797 = vpack.c.bf16 %v1786, %v1786
      %v1798 = vpack.c.bf16 %v1788, %v1788
      %v1799 = vpack.c.bf16 %v1791, %v1791
      %v1800 = vpack.c.bf16 %v1793, %v1793
      %v1803 = vunpack.c.l.b16 %v1795
      %v1804 = vunpack.c.l.b16 %v1796
      %v1805 = vpack.c.b16 %v1804, %v1803
      %v1809 = vunpack.c.l.b16 %v1797
      %v1810 = vunpack.c.l.b16 %v1798
      %v1811 = vpack.c.b16 %v1810, %v1809
      %v1815 = vunpack.c.l.b16 %v1799
      %v1816 = vunpack.c.l.b16 %v1800
      %v1817 = vpack.c.b16 %v1816, %v1815
      %s1819 = scalar_lea.vmem %s4, 768
      %v1820 = vld [vmem:[%s1819] sm:$0xf]
      %v1821 = vld [vmem:[%s1819 + $0x4] sm:$0xf]
      %v1822 = vld [vmem:[%s1819 + $0x8] sm:$0xf]
      %v1823 = vld [vmem:[%s1819 + $0xc] sm:$0xf]
      %v1824 = vld [vmem:[%s1819 + $0x10] sm:$0xf]
      %v1825 = vld [vmem:[%s1819 + $0x14] sm:$0xf]
      %v1826 = vld [vmem:[%s1819 + $0x18] sm:$0xf]
      %v1827 = vld [vmem:[%s1819 + $0x1c] sm:$0xf]
      %v1828 = vld [vmem:[%s1819 + $0x20] sm:$0xf]
      %v1829 = vld [vmem:[%s1819 + $0x24] sm:$0xf]
      %v1830 = vld [vmem:[%s1819 + $0x28] sm:$0xf]
      %v1831 = vld [vmem:[%s1819 + $0x2c] sm:$0xf]
      %v1832 = vld [vmem:[%s1819 + $0x30] sm:$0xf]
      %v1833 = vld [vmem:[%s1819 + $0x34] sm:$0xf]
      %v1834 = vld [vmem:[%s1819 + $0x38] sm:$0xf]
      %v1835 = vld [vmem:[%s1819 + $0x3c] sm:$0xf]
      %v1836 = vld [vmem:[%s1819 + $0x40] sm:$0xf]
      %v1837 = vld [vmem:[%s1819 + $0x44] sm:$0xf]
      %v1838 = vld [vmem:[%s1819 + $0x48] sm:$0xf]
      %v1839 = vld [vmem:[%s1819 + $0x4c] sm:$0xf]
      %v1840 = vld [vmem:[%s1819 + $0x50] sm:$0xf]
      %v1841 = vld [vmem:[%s1819 + $0x54] sm:$0xf]
      %v1842 = vld [vmem:[%s1819 + $0x58] sm:$0xf]
      %v1843 = vld [vmem:[%s1819 + $0x5c] sm:$0xf]
      %v1844 = vld [vmem:[%s1819 + $0x60] sm:$0xf]
      %v1845 = vld [vmem:[%s1819 + $0x64] sm:$0xf]
      %v1846 = vld [vmem:[%s1819 + $0x68] sm:$0xf]
      %v1847 = vld [vmem:[%s1819 + $0x6c] sm:$0xf]
      %v1848 = vld [vmem:[%s1819 + $0x70] sm:$0xf]
      %v1849 = vld [vmem:[%s1819 + $0x74] sm:$0xf]
      %v1850 = vld [vmem:[%s1819 + $0x78] sm:$0xf]
      %v1851 = vld [vmem:[%s1819 + $0x7c] sm:$0xf]
      %v1852 = vld [vmem:[%s1819 + $0x80] sm:$0xf]
      %v1853 = vld [vmem:[%s1819 + $0x84] sm:$0xf]
      %v1854 = vld [vmem:[%s1819 + $0x88] sm:$0xf]
      %v1855 = vld [vmem:[%s1819 + $0x8c] sm:$0xf]
      %v1856 = vld [vmem:[%s1819 + $0x90] sm:$0xf]
      %v1857 = vld [vmem:[%s1819 + $0x94] sm:$0xf]
      %v1858 = vld [vmem:[%s1819 + $0x98] sm:$0xf]
      %v1859 = vld [vmem:[%s1819 + $0x9c] sm:$0xf]
      %v1860 = vld [vmem:[%s1819 + $0xa0] sm:$0xf]
      %v1861 = vld [vmem:[%s1819 + $0xa4] sm:$0xf]
      %v1862 = vld [vmem:[%s1819 + $0xa8] sm:$0xf]
      %v1863 = vld [vmem:[%s1819 + $0xac] sm:$0xf]
      %v1864 = vld [vmem:[%s1819 + $0xb0] sm:$0xf]
      %v1865 = vld [vmem:[%s1819 + $0xb4] sm:$0xf]
      %v1866 = vld [vmem:[%s1819 + $0xb8] sm:$0xf]
      %v1867 = vld [vmem:[%s1819 + $0xbc] sm:$0xf]
      %s1868 = scalar_lea.vmem %s5, 4
      %v1869 = vld [vmem:[%s1868] sm:$0x1]
      %v1871 = vperm.slane %v1869, 0
      %v1921 = vunpack.c.l.b16 %v1820
      %v1922 = vunpack.c.l.b16 %v1821
      %v1923 = vunpack.c.l.b16 %v1822
      %v1924 = vunpack.c.l.b16 %v1823
      %v1925 = vunpack.c.l.b16 %v1824
      %v1926 = vunpack.c.l.b16 %v1825
      %v1927 = vunpack.c.l.b16 %v1826
      %v1928 = vunpack.c.l.b16 %v1827
      %v1929 = vunpack.c.l.b16 %v1828
      %v1930 = vunpack.c.l.b16 %v1829
      %v1931 = vunpack.c.l.b16 %v1830
      %v1932 = vunpack.c.l.b16 %v1831
      %v1933 = vunpack.c.l.b16 %v1832
      %v1934 = vunpack.c.l.b16 %v1833
      %v1935 = vunpack.c.l.b16 %v1834
      %v1936 = vunpack.c.l.b16 %v1835
      %v1937 = vunpack.c.l.b16 %v1836
      %v1938 = vunpack.c.l.b16 %v1837
      %v1939 = vunpack.c.l.b16 %v1838
      %v1940 = vunpack.c.l.b16 %v1839
      %v1941 = vunpack.c.l.b16 %v1840
      %v1942 = vunpack.c.l.b16 %v1841
      %v1943 = vunpack.c.l.b16 %v1842
      %v1944 = vunpack.c.l.b16 %v1843
      %v1945 = vunpack.c.l.b16 %v1844
      %v1946 = vunpack.c.l.b16 %v1845
      %v1947 = vunpack.c.l.b16 %v1846
      %v1948 = vunpack.c.l.b16 %v1847
      %v1949 = vunpack.c.l.b16 %v1848
      %v1950 = vunpack.c.l.b16 %v1849
      %v1951 = vunpack.c.l.b16 %v1850
      %v1952 = vunpack.c.l.b16 %v1851
      %v1953 = vunpack.c.l.b16 %v1852
      %v1954 = vunpack.c.l.b16 %v1853
      %v1955 = vunpack.c.l.b16 %v1854
      %v1956 = vunpack.c.l.b16 %v1855
      %v1957 = vunpack.c.l.b16 %v1856
      %v1958 = vunpack.c.l.b16 %v1857
      %v1959 = vunpack.c.l.b16 %v1858
      %v1960 = vunpack.c.l.b16 %v1859
      %v1961 = vunpack.c.l.b16 %v1860
      %v1962 = vunpack.c.l.b16 %v1861
      %v1963 = vunpack.c.l.b16 %v1862
      %v1964 = vunpack.c.l.b16 %v1863
      %v1965 = vunpack.c.l.b16 %v1864
      %v1966 = vunpack.c.l.b16 %v1865
      %v1967 = vunpack.c.l.b16 %v1866
      %v1968 = vunpack.c.l.b16 %v1867
      %v1969 = vpack.c.b16 %v1922, %v1921
      %v1970 = vpack.c.b16 %v1924, %v1923
      %v1971 = vpack.c.b16 %v1926, %v1925
      %v1972 = vpack.c.b16 %v1928, %v1927
      %v1973 = vpack.c.b16 %v1930, %v1929
      %v1974 = vpack.c.b16 %v1932, %v1931
      %v1975 = vpack.c.b16 %v1934, %v1933
      %v1976 = vpack.c.b16 %v1936, %v1935
      %v1977 = vpack.c.b16 %v1938, %v1937
      %v1978 = vpack.c.b16 %v1940, %v1939
      %v1979 = vpack.c.b16 %v1942, %v1941
      %v1980 = vpack.c.b16 %v1944, %v1943
      %v1981 = vpack.c.b16 %v1946, %v1945
      %v1982 = vpack.c.b16 %v1948, %v1947
      %v1983 = vpack.c.b16 %v1950, %v1949
      %v1984 = vpack.c.b16 %v1952, %v1951
      %v1985 = vpack.c.b16 %v1954, %v1953
      %v1986 = vpack.c.b16 %v1956, %v1955
      %v1987 = vpack.c.b16 %v1958, %v1957
      %v1988 = vpack.c.b16 %v1960, %v1959
      %v1989 = vpack.c.b16 %v1962, %v1961
      %v1990 = vpack.c.b16 %v1964, %v1963
      %v1991 = vpack.c.b16 %v1966, %v1965
      %v1992 = vpack.c.b16 %v1968, %v1967
      %2017 = vmatpush.bf16.msra.mxu0 %v1976
      %2018 = vmatpush.bf16.msra.mxu0 %v1975
      %2019 = vmatpush.bf16.msra.mxu0 %v1974
      %2020 = vmatpush.bf16.msra.mxu0 %v1973
      %2021 = vmatpush.bf16.msra.mxu0 %v1972
      %2022 = vmatpush.bf16.msra.mxu0 %v1971
      %2023 = vmatpush.bf16.msra.mxu0 %v1970
      %2024 = vmatpush.bf16.msra.mxu0 %v1969
      %2025 = vmatmul.bf16.gmra.mxu0 %v1805
      %v2026 = vpop.f32.mrf.mxu0
      %v2027 = vadd.f32 %v1871, %v2026
      %v2028 = vpop.f32.mrf.mxu0
      %v2029 = vadd.f32 %v1871, %v2028
      %2030 = vdwg.mxu0
      %2031 = vmatpush.bf16.msra.mxu0 %v1984
      %2032 = vmatpush.bf16.msra.mxu0 %v1983
      %2033 = vmatpush.bf16.msra.mxu0 %v1982
      %2034 = vmatpush.bf16.msra.mxu0 %v1981
      %2035 = vmatpush.bf16.msra.mxu0 %v1980
      %2036 = vmatpush.bf16.msra.mxu0 %v1979
      %2037 = vmatpush.bf16.msra.mxu0 %v1978
      %2038 = vmatpush.bf16.msra.mxu0 %v1977
      %2039 = vmatmul.bf16.gmra.mxu0 %v1811
      %v2040 = vpop.f32.mrf.mxu0
      %v2041 = vadd.f32 %v2027, %v2040
      %v2042 = vpop.f32.mrf.mxu0
      %v2043 = vadd.f32 %v2029, %v2042
      %2044 = vdwg.mxu0
      %2045 = vmatpush.bf16.msra.mxu0 %v1992
      %2046 = vmatpush.bf16.msra.mxu0 %v1991
      %2047 = vmatpush.bf16.msra.mxu0 %v1990
      %2048 = vmatpush.bf16.msra.mxu0 %v1989
      %2049 = vmatpush.bf16.msra.mxu0 %v1988
      %2050 = vmatpush.bf16.msra.mxu0 %v1987
      %2051 = vmatpush.bf16.msra.mxu0 %v1986
      %2052 = vmatpush.bf16.msra.mxu0 %v1985
      %2053 = vmatmul.bf16.gmra.mxu0 %v1817
      %v2054 = vpop.f32.mrf.mxu0
      %v2055 = vadd.f32 %v2041, %v2054
      %v2056 = vpop.f32.mrf.mxu0
      %v2057 = vadd.f32 %v2043, %v2056
      %2058 = vdwg.mxu0
      %v2059 = vadd.f32 %v1735, %v2055
      %v2060 = vadd.f32 %v1737, %v2057
      %v2061 = vpack.c.bf16 %v2060, %v2059
      %s2062 = scalar_lea.vmem %s3, 120
      %v2063 = vld [vmem:[%s2062] sm:$0xf]
      %v2064 = vld [vmem:[%s2062 + $0x4] sm:$0xf]
      %v2065 = vld [vmem:[%s2062 + $0x8] sm:$0xf]
      %v2066 = vld [vmem:[%s2062 + $0xc] sm:$0xf]
      %v2067 = vld [vmem:[%s2062 + $0x10] sm:$0xf]
      %v2068 = vld [vmem:[%s2062 + $0x14] sm:$0xf]
      %v2075 = vunpack.c.l.b16 %v2063
      %v2076 = vunpack.c.l.b16 %v2064
      %v2077 = vunpack.c.l.b16 %v2065
      %v2078 = vunpack.c.l.b16 %v2066
      %v2079 = vunpack.c.l.b16 %v2067
      %v2080 = vunpack.c.l.b16 %v2068
      %v2081 = vpack.c.b16 %v2076, %v2075
      %v2082 = vpack.c.b16 %v2078, %v2077
      %v2083 = vpack.c.b16 %v2080, %v2079
      %v2085 = vsel %vm371, %v2081, 0
      %v2088 = vsel %vm371, %v2082, 0
      %v2091 = vsel %vm371, %v2083, 0
      %2093 = vmatpush.bf16.msra.mxu0 0
      %2094 = vmatpush.bf16.msra.mxu0 0
      %2095 = vmatpush.bf16.msra.mxu0 0
      %2096 = vmatpush.bf16.msra.mxu0 0
      %2097 = vmatpush.bf16.msra.mxu0 0
      %2098 = vmatpush.bf16.msra.mxu0 0
      %2099 = vmatpush.bf16.msra.mxu0 0
      %2100 = vmatpush.bf16.msra.mxu0 %v2061
      %2101 = vmatmul.bf16.gmra.mxu0 %v2085
      %v2102 = vpop.f32.mrf.mxu0
      %v2103 = vadd.f32 0.0, %v2102
      %v2104 = vpop.f32.mrf.mxu0
      %v2105 = vadd.f32 0.0, %v2104
      %2106 = vmatmul.bf16.gmra.mxu0 %v2088
      %v2107 = vpop.f32.mrf.mxu0
      %v2108 = vadd.f32 0.0, %v2107
      %v2109 = vpop.f32.mrf.mxu0
      %v2110 = vadd.f32 0.0, %v2109
      %2111 = vmatmul.bf16.gmra.mxu0 %v2091
      %v2112 = vpop.f32.mrf.mxu0
      %v2113 = vadd.f32 0.0, %v2112
      %v2114 = vpop.f32.mrf.mxu0
      %v2115 = vadd.f32 0.0, %v2114
      %2116 = vdwg.mxu0
      %v2117 = vpack.c.bf16 %v2103, %v2103
      %v2118 = vpack.c.bf16 %v2105, %v2105
      %v2119 = vpack.c.bf16 %v2108, %v2108
      %v2120 = vpack.c.bf16 %v2110, %v2110
      %v2121 = vpack.c.bf16 %v2113, %v2113
      %v2122 = vpack.c.bf16 %v2115, %v2115
      %v2125 = vunpack.c.l.b16 %v2117
      %v2126 = vunpack.c.l.b16 %v2118
      %v2127 = vpack.c.b16 %v2126, %v2125
      %v2131 = vunpack.c.l.b16 %v2119
      %v2132 = vunpack.c.l.b16 %v2120
      %v2133 = vpack.c.b16 %v2132, %v2131
      %v2137 = vunpack.c.l.b16 %v2121
      %v2138 = vunpack.c.l.b16 %v2122
      %v2139 = vpack.c.b16 %v2138, %v2137
      %s2141 = scalar_lea.vmem %s4, 960
      %v2142 = vld [vmem:[%s2141] sm:$0xf]
      %v2143 = vld [vmem:[%s2141 + $0x4] sm:$0xf]
      %v2144 = vld [vmem:[%s2141 + $0x8] sm:$0xf]
      %v2145 = vld [vmem:[%s2141 + $0xc] sm:$0xf]
      %v2146 = vld [vmem:[%s2141 + $0x10] sm:$0xf]
      %v2147 = vld [vmem:[%s2141 + $0x14] sm:$0xf]
      %v2148 = vld [vmem:[%s2141 + $0x18] sm:$0xf]
      %v2149 = vld [vmem:[%s2141 + $0x1c] sm:$0xf]
      %v2150 = vld [vmem:[%s2141 + $0x20] sm:$0xf]
      %v2151 = vld [vmem:[%s2141 + $0x24] sm:$0xf]
      %v2152 = vld [vmem:[%s2141 + $0x28] sm:$0xf]
      %v2153 = vld [vmem:[%s2141 + $0x2c] sm:$0xf]
      %v2154 = vld [vmem:[%s2141 + $0x30] sm:$0xf]
      %v2155 = vld [vmem:[%s2141 + $0x34] sm:$0xf]
      %v2156 = vld [vmem:[%s2141 + $0x38] sm:$0xf]
      %v2157 = vld [vmem:[%s2141 + $0x3c] sm:$0xf]
      %v2158 = vld [vmem:[%s2141 + $0x40] sm:$0xf]
      %v2159 = vld [vmem:[%s2141 + $0x44] sm:$0xf]
      %v2160 = vld [vmem:[%s2141 + $0x48] sm:$0xf]
      %v2161 = vld [vmem:[%s2141 + $0x4c] sm:$0xf]
      %v2162 = vld [vmem:[%s2141 + $0x50] sm:$0xf]
      %v2163 = vld [vmem:[%s2141 + $0x54] sm:$0xf]
      %v2164 = vld [vmem:[%s2141 + $0x58] sm:$0xf]
      %v2165 = vld [vmem:[%s2141 + $0x5c] sm:$0xf]
      %v2166 = vld [vmem:[%s2141 + $0x60] sm:$0xf]
      %v2167 = vld [vmem:[%s2141 + $0x64] sm:$0xf]
      %v2168 = vld [vmem:[%s2141 + $0x68] sm:$0xf]
      %v2169 = vld [vmem:[%s2141 + $0x6c] sm:$0xf]
      %v2170 = vld [vmem:[%s2141 + $0x70] sm:$0xf]
      %v2171 = vld [vmem:[%s2141 + $0x74] sm:$0xf]
      %v2172 = vld [vmem:[%s2141 + $0x78] sm:$0xf]
      %v2173 = vld [vmem:[%s2141 + $0x7c] sm:$0xf]
      %v2174 = vld [vmem:[%s2141 + $0x80] sm:$0xf]
      %v2175 = vld [vmem:[%s2141 + $0x84] sm:$0xf]
      %v2176 = vld [vmem:[%s2141 + $0x88] sm:$0xf]
      %v2177 = vld [vmem:[%s2141 + $0x8c] sm:$0xf]
      %v2178 = vld [vmem:[%s2141 + $0x90] sm:$0xf]
      %v2179 = vld [vmem:[%s2141 + $0x94] sm:$0xf]
      %v2180 = vld [vmem:[%s2141 + $0x98] sm:$0xf]
      %v2181 = vld [vmem:[%s2141 + $0x9c] sm:$0xf]
      %v2182 = vld [vmem:[%s2141 + $0xa0] sm:$0xf]
      %v2183 = vld [vmem:[%s2141 + $0xa4] sm:$0xf]
      %v2184 = vld [vmem:[%s2141 + $0xa8] sm:$0xf]
      %v2185 = vld [vmem:[%s2141 + $0xac] sm:$0xf]
      %v2186 = vld [vmem:[%s2141 + $0xb0] sm:$0xf]
      %v2187 = vld [vmem:[%s2141 + $0xb4] sm:$0xf]
      %v2188 = vld [vmem:[%s2141 + $0xb8] sm:$0xf]
      %v2189 = vld [vmem:[%s2141 + $0xbc] sm:$0xf]
      %s2190 = scalar_lea.vmem %s5, 5
      %v2191 = vld [vmem:[%s2190] sm:$0x1]
      %v2193 = vperm.slane %v2191, 0
      %v2243 = vunpack.c.l.b16 %v2142
      %v2244 = vunpack.c.l.b16 %v2143
      %v2245 = vunpack.c.l.b16 %v2144
      %v2246 = vunpack.c.l.b16 %v2145
      %v2247 = vunpack.c.l.b16 %v2146
      %v2248 = vunpack.c.l.b16 %v2147
      %v2249 = vunpack.c.l.b16 %v2148
      %v2250 = vunpack.c.l.b16 %v2149
      %v2251 = vunpack.c.l.b16 %v2150
      %v2252 = vunpack.c.l.b16 %v2151
      %v2253 = vunpack.c.l.b16 %v2152
      %v2254 = vunpack.c.l.b16 %v2153
      %v2255 = vunpack.c.l.b16 %v2154
      %v2256 = vunpack.c.l.b16 %v2155
      %v2257 = vunpack.c.l.b16 %v2156
      %v2258 = vunpack.c.l.b16 %v2157
      %v2259 = vunpack.c.l.b16 %v2158
      %v2260 = vunpack.c.l.b16 %v2159
      %v2261 = vunpack.c.l.b16 %v2160
      %v2262 = vunpack.c.l.b16 %v2161
      %v2263 = vunpack.c.l.b16 %v2162
      %v2264 = vunpack.c.l.b16 %v2163
      %v2265 = vunpack.c.l.b16 %v2164
      %v2266 = vunpack.c.l.b16 %v2165
      %v2267 = vunpack.c.l.b16 %v2166
      %v2268 = vunpack.c.l.b16 %v2167
      %v2269 = vunpack.c.l.b16 %v2168
      %v2270 = vunpack.c.l.b16 %v2169
      %v2271 = vunpack.c.l.b16 %v2170
      %v2272 = vunpack.c.l.b16 %v2171
      %v2273 = vunpack.c.l.b16 %v2172
      %v2274 = vunpack.c.l.b16 %v2173
      %v2275 = vunpack.c.l.b16 %v2174
      %v2276 = vunpack.c.l.b16 %v2175
      %v2277 = vunpack.c.l.b16 %v2176
      %v2278 = vunpack.c.l.b16 %v2177
      %v2279 = vunpack.c.l.b16 %v2178
      %v2280 = vunpack.c.l.b16 %v2179
      %v2281 = vunpack.c.l.b16 %v2180
      %v2282 = vunpack.c.l.b16 %v2181
      %v2283 = vunpack.c.l.b16 %v2182
      %v2284 = vunpack.c.l.b16 %v2183
      %v2285 = vunpack.c.l.b16 %v2184
      %v2286 = vunpack.c.l.b16 %v2185
      %v2287 = vunpack.c.l.b16 %v2186
      %v2288 = vunpack.c.l.b16 %v2187
      %v2289 = vunpack.c.l.b16 %v2188
      %v2290 = vunpack.c.l.b16 %v2189
      %v2291 = vpack.c.b16 %v2244, %v2243
      %v2292 = vpack.c.b16 %v2246, %v2245
      %v2293 = vpack.c.b16 %v2248, %v2247
      %v2294 = vpack.c.b16 %v2250, %v2249
      %v2295 = vpack.c.b16 %v2252, %v2251
      %v2296 = vpack.c.b16 %v2254, %v2253
      %v2297 = vpack.c.b16 %v2256, %v2255
      %v2298 = vpack.c.b16 %v2258, %v2257
      %v2299 = vpack.c.b16 %v2260, %v2259
      %v2300 = vpack.c.b16 %v2262, %v2261
      %v2301 = vpack.c.b16 %v2264, %v2263
      %v2302 = vpack.c.b16 %v2266, %v2265
      %v2303 = vpack.c.b16 %v2268, %v2267
      %v2304 = vpack.c.b16 %v2270, %v2269
      %v2305 = vpack.c.b16 %v2272, %v2271
      %v2306 = vpack.c.b16 %v2274, %v2273
      %v2307 = vpack.c.b16 %v2276, %v2275
      %v2308 = vpack.c.b16 %v2278, %v2277
      %v2309 = vpack.c.b16 %v2280, %v2279
      %v2310 = vpack.c.b16 %v2282, %v2281
      %v2311 = vpack.c.b16 %v2284, %v2283
      %v2312 = vpack.c.b16 %v2286, %v2285
      %v2313 = vpack.c.b16 %v2288, %v2287
      %v2314 = vpack.c.b16 %v2290, %v2289
      %2339 = vmatpush.bf16.msra.mxu0 %v2298
      %2340 = vmatpush.bf16.msra.mxu0 %v2297
      %2341 = vmatpush.bf16.msra.mxu0 %v2296
      %2342 = vmatpush.bf16.msra.mxu0 %v2295
      %2343 = vmatpush.bf16.msra.mxu0 %v2294
      %2344 = vmatpush.bf16.msra.mxu0 %v2293
      %2345 = vmatpush.bf16.msra.mxu0 %v2292
      %2346 = vmatpush.bf16.msra.mxu0 %v2291
      %2347 = vmatmul.bf16.gmra.mxu0 %v2127
      %v2348 = vpop.f32.mrf.mxu0
      %v2349 = vadd.f32 %v2193, %v2348
      %v2350 = vpop.f32.mrf.mxu0
      %v2351 = vadd.f32 %v2193, %v2350
      %2352 = vdwg.mxu0
      %2353 = vmatpush.bf16.msra.mxu0 %v2306
      %2354 = vmatpush.bf16.msra.mxu0 %v2305
      %2355 = vmatpush.bf16.msra.mxu0 %v2304
      %2356 = vmatpush.bf16.msra.mxu0 %v2303
      %2357 = vmatpush.bf16.msra.mxu0 %v2302
      %2358 = vmatpush.bf16.msra.mxu0 %v2301
      %2359 = vmatpush.bf16.msra.mxu0 %v2300
      %2360 = vmatpush.bf16.msra.mxu0 %v2299
      %2361 = vmatmul.bf16.gmra.mxu0 %v2133
      %v2362 = vpop.f32.mrf.mxu0
      %v2363 = vadd.f32 %v2349, %v2362
      %v2364 = vpop.f32.mrf.mxu0
      %v2365 = vadd.f32 %v2351, %v2364
      %2366 = vdwg.mxu0
      %2367 = vmatpush.bf16.msra.mxu0 %v2314
      %2368 = vmatpush.bf16.msra.mxu0 %v2313
      %2369 = vmatpush.bf16.msra.mxu0 %v2312
      %2370 = vmatpush.bf16.msra.mxu0 %v2311
      %2371 = vmatpush.bf16.msra.mxu0 %v2310
      %2372 = vmatpush.bf16.msra.mxu0 %v2309
      %2373 = vmatpush.bf16.msra.mxu0 %v2308
      %2374 = vmatpush.bf16.msra.mxu0 %v2307
      %2375 = vmatmul.bf16.gmra.mxu0 %v2139
      %v2376 = vpop.f32.mrf.mxu0
      %v2377 = vadd.f32 %v2363, %v2376
      %v2378 = vpop.f32.mrf.mxu0
      %v2379 = vadd.f32 %v2365, %v2378
      %2380 = vdwg.mxu0
      %s2381 = scalar_lea.vmem %s6, 8
      %v2382 = vld [vmem:[%s2381] sm:$0xf]
      %v2383 = vld [vmem:[%s2381 + $0x4] sm:$0xf]
      %v2384 = vpack.c.bf16 %v2379, %v2377
      %v2387 = vunpack.c.l.b16 %v2382
      %v2388 = vunpack.c.l.b16 %v2383
      %v2389 = vpack.c.b16 %v2388, %v2387
      %v2391 = vsel %vm371, %v2389, 0
      %2393 = vmatpush.bf16.msra.mxu0 0
      %2394 = vmatpush.bf16.msra.mxu0 0
      %2395 = vmatpush.bf16.msra.mxu0 0
      %2396 = vmatpush.bf16.msra.mxu0 0
      %2397 = vmatpush.bf16.msra.mxu0 0
      %2398 = vmatpush.bf16.msra.mxu0 0
      %2399 = vmatpush.bf16.msra.mxu0 0
      %2400 = vmatpush.bf16.msra.mxu0 %v2384
      %2401 = vmatmul.bf16.gmra.mxu0 %v2391
      %v2402 = vpop.f32.mrf.mxu0
      %v2403 = vadd.f32 0.0, %v2402
      %v2404 = vpop.f32.mrf.mxu0
      %v2405 = vadd.f32 0.0, %v2404
      %2406 = vdwg.mxu0
      %v2407 = vpack.c.bf16 %v2405, %v2403
      %s2408 = scalar_lea.vmem %s7, 64
      %v2409 = vld [vmem:[%s2408] sm:$0xf]
      %v2410 = vld [vmem:[%s2408 + $0x4] sm:$0xf]
      %v2411 = vld [vmem:[%s2408 + $0x8] sm:$0xf]
      %v2412 = vld [vmem:[%s2408 + $0xc] sm:$0xf]
      %v2413 = vld [vmem:[%s2408 + $0x10] sm:$0xf]
      %v2414 = vld [vmem:[%s2408 + $0x14] sm:$0xf]
      %v2415 = vld [vmem:[%s2408 + $0x18] sm:$0xf]
      %v2416 = vld [vmem:[%s2408 + $0x1c] sm:$0xf]
      %v2417 = vld [vmem:[%s2408 + $0x20] sm:$0xf]
      %v2418 = vld [vmem:[%s2408 + $0x24] sm:$0xf]
      %v2419 = vld [vmem:[%s2408 + $0x28] sm:$0xf]
      %v2420 = vld [vmem:[%s2408 + $0x2c] sm:$0xf]
      %v2421 = vld [vmem:[%s2408 + $0x30] sm:$0xf]
      %v2422 = vld [vmem:[%s2408 + $0x34] sm:$0xf]
      %v2423 = vld [vmem:[%s2408 + $0x38] sm:$0xf]
      %v2424 = vld [vmem:[%s2408 + $0x3c] sm:$0xf]
      %v2441 = vunpack.c.l.b16 %v2409
      %v2442 = vunpack.c.l.b16 %v2410
      %v2443 = vunpack.c.l.b16 %v2411
      %v2444 = vunpack.c.l.b16 %v2412
      %v2445 = vunpack.c.l.b16 %v2413
      %v2446 = vunpack.c.l.b16 %v2414
      %v2447 = vunpack.c.l.b16 %v2415
      %v2448 = vunpack.c.l.b16 %v2416
      %v2449 = vunpack.c.l.b16 %v2417
      %v2450 = vunpack.c.l.b16 %v2418
      %v2451 = vunpack.c.l.b16 %v2419
      %v2452 = vunpack.c.l.b16 %v2420
      %v2453 = vunpack.c.l.b16 %v2421
      %v2454 = vunpack.c.l.b16 %v2422
      %v2455 = vunpack.c.l.b16 %v2423
      %v2456 = vunpack.c.l.b16 %v2424
      %v2457 = vpack.c.b16 %v2442, %v2441
      %v2458 = vpack.c.b16 %v2444, %v2443
      %v2459 = vpack.c.b16 %v2446, %v2445
      %v2460 = vpack.c.b16 %v2448, %v2447
      %v2461 = vpack.c.b16 %v2450, %v2449
      %v2462 = vpack.c.b16 %v2452, %v2451
      %v2463 = vpack.c.b16 %v2454, %v2453
      %v2464 = vpack.c.b16 %v2456, %v2455
      %2473 = vmatpush.bf16.msra.mxu0 %v2464
      %2474 = vmatpush.bf16.msra.mxu0 %v2463
      %2475 = vmatpush.bf16.msra.mxu0 %v2462
      %2476 = vmatpush.bf16.msra.mxu0 %v2461
      %2477 = vmatpush.bf16.msra.mxu0 %v2460
      %2478 = vmatpush.bf16.msra.mxu0 %v2459
      %2479 = vmatpush.bf16.msra.mxu0 %v2458
      %2480 = vmatpush.bf16.msra.mxu0 %v2457
      %2481 = vmatmul.bf16.gmra.mxu0 %v2407
      %v2482 = vpop.f32.mrf.mxu0
      %v2483 = vadd.f32 0.0, %v2482
      %v2484 = vpop.f32.mrf.mxu0
      %v2485 = vadd.f32 0.0, %v2484
      %2486 = vdwg.mxu0
      %v2487 = vadd.f32 %v1417, %v2483
      %v2488 = vadd.f32 %v1418, %v2485
      %v2489 = vpack.c.bf16 %v2488, %v2487
      %s2490 = scalar_lea.vmem %s3, 144
      %v2491 = vld [vmem:[%s2490] sm:$0xf]
      %v2492 = vld [vmem:[%s2490 + $0x4] sm:$0xf]
      %v2493 = vld [vmem:[%s2490 + $0x8] sm:$0xf]
      %v2494 = vld [vmem:[%s2490 + $0xc] sm:$0xf]
      %v2495 = vld [vmem:[%s2490 + $0x10] sm:$0xf]
      %v2496 = vld [vmem:[%s2490 + $0x14] sm:$0xf]
      %v2503 = vunpack.c.l.b16 %v2491
      %v2504 = vunpack.c.l.b16 %v2492
      %v2505 = vunpack.c.l.b16 %v2493
      %v2506 = vunpack.c.l.b16 %v2494
      %v2507 = vunpack.c.l.b16 %v2495
      %v2508 = vunpack.c.l.b16 %v2496
      %v2509 = vpack.c.b16 %v2504, %v2503
      %v2510 = vpack.c.b16 %v2506, %v2505
      %v2511 = vpack.c.b16 %v2508, %v2507
      %v2513 = vsel %vm371, %v2509, 0
      %v2516 = vsel %vm371, %v2510, 0
      %v2519 = vsel %vm371, %v2511, 0
      %2521 = vmatpush.bf16.msra.mxu0 0
      %2522 = vmatpush.bf16.msra.mxu0 0
      %2523 = vmatpush.bf16.msra.mxu0 0
      %2524 = vmatpush.bf16.msra.mxu0 0
      %2525 = vmatpush.bf16.msra.mxu0 0
      %2526 = vmatpush.bf16.msra.mxu0 0
      %2527 = vmatpush.bf16.msra.mxu0 0
      %2528 = vmatpush.bf16.msra.mxu0 %v2489
      %2529 = vmatmul.bf16.gmra.mxu0 %v2513
      %v2530 = vpop.f32.mrf.mxu0
      %v2531 = vadd.f32 0.0, %v2530
      %v2532 = vpop.f32.mrf.mxu0
      %v2533 = vadd.f32 0.0, %v2532
      %2534 = vmatmul.bf16.gmra.mxu0 %v2516
      %v2535 = vpop.f32.mrf.mxu0
      %v2536 = vadd.f32 0.0, %v2535
      %v2537 = vpop.f32.mrf.mxu0
      %v2538 = vadd.f32 0.0, %v2537
      %2539 = vmatmul.bf16.gmra.mxu0 %v2519
      %v2540 = vpop.f32.mrf.mxu0
      %v2541 = vadd.f32 0.0, %v2540
      %v2542 = vpop.f32.mrf.mxu0
      %v2543 = vadd.f32 0.0, %v2542
      %2544 = vdwg.mxu0
      %v2545 = vpack.c.bf16 %v2531, %v2531
      %v2546 = vpack.c.bf16 %v2533, %v2533
      %v2547 = vpack.c.bf16 %v2536, %v2536
      %v2548 = vpack.c.bf16 %v2538, %v2538
      %v2549 = vpack.c.bf16 %v2541, %v2541
      %v2550 = vpack.c.bf16 %v2543, %v2543
      %v2553 = vunpack.c.l.b16 %v2545
      %v2554 = vunpack.c.l.b16 %v2546
      %v2555 = vpack.c.b16 %v2554, %v2553
      %v2559 = vunpack.c.l.b16 %v2547
      %v2560 = vunpack.c.l.b16 %v2548
      %v2561 = vpack.c.b16 %v2560, %v2559
      %v2565 = vunpack.c.l.b16 %v2549
      %v2566 = vunpack.c.l.b16 %v2550
      %v2567 = vpack.c.b16 %v2566, %v2565
      %s2569 = scalar_lea.vmem %s4, 1152
      %v2570 = vld [vmem:[%s2569] sm:$0xf]
      %v2571 = vld [vmem:[%s2569 + $0x4] sm:$0xf]
      %v2572 = vld [vmem:[%s2569 + $0x8] sm:$0xf]
      %v2573 = vld [vmem:[%s2569 + $0xc] sm:$0xf]
      %v2574 = vld [vmem:[%s2569 + $0x10] sm:$0xf]
      %v2575 = vld [vmem:[%s2569 + $0x14] sm:$0xf]
      %v2576 = vld [vmem:[%s2569 + $0x18] sm:$0xf]
      %v2577 = vld [vmem:[%s2569 + $0x1c] sm:$0xf]
      %v2578 = vld [vmem:[%s2569 + $0x20] sm:$0xf]
      %v2579 = vld [vmem:[%s2569 + $0x24] sm:$0xf]
      %v2580 = vld [vmem:[%s2569 + $0x28] sm:$0xf]
      %v2581 = vld [vmem:[%s2569 + $0x2c] sm:$0xf]
      %v2582 = vld [vmem:[%s2569 + $0x30] sm:$0xf]
      %v2583 = vld [vmem:[%s2569 + $0x34] sm:$0xf]
      %v2584 = vld [vmem:[%s2569 + $0x38] sm:$0xf]
      %v2585 = vld [vmem:[%s2569 + $0x3c] sm:$0xf]
      %v2586 = vld [vmem:[%s2569 + $0x40] sm:$0xf]
      %v2587 = vld [vmem:[%s2569 + $0x44] sm:$0xf]
      %v2588 = vld [vmem:[%s2569 + $0x48] sm:$0xf]
      %v2589 = vld [vmem:[%s2569 + $0x4c] sm:$0xf]
      %v2590 = vld [vmem:[%s2569 + $0x50] sm:$0xf]
      %v2591 = vld [vmem:[%s2569 + $0x54] sm:$0xf]
      %v2592 = vld [vmem:[%s2569 + $0x58] sm:$0xf]
      %v2593 = vld [vmem:[%s2569 + $0x5c] sm:$0xf]
      %v2594 = vld [vmem:[%s2569 + $0x60] sm:$0xf]
      %v2595 = vld [vmem:[%s2569 + $0x64] sm:$0xf]
      %v2596 = vld [vmem:[%s2569 + $0x68] sm:$0xf]
      %v2597 = vld [vmem:[%s2569 + $0x6c] sm:$0xf]
      %v2598 = vld [vmem:[%s2569 + $0x70] sm:$0xf]
      %v2599 = vld [vmem:[%s2569 + $0x74] sm:$0xf]
      %v2600 = vld [vmem:[%s2569 + $0x78] sm:$0xf]
      %v2601 = vld [vmem:[%s2569 + $0x7c] sm:$0xf]
      %v2602 = vld [vmem:[%s2569 + $0x80] sm:$0xf]
      %v2603 = vld [vmem:[%s2569 + $0x84] sm:$0xf]
      %v2604 = vld [vmem:[%s2569 + $0x88] sm:$0xf]
      %v2605 = vld [vmem:[%s2569 + $0x8c] sm:$0xf]
      %v2606 = vld [vmem:[%s2569 + $0x90] sm:$0xf]
      %v2607 = vld [vmem:[%s2569 + $0x94] sm:$0xf]
      %v2608 = vld [vmem:[%s2569 + $0x98] sm:$0xf]
      %v2609 = vld [vmem:[%s2569 + $0x9c] sm:$0xf]
      %v2610 = vld [vmem:[%s2569 + $0xa0] sm:$0xf]
      %v2611 = vld [vmem:[%s2569 + $0xa4] sm:$0xf]
      %v2612 = vld [vmem:[%s2569 + $0xa8] sm:$0xf]
      %v2613 = vld [vmem:[%s2569 + $0xac] sm:$0xf]
      %v2614 = vld [vmem:[%s2569 + $0xb0] sm:$0xf]
      %v2615 = vld [vmem:[%s2569 + $0xb4] sm:$0xf]
      %v2616 = vld [vmem:[%s2569 + $0xb8] sm:$0xf]
      %v2617 = vld [vmem:[%s2569 + $0xbc] sm:$0xf]
      %s2618 = scalar_lea.vmem %s5, 6
      %v2619 = vld [vmem:[%s2618] sm:$0x1]
      %v2621 = vperm.slane %v2619, 0
      %v2671 = vunpack.c.l.b16 %v2570
      %v2672 = vunpack.c.l.b16 %v2571
      %v2673 = vunpack.c.l.b16 %v2572
      %v2674 = vunpack.c.l.b16 %v2573
      %v2675 = vunpack.c.l.b16 %v2574
      %v2676 = vunpack.c.l.b16 %v2575
      %v2677 = vunpack.c.l.b16 %v2576
      %v2678 = vunpack.c.l.b16 %v2577
      %v2679 = vunpack.c.l.b16 %v2578
      %v2680 = vunpack.c.l.b16 %v2579
      %v2681 = vunpack.c.l.b16 %v2580
      %v2682 = vunpack.c.l.b16 %v2581
      %v2683 = vunpack.c.l.b16 %v2582
      %v2684 = vunpack.c.l.b16 %v2583
      %v2685 = vunpack.c.l.b16 %v2584
      %v2686 = vunpack.c.l.b16 %v2585
      %v2687 = vunpack.c.l.b16 %v2586
      %v2688 = vunpack.c.l.b16 %v2587
      %v2689 = vunpack.c.l.b16 %v2588
      %v2690 = vunpack.c.l.b16 %v2589
      %v2691 = vunpack.c.l.b16 %v2590
      %v2692 = vunpack.c.l.b16 %v2591
      %v2693 = vunpack.c.l.b16 %v2592
      %v2694 = vunpack.c.l.b16 %v2593
      %v2695 = vunpack.c.l.b16 %v2594
      %v2696 = vunpack.c.l.b16 %v2595
      %v2697 = vunpack.c.l.b16 %v2596
      %v2698 = vunpack.c.l.b16 %v2597
      %v2699 = vunpack.c.l.b16 %v2598
      %v2700 = vunpack.c.l.b16 %v2599
      %v2701 = vunpack.c.l.b16 %v2600
      %v2702 = vunpack.c.l.b16 %v2601
      %v2703 = vunpack.c.l.b16 %v2602
      %v2704 = vunpack.c.l.b16 %v2603
      %v2705 = vunpack.c.l.b16 %v2604
      %v2706 = vunpack.c.l.b16 %v2605
      %v2707 = vunpack.c.l.b16 %v2606
      %v2708 = vunpack.c.l.b16 %v2607
      %v2709 = vunpack.c.l.b16 %v2608
      %v2710 = vunpack.c.l.b16 %v2609
      %v2711 = vunpack.c.l.b16 %v2610
      %v2712 = vunpack.c.l.b16 %v2611
      %v2713 = vunpack.c.l.b16 %v2612
      %v2714 = vunpack.c.l.b16 %v2613
      %v2715 = vunpack.c.l.b16 %v2614
      %v2716 = vunpack.c.l.b16 %v2615
      %v2717 = vunpack.c.l.b16 %v2616
      %v2718 = vunpack.c.l.b16 %v2617
      %v2719 = vpack.c.b16 %v2672, %v2671
      %v2720 = vpack.c.b16 %v2674, %v2673
      %v2721 = vpack.c.b16 %v2676, %v2675
      %v2722 = vpack.c.b16 %v2678, %v2677
      %v2723 = vpack.c.b16 %v2680, %v2679
      %v2724 = vpack.c.b16 %v2682, %v2681
      %v2725 = vpack.c.b16 %v2684, %v2683
      %v2726 = vpack.c.b16 %v2686, %v2685
      %v2727 = vpack.c.b16 %v2688, %v2687
      %v2728 = vpack.c.b16 %v2690, %v2689
      %v2729 = vpack.c.b16 %v2692, %v2691
      %v2730 = vpack.c.b16 %v2694, %v2693
      %v2731 = vpack.c.b16 %v2696, %v2695
      %v2732 = vpack.c.b16 %v2698, %v2697
      %v2733 = vpack.c.b16 %v2700, %v2699
      %v2734 = vpack.c.b16 %v2702, %v2701
      %v2735 = vpack.c.b16 %v2704, %v2703
      %v2736 = vpack.c.b16 %v2706, %v2705
      %v2737 = vpack.c.b16 %v2708, %v2707
      %v2738 = vpack.c.b16 %v2710, %v2709
      %v2739 = vpack.c.b16 %v2712, %v2711
      %v2740 = vpack.c.b16 %v2714, %v2713
      %v2741 = vpack.c.b16 %v2716, %v2715
      %v2742 = vpack.c.b16 %v2718, %v2717
      %2767 = vmatpush.bf16.msra.mxu0 %v2726
      %2768 = vmatpush.bf16.msra.mxu0 %v2725
      %2769 = vmatpush.bf16.msra.mxu0 %v2724
      %2770 = vmatpush.bf16.msra.mxu0 %v2723
      %2771 = vmatpush.bf16.msra.mxu0 %v2722
      %2772 = vmatpush.bf16.msra.mxu0 %v2721
      %2773 = vmatpush.bf16.msra.mxu0 %v2720
      %2774 = vmatpush.bf16.msra.mxu0 %v2719
      %2775 = vmatmul.bf16.gmra.mxu0 %v2555
      %v2776 = vpop.f32.mrf.mxu0
      %v2777 = vadd.f32 %v2621, %v2776
      %v2778 = vpop.f32.mrf.mxu0
      %v2779 = vadd.f32 %v2621, %v2778
      %2780 = vdwg.mxu0
      %2781 = vmatpush.bf16.msra.mxu0 %v2734
      %2782 = vmatpush.bf16.msra.mxu0 %v2733
      %2783 = vmatpush.bf16.msra.mxu0 %v2732
      %2784 = vmatpush.bf16.msra.mxu0 %v2731
      %2785 = vmatpush.bf16.msra.mxu0 %v2730
      %2786 = vmatpush.bf16.msra.mxu0 %v2729
      %2787 = vmatpush.bf16.msra.mxu0 %v2728
      %2788 = vmatpush.bf16.msra.mxu0 %v2727
      %2789 = vmatmul.bf16.gmra.mxu0 %v2561
      %v2790 = vpop.f32.mrf.mxu0
      %v2791 = vadd.f32 %v2777, %v2790
      %v2792 = vpop.f32.mrf.mxu0
      %v2793 = vadd.f32 %v2779, %v2792
      %2794 = vdwg.mxu0
      %2795 = vmatpush.bf16.msra.mxu0 %v2742
      %2796 = vmatpush.bf16.msra.mxu0 %v2741
      %2797 = vmatpush.bf16.msra.mxu0 %v2740
      %2798 = vmatpush.bf16.msra.mxu0 %v2739
      %2799 = vmatpush.bf16.msra.mxu0 %v2738
      %2800 = vmatpush.bf16.msra.mxu0 %v2737
      %2801 = vmatpush.bf16.msra.mxu0 %v2736
      %2802 = vmatpush.bf16.msra.mxu0 %v2735
      %2803 = vmatmul.bf16.gmra.mxu0 %v2567
      %v2804 = vpop.f32.mrf.mxu0
      %v2805 = vadd.f32 %v2791, %v2804
      %v2806 = vpop.f32.mrf.mxu0
      %v2807 = vadd.f32 %v2793, %v2806
      %2808 = vdwg.mxu0
      %s2809 = scalar_lea.vmem %s6, 16
      %v2810 = vld [vmem:[%s2809] sm:$0xf]
      %v2811 = vld [vmem:[%s2809 + $0x4] sm:$0xf]
      %v2812 = vpack.c.bf16 %v2807, %v2805
      %v2815 = vunpack.c.l.b16 %v2810
      %v2816 = vunpack.c.l.b16 %v2811
      %v2817 = vpack.c.b16 %v2816, %v2815
      %v2819 = vsel %vm371, %v2817, 0
      %2821 = vmatpush.bf16.msra.mxu0 0
      %2822 = vmatpush.bf16.msra.mxu0 0
      %2823 = vmatpush.bf16.msra.mxu0 0
      %2824 = vmatpush.bf16.msra.mxu0 0
      %2825 = vmatpush.bf16.msra.mxu0 0
      %2826 = vmatpush.bf16.msra.mxu0 0
      %2827 = vmatpush.bf16.msra.mxu0 0
      %2828 = vmatpush.bf16.msra.mxu0 %v2812
      %2829 = vmatmul.bf16.gmra.mxu0 %v2819
      %v2830 = vpop.f32.mrf.mxu0
      %v2831 = vadd.f32 0.0, %v2830
      %v2832 = vpop.f32.mrf.mxu0
      %v2833 = vadd.f32 0.0, %v2832
      %2834 = vdwg.mxu0
      %v2835 = vpack.c.bf16 %v2833, %v2831
      %s2836 = scalar_lea.vmem %s7, 128
      %v2837 = vld [vmem:[%s2836] sm:$0xf]
      %v2838 = vld [vmem:[%s2836 + $0x4] sm:$0xf]
      %v2839 = vld [vmem:[%s2836 + $0x8] sm:$0xf]
      %v2840 = vld [vmem:[%s2836 + $0xc] sm:$0xf]
      %v2841 = vld [vmem:[%s2836 + $0x10] sm:$0xf]
      %v2842 = vld [vmem:[%s2836 + $0x14] sm:$0xf]
      %v2843 = vld [vmem:[%s2836 + $0x18] sm:$0xf]
      %v2844 = vld [vmem:[%s2836 + $0x1c] sm:$0xf]
      %v2845 = vld [vmem:[%s2836 + $0x20] sm:$0xf]
      %v2846 = vld [vmem:[%s2836 + $0x24] sm:$0xf]
      %v2847 = vld [vmem:[%s2836 + $0x28] sm:$0xf]
      %v2848 = vld [vmem:[%s2836 + $0x2c] sm:$0xf]
      %v2849 = vld [vmem:[%s2836 + $0x30] sm:$0xf]
      %v2850 = vld [vmem:[%s2836 + $0x34] sm:$0xf]
      %v2851 = vld [vmem:[%s2836 + $0x38] sm:$0xf]
      %v2852 = vld [vmem:[%s2836 + $0x3c] sm:$0xf]
      %v2869 = vunpack.c.l.b16 %v2837
      %v2870 = vunpack.c.l.b16 %v2838
      %v2871 = vunpack.c.l.b16 %v2839
      %v2872 = vunpack.c.l.b16 %v2840
      %v2873 = vunpack.c.l.b16 %v2841
      %v2874 = vunpack.c.l.b16 %v2842
      %v2875 = vunpack.c.l.b16 %v2843
      %v2876 = vunpack.c.l.b16 %v2844
      %v2877 = vunpack.c.l.b16 %v2845
      %v2878 = vunpack.c.l.b16 %v2846
      %v2879 = vunpack.c.l.b16 %v2847
      %v2880 = vunpack.c.l.b16 %v2848
      %v2881 = vunpack.c.l.b16 %v2849
      %v2882 = vunpack.c.l.b16 %v2850
      %v2883 = vunpack.c.l.b16 %v2851
      %v2884 = vunpack.c.l.b16 %v2852
      %v2885 = vpack.c.b16 %v2870, %v2869
      %v2886 = vpack.c.b16 %v2872, %v2871
      %v2887 = vpack.c.b16 %v2874, %v2873
      %v2888 = vpack.c.b16 %v2876, %v2875
      %v2889 = vpack.c.b16 %v2878, %v2877
      %v2890 = vpack.c.b16 %v2880, %v2879
      %v2891 = vpack.c.b16 %v2882, %v2881
      %v2892 = vpack.c.b16 %v2884, %v2883
      %2901 = vmatpush.bf16.msra.mxu0 %v2892
      %2902 = vmatpush.bf16.msra.mxu0 %v2891
      %2903 = vmatpush.bf16.msra.mxu0 %v2890
      %2904 = vmatpush.bf16.msra.mxu0 %v2889
      %2905 = vmatpush.bf16.msra.mxu0 %v2888
      %2906 = vmatpush.bf16.msra.mxu0 %v2887
      %2907 = vmatpush.bf16.msra.mxu0 %v2886
      %2908 = vmatpush.bf16.msra.mxu0 %v2885
      %2909 = vmatmul.bf16.gmra.mxu0 %v2835
      %v2910 = vpop.f32.mrf.mxu0
      %v2911 = vadd.f32 0.0, %v2910
      %v2912 = vpop.f32.mrf.mxu0
      %v2913 = vadd.f32 0.0, %v2912
      %2914 = vdwg.mxu0
      %v2915 = vadd.f32 %v987, %v2911
      %v2916 = vadd.f32 %v989, %v2913
      %v2917 = vpack.c.bf16 %v2916, %v2915
      %s2918 = scalar_lea.vmem %s3, 168
      %v2919 = vld [vmem:[%s2918] sm:$0xf]
      %v2920 = vld [vmem:[%s2918 + $0x4] sm:$0xf]
      %v2921 = vld [vmem:[%s2918 + $0x8] sm:$0xf]
      %v2922 = vld [vmem:[%s2918 + $0xc] sm:$0xf]
      %v2923 = vld [vmem:[%s2918 + $0x10] sm:$0xf]
      %v2924 = vld [vmem:[%s2918 + $0x14] sm:$0xf]
      %v2931 = vunpack.c.l.b16 %v2919
      %v2932 = vunpack.c.l.b16 %v2920
      %v2933 = vunpack.c.l.b16 %v2921
      %v2934 = vunpack.c.l.b16 %v2922
      %v2935 = vunpack.c.l.b16 %v2923
      %v2936 = vunpack.c.l.b16 %v2924
      %v2937 = vpack.c.b16 %v2932, %v2931
      %v2938 = vpack.c.b16 %v2934, %v2933
      %v2939 = vpack.c.b16 %v2936, %v2935
      %v2941 = vsel %vm371, %v2937, 0
      %v2944 = vsel %vm371, %v2938, 0
      %v2947 = vsel %vm371, %v2939, 0
      %2949 = vmatpush.bf16.msra.mxu0 0
      %2950 = vmatpush.bf16.msra.mxu0 0
      %2951 = vmatpush.bf16.msra.mxu0 0
      %2952 = vmatpush.bf16.msra.mxu0 0
      %2953 = vmatpush.bf16.msra.mxu0 0
      %2954 = vmatpush.bf16.msra.mxu0 0
      %2955 = vmatpush.bf16.msra.mxu0 0
      %2956 = vmatpush.bf16.msra.mxu0 %v2917
      %2957 = vmatmul.bf16.gmra.mxu0 %v2941
      %v2958 = vpop.f32.mrf.mxu0
      %v2959 = vadd.f32 0.0, %v2958
      %v2960 = vpop.f32.mrf.mxu0
      %v2961 = vadd.f32 0.0, %v2960
      %2962 = vmatmul.bf16.gmra.mxu0 %v2944
      %v2963 = vpop.f32.mrf.mxu0
      %v2964 = vadd.f32 0.0, %v2963
      %v2965 = vpop.f32.mrf.mxu0
      %v2966 = vadd.f32 0.0, %v2965
      %2967 = vmatmul.bf16.gmra.mxu0 %v2947
      %v2968 = vpop.f32.mrf.mxu0
      %v2969 = vadd.f32 0.0, %v2968
      %v2970 = vpop.f32.mrf.mxu0
      %v2971 = vadd.f32 0.0, %v2970
      %2972 = vdwg.mxu0
      %v2973 = vpack.c.bf16 %v2959, %v2959
      %v2974 = vpack.c.bf16 %v2961, %v2961
      %v2975 = vpack.c.bf16 %v2964, %v2964
      %v2976 = vpack.c.bf16 %v2966, %v2966
      %v2977 = vpack.c.bf16 %v2969, %v2969
      %v2978 = vpack.c.bf16 %v2971, %v2971
      %v2981 = vunpack.c.l.b16 %v2973
      %v2982 = vunpack.c.l.b16 %v2974
      %v2983 = vpack.c.b16 %v2982, %v2981
      %v2987 = vunpack.c.l.b16 %v2975
      %v2988 = vunpack.c.l.b16 %v2976
      %v2989 = vpack.c.b16 %v2988, %v2987
      %v2993 = vunpack.c.l.b16 %v2977
      %v2994 = vunpack.c.l.b16 %v2978
      %v2995 = vpack.c.b16 %v2994, %v2993
      %s2997 = scalar_lea.vmem %s4, 1344
      %v2998 = vld [vmem:[%s2997] sm:$0xf]
      %v2999 = vld [vmem:[%s2997 + $0x4] sm:$0xf]
      %v3000 = vld [vmem:[%s2997 + $0x8] sm:$0xf]
      %v3001 = vld [vmem:[%s2997 + $0xc] sm:$0xf]
      %v3002 = vld [vmem:[%s2997 + $0x10] sm:$0xf]
      %v3003 = vld [vmem:[%s2997 + $0x14] sm:$0xf]
      %v3004 = vld [vmem:[%s2997 + $0x18] sm:$0xf]
      %v3005 = vld [vmem:[%s2997 + $0x1c] sm:$0xf]
      %v3006 = vld [vmem:[%s2997 + $0x20] sm:$0xf]
      %v3007 = vld [vmem:[%s2997 + $0x24] sm:$0xf]
      %v3008 = vld [vmem:[%s2997 + $0x28] sm:$0xf]
      %v3009 = vld [vmem:[%s2997 + $0x2c] sm:$0xf]
      %v3010 = vld [vmem:[%s2997 + $0x30] sm:$0xf]
      %v3011 = vld [vmem:[%s2997 + $0x34] sm:$0xf]
      %v3012 = vld [vmem:[%s2997 + $0x38] sm:$0xf]
      %v3013 = vld [vmem:[%s2997 + $0x3c] sm:$0xf]
      %v3014 = vld [vmem:[%s2997 + $0x40] sm:$0xf]
      %v3015 = vld [vmem:[%s2997 + $0x44] sm:$0xf]
      %v3016 = vld [vmem:[%s2997 + $0x48] sm:$0xf]
      %v3017 = vld [vmem:[%s2997 + $0x4c] sm:$0xf]
      %v3018 = vld [vmem:[%s2997 + $0x50] sm:$0xf]
      %v3019 = vld [vmem:[%s2997 + $0x54] sm:$0xf]
      %v3020 = vld [vmem:[%s2997 + $0x58] sm:$0xf]
      %v3021 = vld [vmem:[%s2997 + $0x5c] sm:$0xf]
      %v3022 = vld [vmem:[%s2997 + $0x60] sm:$0xf]
      %v3023 = vld [vmem:[%s2997 + $0x64] sm:$0xf]
      %v3024 = vld [vmem:[%s2997 + $0x68] sm:$0xf]
      %v3025 = vld [vmem:[%s2997 + $0x6c] sm:$0xf]
      %v3026 = vld [vmem:[%s2997 + $0x70] sm:$0xf]
      %v3027 = vld [vmem:[%s2997 + $0x74] sm:$0xf]
      %v3028 = vld [vmem:[%s2997 + $0x78] sm:$0xf]
      %v3029 = vld [vmem:[%s2997 + $0x7c] sm:$0xf]
      %v3030 = vld [vmem:[%s2997 + $0x80] sm:$0xf]
      %v3031 = vld [vmem:[%s2997 + $0x84] sm:$0xf]
      %v3032 = vld [vmem:[%s2997 + $0x88] sm:$0xf]
      %v3033 = vld [vmem:[%s2997 + $0x8c] sm:$0xf]
      %v3034 = vld [vmem:[%s2997 + $0x90] sm:$0xf]
      %v3035 = vld [vmem:[%s2997 + $0x94] sm:$0xf]
      %v3036 = vld [vmem:[%s2997 + $0x98] sm:$0xf]
      %v3037 = vld [vmem:[%s2997 + $0x9c] sm:$0xf]
      %v3038 = vld [vmem:[%s2997 + $0xa0] sm:$0xf]
      %v3039 = vld [vmem:[%s2997 + $0xa4] sm:$0xf]
      %v3040 = vld [vmem:[%s2997 + $0xa8] sm:$0xf]
      %v3041 = vld [vmem:[%s2997 + $0xac] sm:$0xf]
      %v3042 = vld [vmem:[%s2997 + $0xb0] sm:$0xf]
      %v3043 = vld [vmem:[%s2997 + $0xb4] sm:$0xf]
      %v3044 = vld [vmem:[%s2997 + $0xb8] sm:$0xf]
      %v3045 = vld [vmem:[%s2997 + $0xbc] sm:$0xf]
      %s3046 = scalar_lea.vmem %s5, 7
      %v3047 = vld [vmem:[%s3046] sm:$0x1]
      %v3049 = vperm.slane %v3047, 0
      %v3099 = vunpack.c.l.b16 %v2998
      %v3100 = vunpack.c.l.b16 %v2999
      %v3101 = vunpack.c.l.b16 %v3000
      %v3102 = vunpack.c.l.b16 %v3001
      %v3103 = vunpack.c.l.b16 %v3002
      %v3104 = vunpack.c.l.b16 %v3003
      %v3105 = vunpack.c.l.b16 %v3004
      %v3106 = vunpack.c.l.b16 %v3005
      %v3107 = vunpack.c.l.b16 %v3006
      %v3108 = vunpack.c.l.b16 %v3007
      %v3109 = vunpack.c.l.b16 %v3008
      %v3110 = vunpack.c.l.b16 %v3009
      %v3111 = vunpack.c.l.b16 %v3010
      %v3112 = vunpack.c.l.b16 %v3011
      %v3113 = vunpack.c.l.b16 %v3012
      %v3114 = vunpack.c.l.b16 %v3013
      %v3115 = vunpack.c.l.b16 %v3014
      %v3116 = vunpack.c.l.b16 %v3015
      %v3117 = vunpack.c.l.b16 %v3016
      %v3118 = vunpack.c.l.b16 %v3017
      %v3119 = vunpack.c.l.b16 %v3018
      %v3120 = vunpack.c.l.b16 %v3019
      %v3121 = vunpack.c.l.b16 %v3020
      %v3122 = vunpack.c.l.b16 %v3021
      %v3123 = vunpack.c.l.b16 %v3022
      %v3124 = vunpack.c.l.b16 %v3023
      %v3125 = vunpack.c.l.b16 %v3024
      %v3126 = vunpack.c.l.b16 %v3025
      %v3127 = vunpack.c.l.b16 %v3026
      %v3128 = vunpack.c.l.b16 %v3027
      %v3129 = vunpack.c.l.b16 %v3028
      %v3130 = vunpack.c.l.b16 %v3029
      %v3131 = vunpack.c.l.b16 %v3030
      %v3132 = vunpack.c.l.b16 %v3031
      %v3133 = vunpack.c.l.b16 %v3032
      %v3134 = vunpack.c.l.b16 %v3033
      %v3135 = vunpack.c.l.b16 %v3034
      %v3136 = vunpack.c.l.b16 %v3035
      %v3137 = vunpack.c.l.b16 %v3036
      %v3138 = vunpack.c.l.b16 %v3037
      %v3139 = vunpack.c.l.b16 %v3038
      %v3140 = vunpack.c.l.b16 %v3039
      %v3141 = vunpack.c.l.b16 %v3040
      %v3142 = vunpack.c.l.b16 %v3041
      %v3143 = vunpack.c.l.b16 %v3042
      %v3144 = vunpack.c.l.b16 %v3043
      %v3145 = vunpack.c.l.b16 %v3044
      %v3146 = vunpack.c.l.b16 %v3045
      %v3147 = vpack.c.b16 %v3100, %v3099
      %v3148 = vpack.c.b16 %v3102, %v3101
      %v3149 = vpack.c.b16 %v3104, %v3103
      %v3150 = vpack.c.b16 %v3106, %v3105
      %v3151 = vpack.c.b16 %v3108, %v3107
      %v3152 = vpack.c.b16 %v3110, %v3109
      %v3153 = vpack.c.b16 %v3112, %v3111
      %v3154 = vpack.c.b16 %v3114, %v3113
      %v3155 = vpack.c.b16 %v3116, %v3115
      %v3156 = vpack.c.b16 %v3118, %v3117
      %v3157 = vpack.c.b16 %v3120, %v3119
      %v3158 = vpack.c.b16 %v3122, %v3121
      %v3159 = vpack.c.b16 %v3124, %v3123
      %v3160 = vpack.c.b16 %v3126, %v3125
      %v3161 = vpack.c.b16 %v3128, %v3127
      %v3162 = vpack.c.b16 %v3130, %v3129
      %v3163 = vpack.c.b16 %v3132, %v3131
      %v3164 = vpack.c.b16 %v3134, %v3133
      %v3165 = vpack.c.b16 %v3136, %v3135
      %v3166 = vpack.c.b16 %v3138, %v3137
      %v3167 = vpack.c.b16 %v3140, %v3139
      %v3168 = vpack.c.b16 %v3142, %v3141
      %v3169 = vpack.c.b16 %v3144, %v3143
      %v3170 = vpack.c.b16 %v3146, %v3145
      %3195 = vmatpush.bf16.msra.mxu0 %v3154
      %3196 = vmatpush.bf16.msra.mxu0 %v3153
      %3197 = vmatpush.bf16.msra.mxu0 %v3152
      %3198 = vmatpush.bf16.msra.mxu0 %v3151
      %3199 = vmatpush.bf16.msra.mxu0 %v3150
      %3200 = vmatpush.bf16.msra.mxu0 %v3149
      %3201 = vmatpush.bf16.msra.mxu0 %v3148
      %3202 = vmatpush.bf16.msra.mxu0 %v3147
      %3203 = vmatmul.bf16.gmra.mxu0 %v2983
      %v3204 = vpop.f32.mrf.mxu0
      %v3205 = vadd.f32 %v3049, %v3204
      %v3206 = vpop.f32.mrf.mxu0
      %v3207 = vadd.f32 %v3049, %v3206
      %3208 = vdwg.mxu0
      %3209 = vmatpush.bf16.msra.mxu0 %v3162
      %3210 = vmatpush.bf16.msra.mxu0 %v3161
      %3211 = vmatpush.bf16.msra.mxu0 %v3160
      %3212 = vmatpush.bf16.msra.mxu0 %v3159
      %3213 = vmatpush.bf16.msra.mxu0 %v3158
      %3214 = vmatpush.bf16.msra.mxu0 %v3157
      %3215 = vmatpush.bf16.msra.mxu0 %v3156
      %3216 = vmatpush.bf16.msra.mxu0 %v3155
      %3217 = vmatmul.bf16.gmra.mxu0 %v2989
      %v3218 = vpop.f32.mrf.mxu0
      %v3219 = vadd.f32 %v3205, %v3218
      %v3220 = vpop.f32.mrf.mxu0
      %v3221 = vadd.f32 %v3207, %v3220
      %3222 = vdwg.mxu0
      %3223 = vmatpush.bf16.msra.mxu0 %v3170
      %3224 = vmatpush.bf16.msra.mxu0 %v3169
      %3225 = vmatpush.bf16.msra.mxu0 %v3168
      %3226 = vmatpush.bf16.msra.mxu0 %v3167
      %3227 = vmatpush.bf16.msra.mxu0 %v3166
      %3228 = vmatpush.bf16.msra.mxu0 %v3165
      %3229 = vmatpush.bf16.msra.mxu0 %v3164
      %3230 = vmatpush.bf16.msra.mxu0 %v3163
      %3231 = vmatmul.bf16.gmra.mxu0 %v2995
      %v3232 = vpop.f32.mrf.mxu0
      %v3233 = vadd.f32 %v3219, %v3232
      %v3234 = vpop.f32.mrf.mxu0
      %v3235 = vadd.f32 %v3221, %v3234
      %3236 = vdwg.mxu0
      %s3237 = scalar_lea.vmem %s6, 24
      %v3238 = vld [vmem:[%s3237] sm:$0xf]
      %v3239 = vld [vmem:[%s3237 + $0x4] sm:$0xf]
      %v3240 = vpack.c.bf16 %v3235, %v3233
      %v3243 = vunpack.c.l.b16 %v3238
      %v3244 = vunpack.c.l.b16 %v3239
      %v3245 = vpack.c.b16 %v3244, %v3243
      %v3247 = vsel %vm371, %v3245, 0
      %3249 = vmatpush.bf16.msra.mxu0 0
      %3250 = vmatpush.bf16.msra.mxu0 0
      %3251 = vmatpush.bf16.msra.mxu0 0
      %3252 = vmatpush.bf16.msra.mxu0 0
      %3253 = vmatpush.bf16.msra.mxu0 0
      %3254 = vmatpush.bf16.msra.mxu0 0
      %3255 = vmatpush.bf16.msra.mxu0 0
      %3256 = vmatpush.bf16.msra.mxu0 %v3240
      %3257 = vmatmul.bf16.gmra.mxu0 %v3247
      %v3258 = vpop.f32.mrf.mxu0
      %v3259 = vadd.f32 0.0, %v3258
      %v3260 = vpop.f32.mrf.mxu0
      %v3261 = vadd.f32 0.0, %v3260
      %3262 = vdwg.mxu0
      %v3263 = vpack.c.bf16 %v3261, %v3259
      %s3264 = scalar_lea.vmem %s7, 192
      %v3265 = vld [vmem:[%s3264] sm:$0xf]
      %v3266 = vld [vmem:[%s3264 + $0x4] sm:$0xf]
      %v3267 = vld [vmem:[%s3264 + $0x8] sm:$0xf]
      %v3268 = vld [vmem:[%s3264 + $0xc] sm:$0xf]
      %v3269 = vld [vmem:[%s3264 + $0x10] sm:$0xf]
      %v3270 = vld [vmem:[%s3264 + $0x14] sm:$0xf]
      %v3271 = vld [vmem:[%s3264 + $0x18] sm:$0xf]
      %v3272 = vld [vmem:[%s3264 + $0x1c] sm:$0xf]
      %v3273 = vld [vmem:[%s3264 + $0x20] sm:$0xf]
      %v3274 = vld [vmem:[%s3264 + $0x24] sm:$0xf]
      %v3275 = vld [vmem:[%s3264 + $0x28] sm:$0xf]
      %v3276 = vld [vmem:[%s3264 + $0x2c] sm:$0xf]
      %v3277 = vld [vmem:[%s3264 + $0x30] sm:$0xf]
      %v3278 = vld [vmem:[%s3264 + $0x34] sm:$0xf]
      %v3279 = vld [vmem:[%s3264 + $0x38] sm:$0xf]
      %v3280 = vld [vmem:[%s3264 + $0x3c] sm:$0xf]
      %v3297 = vunpack.c.l.b16 %v3265
      %v3298 = vunpack.c.l.b16 %v3266
      %v3299 = vunpack.c.l.b16 %v3267
      %v3300 = vunpack.c.l.b16 %v3268
      %v3301 = vunpack.c.l.b16 %v3269
      %v3302 = vunpack.c.l.b16 %v3270
      %v3303 = vunpack.c.l.b16 %v3271
      %v3304 = vunpack.c.l.b16 %v3272
      %v3305 = vunpack.c.l.b16 %v3273
      %v3306 = vunpack.c.l.b16 %v3274
      %v3307 = vunpack.c.l.b16 %v3275
      %v3308 = vunpack.c.l.b16 %v3276
      %v3309 = vunpack.c.l.b16 %v3277
      %v3310 = vunpack.c.l.b16 %v3278
      %v3311 = vunpack.c.l.b16 %v3279
      %v3312 = vunpack.c.l.b16 %v3280
      %v3313 = vpack.c.b16 %v3298, %v3297
      %v3314 = vpack.c.b16 %v3300, %v3299
      %v3315 = vpack.c.b16 %v3302, %v3301
      %v3316 = vpack.c.b16 %v3304, %v3303
      %v3317 = vpack.c.b16 %v3306, %v3305
      %v3318 = vpack.c.b16 %v3308, %v3307
      %v3319 = vpack.c.b16 %v3310, %v3309
      %v3320 = vpack.c.b16 %v3312, %v3311
      %3329 = vmatpush.bf16.msra.mxu0 %v3320
      %3330 = vmatpush.bf16.msra.mxu0 %v3319
      %3331 = vmatpush.bf16.msra.mxu0 %v3318
      %3332 = vmatpush.bf16.msra.mxu0 %v3317
      %3333 = vmatpush.bf16.msra.mxu0 %v3316
      %3334 = vmatpush.bf16.msra.mxu0 %v3315
      %3335 = vmatpush.bf16.msra.mxu0 %v3314
      %3336 = vmatpush.bf16.msra.mxu0 %v3313
      %3337 = vmatmul.bf16.gmra.mxu0 %v3263
      %v3338 = vpop.f32.mrf.mxu0
      %v3339 = vadd.f32 0.0, %v3338
      %v3340 = vpop.f32.mrf.mxu0
      %v3341 = vadd.f32 0.0, %v3340
      %3342 = vdwg.mxu0
      %v3343 = vadd.f32 %v669, %v3339
      %v3344 = vadd.f32 %v670, %v3341
      %v3345 = vpack.c.bf16 %v3344, %v3343
      %s3346 = scalar_lea.vmem %s3, 192
      %v3347 = vld [vmem:[%s3346] sm:$0xf]
      %v3348 = vld [vmem:[%s3346 + $0x4] sm:$0xf]
      %v3349 = vld [vmem:[%s3346 + $0x8] sm:$0xf]
      %v3350 = vld [vmem:[%s3346 + $0xc] sm:$0xf]
      %v3351 = vld [vmem:[%s3346 + $0x10] sm:$0xf]
      %v3352 = vld [vmem:[%s3346 + $0x14] sm:$0xf]
      %v3359 = vunpack.c.l.b16 %v3347
      %v3360 = vunpack.c.l.b16 %v3348
      %v3361 = vunpack.c.l.b16 %v3349
      %v3362 = vunpack.c.l.b16 %v3350
      %v3363 = vunpack.c.l.b16 %v3351
      %v3364 = vunpack.c.l.b16 %v3352
      %v3365 = vpack.c.b16 %v3360, %v3359
      %v3366 = vpack.c.b16 %v3362, %v3361
      %v3367 = vpack.c.b16 %v3364, %v3363
      %v3369 = vsel %vm371, %v3365, 0
      %v3372 = vsel %vm371, %v3366, 0
      %v3375 = vsel %vm371, %v3367, 0
      %3377 = vmatpush.bf16.msra.mxu0 0
      %3378 = vmatpush.bf16.msra.mxu0 0
      %3379 = vmatpush.bf16.msra.mxu0 0
      %3380 = vmatpush.bf16.msra.mxu0 0
      %3381 = vmatpush.bf16.msra.mxu0 0
      %3382 = vmatpush.bf16.msra.mxu0 0
      %3383 = vmatpush.bf16.msra.mxu0 0
      %3384 = vmatpush.bf16.msra.mxu0 %v3345
      %3385 = vmatmul.bf16.gmra.mxu0 %v3369
      %v3386 = vpop.f32.mrf.mxu0
      %v3387 = vadd.f32 0.0, %v3386
      %v3388 = vpop.f32.mrf.mxu0
      %v3389 = vadd.f32 0.0, %v3388
      %3390 = vmatmul.bf16.gmra.mxu0 %v3372
      %v3391 = vpop.f32.mrf.mxu0
      %v3392 = vadd.f32 0.0, %v3391
      %v3393 = vpop.f32.mrf.mxu0
      %v3394 = vadd.f32 0.0, %v3393
      %3395 = vmatmul.bf16.gmra.mxu0 %v3375
      %v3396 = vpop.f32.mrf.mxu0
      %v3397 = vadd.f32 0.0, %v3396
      %v3398 = vpop.f32.mrf.mxu0
      %v3399 = vadd.f32 0.0, %v3398
      %3400 = vdwg.mxu0
      %v3401 = vpack.c.bf16 %v3387, %v3387
      %v3402 = vpack.c.bf16 %v3389, %v3389
      %v3403 = vpack.c.bf16 %v3392, %v3392
      %v3404 = vpack.c.bf16 %v3394, %v3394
      %v3405 = vpack.c.bf16 %v3397, %v3397
      %v3406 = vpack.c.bf16 %v3399, %v3399
      %v3409 = vunpack.c.l.b16 %v3401
      %v3410 = vunpack.c.l.b16 %v3402
      %v3411 = vpack.c.b16 %v3410, %v3409
      %v3415 = vunpack.c.l.b16 %v3403
      %v3416 = vunpack.c.l.b16 %v3404
      %v3417 = vpack.c.b16 %v3416, %v3415
      %v3421 = vunpack.c.l.b16 %v3405
      %v3422 = vunpack.c.l.b16 %v3406
      %v3423 = vpack.c.b16 %v3422, %v3421
      %s3425 = scalar_lea.vmem %s4, 1536
      %v3426 = vld [vmem:[%s3425] sm:$0xf]
      %v3427 = vld [vmem:[%s3425 + $0x4] sm:$0xf]
      %v3428 = vld [vmem:[%s3425 + $0x8] sm:$0xf]
      %v3429 = vld [vmem:[%s3425 + $0xc] sm:$0xf]
      %v3430 = vld [vmem:[%s3425 + $0x10] sm:$0xf]
      %v3431 = vld [vmem:[%s3425 + $0x14] sm:$0xf]
      %v3432 = vld [vmem:[%s3425 + $0x18] sm:$0xf]
      %v3433 = vld [vmem:[%s3425 + $0x1c] sm:$0xf]
      %v3434 = vld [vmem:[%s3425 + $0x20] sm:$0xf]
      %v3435 = vld [vmem:[%s3425 + $0x24] sm:$0xf]
      %v3436 = vld [vmem:[%s3425 + $0x28] sm:$0xf]
      %v3437 = vld [vmem:[%s3425 + $0x2c] sm:$0xf]
      %v3438 = vld [vmem:[%s3425 + $0x30] sm:$0xf]
      %v3439 = vld [vmem:[%s3425 + $0x34] sm:$0xf]
      %v3440 = vld [vmem:[%s3425 + $0x38] sm:$0xf]
      %v3441 = vld [vmem:[%s3425 + $0x3c] sm:$0xf]
      %v3442 = vld [vmem:[%s3425 + $0x40] sm:$0xf]
      %v3443 = vld [vmem:[%s3425 + $0x44] sm:$0xf]
      %v3444 = vld [vmem:[%s3425 + $0x48] sm:$0xf]
      %v3445 = vld [vmem:[%s3425 + $0x4c] sm:$0xf]
      %v3446 = vld [vmem:[%s3425 + $0x50] sm:$0xf]
      %v3447 = vld [vmem:[%s3425 + $0x54] sm:$0xf]
      %v3448 = vld [vmem:[%s3425 + $0x58] sm:$0xf]
      %v3449 = vld [vmem:[%s3425 + $0x5c] sm:$0xf]
      %v3450 = vld [vmem:[%s3425 + $0x60] sm:$0xf]
      %v3451 = vld [vmem:[%s3425 + $0x64] sm:$0xf]
      %v3452 = vld [vmem:[%s3425 + $0x68] sm:$0xf]
      %v3453 = vld [vmem:[%s3425 + $0x6c] sm:$0xf]
      %v3454 = vld [vmem:[%s3425 + $0x70] sm:$0xf]
      %v3455 = vld [vmem:[%s3425 + $0x74] sm:$0xf]
      %v3456 = vld [vmem:[%s3425 + $0x78] sm:$0xf]
      %v3457 = vld [vmem:[%s3425 + $0x7c] sm:$0xf]
      %v3458 = vld [vmem:[%s3425 + $0x80] sm:$0xf]
      %v3459 = vld [vmem:[%s3425 + $0x84] sm:$0xf]
      %v3460 = vld [vmem:[%s3425 + $0x88] sm:$0xf]
      %v3461 = vld [vmem:[%s3425 + $0x8c] sm:$0xf]
      %v3462 = vld [vmem:[%s3425 + $0x90] sm:$0xf]
      %v3463 = vld [vmem:[%s3425 + $0x94] sm:$0xf]
      %v3464 = vld [vmem:[%s3425 + $0x98] sm:$0xf]
      %v3465 = vld [vmem:[%s3425 + $0x9c] sm:$0xf]
      %v3466 = vld [vmem:[%s3425 + $0xa0] sm:$0xf]
      %v3467 = vld [vmem:[%s3425 + $0xa4] sm:$0xf]
      %v3468 = vld [vmem:[%s3425 + $0xa8] sm:$0xf]
      %v3469 = vld [vmem:[%s3425 + $0xac] sm:$0xf]
      %v3470 = vld [vmem:[%s3425 + $0xb0] sm:$0xf]
      %v3471 = vld [vmem:[%s3425 + $0xb4] sm:$0xf]
      %v3472 = vld [vmem:[%s3425 + $0xb8] sm:$0xf]
      %v3473 = vld [vmem:[%s3425 + $0xbc] sm:$0xf]
      %s3474 = scalar_lea.vmem %s5, 8
      %v3475 = vld [vmem:[%s3474] sm:$0x1]
      %v3477 = vperm.slane %v3475, 0
      %v3527 = vunpack.c.l.b16 %v3426
      %v3528 = vunpack.c.l.b16 %v3427
      %v3529 = vunpack.c.l.b16 %v3428
      %v3530 = vunpack.c.l.b16 %v3429
      %v3531 = vunpack.c.l.b16 %v3430
      %v3532 = vunpack.c.l.b16 %v3431
      %v3533 = vunpack.c.l.b16 %v3432
      %v3534 = vunpack.c.l.b16 %v3433
      %v3535 = vunpack.c.l.b16 %v3434
      %v3536 = vunpack.c.l.b16 %v3435
      %v3537 = vunpack.c.l.b16 %v3436
      %v3538 = vunpack.c.l.b16 %v3437
      %v3539 = vunpack.c.l.b16 %v3438
      %v3540 = vunpack.c.l.b16 %v3439
      %v3541 = vunpack.c.l.b16 %v3440
      %v3542 = vunpack.c.l.b16 %v3441
      %v3543 = vunpack.c.l.b16 %v3442
      %v3544 = vunpack.c.l.b16 %v3443
      %v3545 = vunpack.c.l.b16 %v3444
      %v3546 = vunpack.c.l.b16 %v3445
      %v3547 = vunpack.c.l.b16 %v3446
      %v3548 = vunpack.c.l.b16 %v3447
      %v3549 = vunpack.c.l.b16 %v3448
      %v3550 = vunpack.c.l.b16 %v3449
      %v3551 = vunpack.c.l.b16 %v3450
      %v3552 = vunpack.c.l.b16 %v3451
      %v3553 = vunpack.c.l.b16 %v3452
      %v3554 = vunpack.c.l.b16 %v3453
      %v3555 = vunpack.c.l.b16 %v3454
      %v3556 = vunpack.c.l.b16 %v3455
      %v3557 = vunpack.c.l.b16 %v3456
      %v3558 = vunpack.c.l.b16 %v3457
      %v3559 = vunpack.c.l.b16 %v3458
      %v3560 = vunpack.c.l.b16 %v3459
      %v3561 = vunpack.c.l.b16 %v3460
      %v3562 = vunpack.c.l.b16 %v3461
      %v3563 = vunpack.c.l.b16 %v3462
      %v3564 = vunpack.c.l.b16 %v3463
      %v3565 = vunpack.c.l.b16 %v3464
      %v3566 = vunpack.c.l.b16 %v3465
      %v3567 = vunpack.c.l.b16 %v3466
      %v3568 = vunpack.c.l.b16 %v3467
      %v3569 = vunpack.c.l.b16 %v3468
      %v3570 = vunpack.c.l.b16 %v3469
      %v3571 = vunpack.c.l.b16 %v3470
      %v3572 = vunpack.c.l.b16 %v3471
      %v3573 = vunpack.c.l.b16 %v3472
      %v3574 = vunpack.c.l.b16 %v3473
      %v3575 = vpack.c.b16 %v3528, %v3527
      %v3576 = vpack.c.b16 %v3530, %v3529
      %v3577 = vpack.c.b16 %v3532, %v3531
      %v3578 = vpack.c.b16 %v3534, %v3533
      %v3579 = vpack.c.b16 %v3536, %v3535
      %v3580 = vpack.c.b16 %v3538, %v3537
      %v3581 = vpack.c.b16 %v3540, %v3539
      %v3582 = vpack.c.b16 %v3542, %v3541
      %v3583 = vpack.c.b16 %v3544, %v3543
      %v3584 = vpack.c.b16 %v3546, %v3545
      %v3585 = vpack.c.b16 %v3548, %v3547
      %v3586 = vpack.c.b16 %v3550, %v3549
      %v3587 = vpack.c.b16 %v3552, %v3551
      %v3588 = vpack.c.b16 %v3554, %v3553
      %v3589 = vpack.c.b16 %v3556, %v3555
      %v3590 = vpack.c.b16 %v3558, %v3557
      %v3591 = vpack.c.b16 %v3560, %v3559
      %v3592 = vpack.c.b16 %v3562, %v3561
      %v3593 = vpack.c.b16 %v3564, %v3563
      %v3594 = vpack.c.b16 %v3566, %v3565
      %v3595 = vpack.c.b16 %v3568, %v3567
      %v3596 = vpack.c.b16 %v3570, %v3569
      %v3597 = vpack.c.b16 %v3572, %v3571
      %v3598 = vpack.c.b16 %v3574, %v3573
      %3623 = vmatpush.bf16.msra.mxu0 %v3582
      %3624 = vmatpush.bf16.msra.mxu0 %v3581
      %3625 = vmatpush.bf16.msra.mxu0 %v3580
      %3626 = vmatpush.bf16.msra.mxu0 %v3579
      %3627 = vmatpush.bf16.msra.mxu0 %v3578
      %3628 = vmatpush.bf16.msra.mxu0 %v3577
      %3629 = vmatpush.bf16.msra.mxu0 %v3576
      %3630 = vmatpush.bf16.msra.mxu0 %v3575
      %3631 = vmatmul.bf16.gmra.mxu0 %v3411
      %v3632 = vpop.f32.mrf.mxu0
      %v3633 = vadd.f32 %v3477, %v3632
      %v3634 = vpop.f32.mrf.mxu0
      %v3635 = vadd.f32 %v3477, %v3634
      %3636 = vdwg.mxu0
      %3637 = vmatpush.bf16.msra.mxu0 %v3590
      %3638 = vmatpush.bf16.msra.mxu0 %v3589
      %3639 = vmatpush.bf16.msra.mxu0 %v3588
      %3640 = vmatpush.bf16.msra.mxu0 %v3587
      %3641 = vmatpush.bf16.msra.mxu0 %v3586
      %3642 = vmatpush.bf16.msra.mxu0 %v3585
      %3643 = vmatpush.bf16.msra.mxu0 %v3584
      %3644 = vmatpush.bf16.msra.mxu0 %v3583
      %3645 = vmatmul.bf16.gmra.mxu0 %v3417
      %v3646 = vpop.f32.mrf.mxu0
      %v3647 = vadd.f32 %v3633, %v3646
      %v3648 = vpop.f32.mrf.mxu0
      %v3649 = vadd.f32 %v3635, %v3648
      %3650 = vdwg.mxu0
      %3651 = vmatpush.bf16.msra.mxu0 %v3598
      %3652 = vmatpush.bf16.msra.mxu0 %v3597
      %3653 = vmatpush.bf16.msra.mxu0 %v3596
      %3654 = vmatpush.bf16.msra.mxu0 %v3595
      %3655 = vmatpush.bf16.msra.mxu0 %v3594
      %3656 = vmatpush.bf16.msra.mxu0 %v3593
      %3657 = vmatpush.bf16.msra.mxu0 %v3592
      %3658 = vmatpush.bf16.msra.mxu0 %v3591
      %3659 = vmatmul.bf16.gmra.mxu0 %v3423
      %v3660 = vpop.f32.mrf.mxu0
      %v3661 = vadd.f32 %v3647, %v3660
      %v3662 = vpop.f32.mrf.mxu0
      %v3663 = vadd.f32 %v3649, %v3662
      %3664 = vdwg.mxu0
      %s3665 = scalar_lea.vmem %s6, 32
      %v3666 = vld [vmem:[%s3665] sm:$0xf]
      %v3667 = vld [vmem:[%s3665 + $0x4] sm:$0xf]
      %v3668 = vpack.c.bf16 %v3663, %v3661
      %v3671 = vunpack.c.l.b16 %v3666
      %v3672 = vunpack.c.l.b16 %v3667
      %v3673 = vpack.c.b16 %v3672, %v3671
      %v3675 = vsel %vm371, %v3673, 0
      %3677 = vmatpush.bf16.msra.mxu0 0
      %3678 = vmatpush.bf16.msra.mxu0 0
      %3679 = vmatpush.bf16.msra.mxu0 0
      %3680 = vmatpush.bf16.msra.mxu0 0
      %3681 = vmatpush.bf16.msra.mxu0 0
      %3682 = vmatpush.bf16.msra.mxu0 0
      %3683 = vmatpush.bf16.msra.mxu0 0
      %3684 = vmatpush.bf16.msra.mxu0 %v3668
      %3685 = vmatmul.bf16.gmra.mxu0 %v3675
      %v3686 = vpop.f32.mrf.mxu0
      %v3687 = vadd.f32 0.0, %v3686
      %v3688 = vpop.f32.mrf.mxu0
      %v3689 = vadd.f32 0.0, %v3688
      %3690 = vdwg.mxu0
      %v3691 = vpack.c.bf16 %v3689, %v3687
      %s3692 = scalar_lea.vmem %s7, 256
      %v3693 = vld [vmem:[%s3692] sm:$0xf]
      %v3694 = vld [vmem:[%s3692 + $0x4] sm:$0xf]
      %v3695 = vld [vmem:[%s3692 + $0x8] sm:$0xf]
      %v3696 = vld [vmem:[%s3692 + $0xc] sm:$0xf]
      %v3697 = vld [vmem:[%s3692 + $0x10] sm:$0xf]
      %v3698 = vld [vmem:[%s3692 + $0x14] sm:$0xf]
      %v3699 = vld [vmem:[%s3692 + $0x18] sm:$0xf]
      %v3700 = vld [vmem:[%s3692 + $0x1c] sm:$0xf]
      %v3701 = vld [vmem:[%s3692 + $0x20] sm:$0xf]
      %v3702 = vld [vmem:[%s3692 + $0x24] sm:$0xf]
      %v3703 = vld [vmem:[%s3692 + $0x28] sm:$0xf]
      %v3704 = vld [vmem:[%s3692 + $0x2c] sm:$0xf]
      %v3705 = vld [vmem:[%s3692 + $0x30] sm:$0xf]
      %v3706 = vld [vmem:[%s3692 + $0x34] sm:$0xf]
      %v3707 = vld [vmem:[%s3692 + $0x38] sm:$0xf]
      %v3708 = vld [vmem:[%s3692 + $0x3c] sm:$0xf]
      %v3725 = vunpack.c.l.b16 %v3693
      %v3726 = vunpack.c.l.b16 %v3694
      %v3727 = vunpack.c.l.b16 %v3695
      %v3728 = vunpack.c.l.b16 %v3696
      %v3729 = vunpack.c.l.b16 %v3697
      %v3730 = vunpack.c.l.b16 %v3698
      %v3731 = vunpack.c.l.b16 %v3699
      %v3732 = vunpack.c.l.b16 %v3700
      %v3733 = vunpack.c.l.b16 %v3701
      %v3734 = vunpack.c.l.b16 %v3702
      %v3735 = vunpack.c.l.b16 %v3703
      %v3736 = vunpack.c.l.b16 %v3704
      %v3737 = vunpack.c.l.b16 %v3705
      %v3738 = vunpack.c.l.b16 %v3706
      %v3739 = vunpack.c.l.b16 %v3707
      %v3740 = vunpack.c.l.b16 %v3708
      %v3741 = vpack.c.b16 %v3726, %v3725
      %v3742 = vpack.c.b16 %v3728, %v3727
      %v3743 = vpack.c.b16 %v3730, %v3729
      %v3744 = vpack.c.b16 %v3732, %v3731
      %v3745 = vpack.c.b16 %v3734, %v3733
      %v3746 = vpack.c.b16 %v3736, %v3735
      %v3747 = vpack.c.b16 %v3738, %v3737
      %v3748 = vpack.c.b16 %v3740, %v3739
      %3757 = vmatpush.bf16.msra.mxu0 %v3748
      %3758 = vmatpush.bf16.msra.mxu0 %v3747
      %3759 = vmatpush.bf16.msra.mxu0 %v3746
      %3760 = vmatpush.bf16.msra.mxu0 %v3745
      %3761 = vmatpush.bf16.msra.mxu0 %v3744
      %3762 = vmatpush.bf16.msra.mxu0 %v3743
      %3763 = vmatpush.bf16.msra.mxu0 %v3742
      %3764 = vmatpush.bf16.msra.mxu0 %v3741
      %3765 = vmatmul.bf16.gmra.mxu0 %v3691
      %v3766 = vpop.f32.mrf.mxu0
      %v3767 = vadd.f32 0.0, %v3766
      %v3768 = vpop.f32.mrf.mxu0
      %v3769 = vadd.f32 0.0, %v3768
      %3770 = vdwg.mxu0
      %v3771 = vadd.f32 %v347, %v3767
      %v3772 = vadd.f32 %v348, %v3769
      %v3773 = vmax.f32 %v3771, 0.0
      %v3774 = vmax.f32 %v3772, 0.0
      %v3775 = vpack.c.bf16 %v3774, %v3773
      %s3776 = scalar_lea.vmem %s3, 216
      %v3777 = vld [vmem:[%s3776] sm:$0xf]
      %v3778 = vld [vmem:[%s3776 + $0x4] sm:$0xf]
      %v3779 = vld [vmem:[%s3776 + $0x8] sm:$0xf]
      %v3780 = vld [vmem:[%s3776 + $0xc] sm:$0xf]
      %v3781 = vld [vmem:[%s3776 + $0x10] sm:$0xf]
      %v3782 = vld [vmem:[%s3776 + $0x14] sm:$0xf]
      %v3789 = vunpack.c.l.b16 %v3777
      %v3790 = vunpack.c.l.b16 %v3778
      %v3791 = vunpack.c.l.b16 %v3779
      %v3792 = vunpack.c.l.b16 %v3780
      %v3793 = vunpack.c.l.b16 %v3781
      %v3794 = vunpack.c.l.b16 %v3782
      %v3795 = vpack.c.b16 %v3790, %v3789
      %v3796 = vpack.c.b16 %v3792, %v3791
      %v3797 = vpack.c.b16 %v3794, %v3793
      %v3799 = vsel %vm371, %v3795, 0
      %v3802 = vsel %vm371, %v3796, 0
      %v3805 = vsel %vm371, %v3797, 0
      %3807 = vmatpush.bf16.msra.mxu0 0
      %3808 = vmatpush.bf16.msra.mxu0 0
      %3809 = vmatpush.bf16.msra.mxu0 0
      %3810 = vmatpush.bf16.msra.mxu0 0
      %3811 = vmatpush.bf16.msra.mxu0 0
      %3812 = vmatpush.bf16.msra.mxu0 0
      %3813 = vmatpush.bf16.msra.mxu0 0
      %3814 = vmatpush.bf16.msra.mxu0 %v3775
      %3815 = vmatmul.bf16.gmra.mxu0 %v3799
      %v3816 = vpop.f32.mrf.mxu0
      %v3817 = vadd.f32 0.0, %v3816
      %v3818 = vpop.f32.mrf.mxu0
      %v3819 = vadd.f32 0.0, %v3818
      %3820 = vmatmul.bf16.gmra.mxu0 %v3802
      %v3821 = vpop.f32.mrf.mxu0
      %v3822 = vadd.f32 0.0, %v3821
      %v3823 = vpop.f32.mrf.mxu0
      %v3824 = vadd.f32 0.0, %v3823
      %3825 = vmatmul.bf16.gmra.mxu0 %v3805
      %v3826 = vpop.f32.mrf.mxu0
      %v3827 = vadd.f32 0.0, %v3826
      %v3828 = vpop.f32.mrf.mxu0
      %v3829 = vadd.f32 0.0, %v3828
      %3830 = vdwg.mxu0
      %v3831 = vpack.c.bf16 %v3817, %v3817
      %v3832 = vpack.c.bf16 %v3819, %v3819
      %v3833 = vpack.c.bf16 %v3822, %v3822
      %v3834 = vpack.c.bf16 %v3824, %v3824
      %v3835 = vpack.c.bf16 %v3827, %v3827
      %v3836 = vpack.c.bf16 %v3829, %v3829
      %v3839 = vunpack.c.l.b16 %v3831
      %v3840 = vunpack.c.l.b16 %v3832
      %v3841 = vpack.c.b16 %v3840, %v3839
      %v3845 = vunpack.c.l.b16 %v3833
      %v3846 = vunpack.c.l.b16 %v3834
      %v3847 = vpack.c.b16 %v3846, %v3845
      %v3851 = vunpack.c.l.b16 %v3835
      %v3852 = vunpack.c.l.b16 %v3836
      %v3853 = vpack.c.b16 %v3852, %v3851
      %s3855 = scalar_lea.vmem %s4, 1728
      %v3856 = vld [vmem:[%s3855] sm:$0xf]
      %v3857 = vld [vmem:[%s3855 + $0x4] sm:$0xf]
      %v3858 = vld [vmem:[%s3855 + $0x8] sm:$0xf]
      %v3859 = vld [vmem:[%s3855 + $0xc] sm:$0xf]
      %v3860 = vld [vmem:[%s3855 + $0x10] sm:$0xf]
      %v3861 = vld [vmem:[%s3855 + $0x14] sm:$0xf]
      %v3862 = vld [vmem:[%s3855 + $0x18] sm:$0xf]
      %v3863 = vld [vmem:[%s3855 + $0x1c] sm:$0xf]
      %v3864 = vld [vmem:[%s3855 + $0x20] sm:$0xf]
      %v3865 = vld [vmem:[%s3855 + $0x24] sm:$0xf]
      %v3866 = vld [vmem:[%s3855 + $0x28] sm:$0xf]
      %v3867 = vld [vmem:[%s3855 + $0x2c] sm:$0xf]
      %v3868 = vld [vmem:[%s3855 + $0x30] sm:$0xf]
      %v3869 = vld [vmem:[%s3855 + $0x34] sm:$0xf]
      %v3870 = vld [vmem:[%s3855 + $0x38] sm:$0xf]
      %v3871 = vld [vmem:[%s3855 + $0x3c] sm:$0xf]
      %v3872 = vld [vmem:[%s3855 + $0x40] sm:$0xf]
      %v3873 = vld [vmem:[%s3855 + $0x44] sm:$0xf]
      %v3874 = vld [vmem:[%s3855 + $0x48] sm:$0xf]
      %v3875 = vld [vmem:[%s3855 + $0x4c] sm:$0xf]
      %v3876 = vld [vmem:[%s3855 + $0x50] sm:$0xf]
      %v3877 = vld [vmem:[%s3855 + $0x54] sm:$0xf]
      %v3878 = vld [vmem:[%s3855 + $0x58] sm:$0xf]
      %v3879 = vld [vmem:[%s3855 + $0x5c] sm:$0xf]
      %v3880 = vld [vmem:[%s3855 + $0x60] sm:$0xf]
      %v3881 = vld [vmem:[%s3855 + $0x64] sm:$0xf]
      %v3882 = vld [vmem:[%s3855 + $0x68] sm:$0xf]
      %v3883 = vld [vmem:[%s3855 + $0x6c] sm:$0xf]
      %v3884 = vld [vmem:[%s3855 + $0x70] sm:$0xf]
      %v3885 = vld [vmem:[%s3855 + $0x74] sm:$0xf]
      %v3886 = vld [vmem:[%s3855 + $0x78] sm:$0xf]
      %v3887 = vld [vmem:[%s3855 + $0x7c] sm:$0xf]
      %v3888 = vld [vmem:[%s3855 + $0x80] sm:$0xf]
      %v3889 = vld [vmem:[%s3855 + $0x84] sm:$0xf]
      %v3890 = vld [vmem:[%s3855 + $0x88] sm:$0xf]
      %v3891 = vld [vmem:[%s3855 + $0x8c] sm:$0xf]
      %v3892 = vld [vmem:[%s3855 + $0x90] sm:$0xf]
      %v3893 = vld [vmem:[%s3855 + $0x94] sm:$0xf]
      %v3894 = vld [vmem:[%s3855 + $0x98] sm:$0xf]
      %v3895 = vld [vmem:[%s3855 + $0x9c] sm:$0xf]
      %v3896 = vld [vmem:[%s3855 + $0xa0] sm:$0xf]
      %v3897 = vld [vmem:[%s3855 + $0xa4] sm:$0xf]
      %v3898 = vld [vmem:[%s3855 + $0xa8] sm:$0xf]
      %v3899 = vld [vmem:[%s3855 + $0xac] sm:$0xf]
      %v3900 = vld [vmem:[%s3855 + $0xb0] sm:$0xf]
      %v3901 = vld [vmem:[%s3855 + $0xb4] sm:$0xf]
      %v3902 = vld [vmem:[%s3855 + $0xb8] sm:$0xf]
      %v3903 = vld [vmem:[%s3855 + $0xbc] sm:$0xf]
      %s3904 = scalar_lea.vmem %s5, 9
      %v3905 = vld [vmem:[%s3904] sm:$0x1]
      %v3907 = vperm.slane %v3905, 0
      %v3957 = vunpack.c.l.b16 %v3856
      %v3958 = vunpack.c.l.b16 %v3857
      %v3959 = vunpack.c.l.b16 %v3858
      %v3960 = vunpack.c.l.b16 %v3859
      %v3961 = vunpack.c.l.b16 %v3860
      %v3962 = vunpack.c.l.b16 %v3861
      %v3963 = vunpack.c.l.b16 %v3862
      %v3964 = vunpack.c.l.b16 %v3863
      %v3965 = vunpack.c.l.b16 %v3864
      %v3966 = vunpack.c.l.b16 %v3865
      %v3967 = vunpack.c.l.b16 %v3866
      %v3968 = vunpack.c.l.b16 %v3867
      %v3969 = vunpack.c.l.b16 %v3868
      %v3970 = vunpack.c.l.b16 %v3869
      %v3971 = vunpack.c.l.b16 %v3870
      %v3972 = vunpack.c.l.b16 %v3871
      %v3973 = vunpack.c.l.b16 %v3872
      %v3974 = vunpack.c.l.b16 %v3873
      %v3975 = vunpack.c.l.b16 %v3874
      %v3976 = vunpack.c.l.b16 %v3875
      %v3977 = vunpack.c.l.b16 %v3876
      %v3978 = vunpack.c.l.b16 %v3877
      %v3979 = vunpack.c.l.b16 %v3878
      %v3980 = vunpack.c.l.b16 %v3879
      %v3981 = vunpack.c.l.b16 %v3880
      %v3982 = vunpack.c.l.b16 %v3881
      %v3983 = vunpack.c.l.b16 %v3882
      %v3984 = vunpack.c.l.b16 %v3883
      %v3985 = vunpack.c.l.b16 %v3884
      %v3986 = vunpack.c.l.b16 %v3885
      %v3987 = vunpack.c.l.b16 %v3886
      %v3988 = vunpack.c.l.b16 %v3887
      %v3989 = vunpack.c.l.b16 %v3888
      %v3990 = vunpack.c.l.b16 %v3889
      %v3991 = vunpack.c.l.b16 %v3890
      %v3992 = vunpack.c.l.b16 %v3891
      %v3993 = vunpack.c.l.b16 %v3892
      %v3994 = vunpack.c.l.b16 %v3893
      %v3995 = vunpack.c.l.b16 %v3894
      %v3996 = vunpack.c.l.b16 %v3895
      %v3997 = vunpack.c.l.b16 %v3896
      %v3998 = vunpack.c.l.b16 %v3897
      %v3999 = vunpack.c.l.b16 %v3898
      %v4000 = vunpack.c.l.b16 %v3899
      %v4001 = vunpack.c.l.b16 %v3900
      %v4002 = vunpack.c.l.b16 %v3901
      %v4003 = vunpack.c.l.b16 %v3902
      %v4004 = vunpack.c.l.b16 %v3903
      %v4005 = vpack.c.b16 %v3958, %v3957
      %v4006 = vpack.c.b16 %v3960, %v3959
      %v4007 = vpack.c.b16 %v3962, %v3961
      %v4008 = vpack.c.b16 %v3964, %v3963
      %v4009 = vpack.c.b16 %v3966, %v3965
      %v4010 = vpack.c.b16 %v3968, %v3967
      %v4011 = vpack.c.b16 %v3970, %v3969
      %v4012 = vpack.c.b16 %v3972, %v3971
      %v4013 = vpack.c.b16 %v3974, %v3973
      %v4014 = vpack.c.b16 %v3976, %v3975
      %v4015 = vpack.c.b16 %v3978, %v3977
      %v4016 = vpack.c.b16 %v3980, %v3979
      %v4017 = vpack.c.b16 %v3982, %v3981
      %v4018 = vpack.c.b16 %v3984, %v3983
      %v4019 = vpack.c.b16 %v3986, %v3985
      %v4020 = vpack.c.b16 %v3988, %v3987
      %v4021 = vpack.c.b16 %v3990, %v3989
      %v4022 = vpack.c.b16 %v3992, %v3991
      %v4023 = vpack.c.b16 %v3994, %v3993
      %v4024 = vpack.c.b16 %v3996, %v3995
      %v4025 = vpack.c.b16 %v3998, %v3997
      %v4026 = vpack.c.b16 %v4000, %v3999
      %v4027 = vpack.c.b16 %v4002, %v4001
      %v4028 = vpack.c.b16 %v4004, %v4003
      %4053 = vmatpush.bf16.msra.mxu0 %v4012
      %4054 = vmatpush.bf16.msra.mxu0 %v4011
      %4055 = vmatpush.bf16.msra.mxu0 %v4010
      %4056 = vmatpush.bf16.msra.mxu0 %v4009
      %4057 = vmatpush.bf16.msra.mxu0 %v4008
      %4058 = vmatpush.bf16.msra.mxu0 %v4007
      %4059 = vmatpush.bf16.msra.mxu0 %v4006
      %4060 = vmatpush.bf16.msra.mxu0 %v4005
      %4061 = vmatmul.bf16.gmra.mxu0 %v3841
      %v4062 = vpop.f32.mrf.mxu0
      %v4063 = vadd.f32 %v3907, %v4062
      %v4064 = vpop.f32.mrf.mxu0
      %v4065 = vadd.f32 %v3907, %v4064
      %4066 = vdwg.mxu0
      %4067 = vmatpush.bf16.msra.mxu0 %v4020
      %4068 = vmatpush.bf16.msra.mxu0 %v4019
      %4069 = vmatpush.bf16.msra.mxu0 %v4018
      %4070 = vmatpush.bf16.msra.mxu0 %v4017
      %4071 = vmatpush.bf16.msra.mxu0 %v4016
      %4072 = vmatpush.bf16.msra.mxu0 %v4015
      %4073 = vmatpush.bf16.msra.mxu0 %v4014
      %4074 = vmatpush.bf16.msra.mxu0 %v4013
      %4075 = vmatmul.bf16.gmra.mxu0 %v3847
      %v4076 = vpop.f32.mrf.mxu0
      %v4077 = vadd.f32 %v4063, %v4076
      %v4078 = vpop.f32.mrf.mxu0
      %v4079 = vadd.f32 %v4065, %v4078
      %4080 = vdwg.mxu0
      %4081 = vmatpush.bf16.msra.mxu0 %v4028
      %4082 = vmatpush.bf16.msra.mxu0 %v4027
      %4083 = vmatpush.bf16.msra.mxu0 %v4026
      %4084 = vmatpush.bf16.msra.mxu0 %v4025
      %4085 = vmatpush.bf16.msra.mxu0 %v4024
      %4086 = vmatpush.bf16.msra.mxu0 %v4023
      %4087 = vmatpush.bf16.msra.mxu0 %v4022
      %4088 = vmatpush.bf16.msra.mxu0 %v4021
      %4089 = vmatmul.bf16.gmra.mxu0 %v3853
      %v4090 = vpop.f32.mrf.mxu0
      %v4091 = vadd.f32 %v4077, %v4090
      %v4092 = vpop.f32.mrf.mxu0
      %v4093 = vadd.f32 %v4079, %v4092
      %4094 = vdwg.mxu0
      %4095 = vst [vmem:[%s345] sm:$0xff] %v4091
      %4096 = vst [vmem:[%s345 + $0x8] sm:$0xff] %v4093
      %p4097 = scmp.lt.s32.totalorder %s19, 1
      %s4098 = scalar_select %p4097, %s19, 1
      %s4099 = smul.addr %s4098, 2
      %s4100 = smul.addr %s4099, 8
      %s4101 = scalar_lea.vmem %s8, %s4100
      // Predicated region
      $region53: #{usrm5_2_forward.1} parent=51 // pred_check
        %p4102 = pneg %p220
      $region54: #{usrm5_2_forward.1} parent=51 // pred_check_branch
        %4104 = sbr.rel (%p4102) target = $region56
      $region55: #{usrm5_2_forward.1} parent=51 // pred_region
        _
      $region56: #{usrm5_2_forward.1} parent=51 // pred_fallthru
        _
    $region52: #{usrm5_2_forward.1} parent=5 // pred_fallthru
      _
    %p4105 = scmp.le.s32.totalorder 2, %s14
    // Predicated region
    $region57: #{usrm5_2_forward.1} parent=5 // pred_check
      %p4106 = pneg %p4105
    $region58: #{usrm5_2_forward.1} parent=5 // pred_check_branch
      %4108 = sbr.rel (%p4106) target = $region60
    $region59: #{usrm5_2_forward.1} parent=5 // pred_region
      %s4109 = ssub.s32 %s14, 2
      // Predicated region
      $region61: #{usrm5_2_forward.1} parent=59 // pred_check
        %p4110 = pneg %p226
      $region62: #{usrm5_2_forward.1} parent=59 // pred_check_branch
        %4112 = sbr.rel (%p4110) target = $region64
      $region63: #{usrm5_2_forward.1} parent=59 // pred_region
        %p4113 = scmp.lt.s32.totalorder %s20, 1
        %s4114 = scalar_select %p4113, %s20, 1
        %s4115 = smul.addr %s4114, 2
        %s4116 = smul.addr %s4115, 8
        %s4117 = scalar_lea.vmem %s8, %s4116
      $region64: #{usrm5_2_forward.1} parent=59 // pred_fallthru
        _
    $region60: #{usrm5_2_forward.1} parent=5 // pred_fallthru
      _
  $region6: #{usrm5_2_forward.1} parent=0 // loop_footer
    %s18 = sadd.s32 1, %s14
  $region7: #{usrm5_2_forward.1} parent=0 // loop_footer_branch
    %13 = sbr.rel target = $region3
  $region8: #{usrm5_2_forward.1} parent=0 // loop_exit
    _

</llo_original>
